<compile_context>
chip_gen: v6e
topology: v6e:2x2x1
jax: 0.10.0
libtpu: 0.0.40
codegen_flags: <defaults>
</compile_context>

<pallas_src>
import functools

import jax
import jax.numpy as jnp
from jax.experimental import pallas as pl
from jax.experimental.pallas import tpu as pltpu

_BN_EPS = 1e-5


def _round_up(x, m):
    return (x + m - 1) // m * m


# ----------------------------------------------------------------------------
# Fused kernel
# ----------------------------------------------------------------------------
def _make_fused_kernel(num_hidden):
    """Kernel: num_hidden x [int8 Linear + ReLU + BN(eval)] then int8 Linear + Tanh.

    Ref order per hidden layer: w_q(int8), qscale(1,N), b(1,N), bn_scale(1,N),
    bn_shift(1,N).  Output layer: w_q(int8), qscale(1,Npad), b(1,Npad).
    Activations are bf16; matmuls accumulate in f32 on the MXU; all epilogues
    (dequant scale, bias, BN affine, ReLU, tanh) run in f32 on the VPU/EUP.
    """

    def kernel(x_ref, *refs):
        out_ref = refs[-1]
        prm = refs[:-1]

        def dense(h_bf16, w_ref, s_ref, b_ref):
            # int8 weight -> bf16 (VPU), MXU dot with f32 accumulation, then
            # per-output-channel dequant scale + bias in the f32 epilogue.
            w_bf16 = w_ref[...].astype(jnp.bfloat16)
            acc = jnp.dot(h_bf16, w_bf16, preferred_element_type=jnp.float32)
            return acc * s_ref[...] + b_ref[...]

        h = x_ref[...]  # already bf16 (pre-cast in the wrapper)
        idx = 0
        for _ in range(num_hidden):
            w_ref, s_ref, b_ref, g_ref, sh_ref = prm[idx:idx + 5]
            idx += 5
            y = jnp.maximum(dense(h, w_ref, s_ref, b_ref), 0.0)
            # Dropout(p=0.2) in eval mode is identity; BatchNorm1d(eval) is an
            # exact per-channel affine using the running statistics.
            h = (y * g_ref[...] + sh_ref[...]).astype(jnp.bfloat16)

        w_ref, s_ref, b_ref = prm[idx:idx + 3]
        out_ref[...] = jnp.tanh(dense(h, w_ref, s_ref, b_ref)).astype(out_ref.dtype)

    return kernel


def _choose_batch_tile(B):
    """Pick the batch tile.

    * B >= 512: tb = 256 (fills the 256-wide MXU on v6e/v7x, >= 2 tiles).
    * 64 <= B < 512: split into 2 tiles so the 'parallel' grid axis shards
      across v7x's two TensorCores (16-multiple keeps bf16/f32 tiling clean).
    * small B: one tile (latency path).
    """
    if B >= 512:
        return 256
    if B >= 64:
        return _round_up((B + 1) // 2, 16)
    return _round_up(B, 8)


def fused_mlp_forward(kparams, x, *, image_size, single_buffer_weights):
    """x: (B, fmri_dim) -> (B, 1, image_size, image_size) f32."""
    B, fmri_dim = x.shape
    out_dim = image_size * image_size
    hidden = kparams["hidden"]
    out_p = kparams["out"]
    n_out_pad = out_p["w_q"].shape[1]      # lane-dense padded output width
    num_hidden = len(hidden)

    # Pre-cast activations to bf16 in the wrapper: halves input DMA bytes and
    # removes a per-tile VPU cast pass inside the kernel.
    x = x.astype(jnp.bfloat16)

    tb = _choose_batch_tile(B)
    b_pad = _round_up(B, tb)
    if b_pad != B:
        x = jnp.pad(x, ((0, b_pad - B), (0, 0)))

    # Resident (constant-index-map) parameter specs.  They never change across
    # batch tiles, so request single buffering to halve their VMEM footprint.
    if single_buffer_weights:
        pmode = pl.Buffered(1)

        def const_spec(shape):
            return pl.BlockSpec(shape, lambda i: (0, 0), pipeline_mode=pmode)
    else:
        def const_spec(shape):
            return pl.BlockSpec(shape, lambda i: (0, 0))

    in_specs = [pl.BlockSpec((tb, fmri_dim), lambda i: (i, 0))]
    flat_args = []
    for layer in hidden:
        for name in ("w_q", "qscale", "b", "bn_scale", "bn_shift"):
            a = layer[name]
            flat_args.append(a)
            in_specs.append(const_spec(a.shape))
    for name in ("w_q", "qscale", "b"):
        a = out_p[name]
        flat_args.append(a)
        in_specs.append(const_spec(a.shape))

    out_specs = pl.BlockSpec((tb, n_out_pad), lambda i: (i, 0))

    # TODO(synk): if the model is scaled so a single layer's weights no longer
    # fit resident in VMEM (esp. on v7x's 64 MiB), add an N/K "arbitrary" grid
    # axis with an f32 accumulator instead of keeping that layer resident.
    y = pl.pallas_call(
        _make_fused_kernel(num_hidden),
        out_shape=jax.ShapeDtypeStruct((b_pad, n_out_pad), jnp.float32),
        grid=(b_pad // tb,),
        in_specs=in_specs,
        out_specs=out_specs,
        compiler_params=pltpu.CompilerParams(
            dimension_semantics=("parallel",),
            # Ample for tb=256 tiles + ~5.6 MiB resident int8 weights at full
            # model scale; safely under the ~56 MiB usable budget on v7x.
            vmem_limit_bytes=48 * 1024 * 1024,
        ),
    )(x, *flat_args)

    y = y[:B, :out_dim]
    return y.reshape(B, 1, image_size, image_size)


@functools.partial(jax.jit, static_argnames=("image_size", "single_buffer_weights"))
def _forward_impl(kparams, fmri_embeddings, *, image_size, single_buffer_weights):
    return fused_mlp_forward(kparams, fmri_embeddings, image_size=image_size,
                             single_buffer_weights=single_buffer_weights)


# Cached capability flag: if pipeline_mode=pl.Buffered(1) is rejected by this
# JAX/Mosaic build, fall back (once) to default double-buffered weight specs.
_SINGLE_BUFFER_WEIGHTS_OK = [True]


def forward(kparams, fmri_embeddings, *, image_size=28):
    if _SINGLE_BUFFER_WEIGHTS_OK[0]:
        try:
            return _forward_impl(kparams, fmri_embeddings, image_size=image_size,
                                 single_buffer_weights=True)
        except Exception:
            _SINGLE_BUFFER_WEIGHTS_OK[0] = False
    return _forward_impl(kparams, fmri_embeddings, image_size=image_size,
                         single_buffer_weights=False)


# ----------------------------------------------------------------------------
# Parameters (raw, PyTorch-like) and host-side preparation for the kernel
# ----------------------------------------------------------------------------
def init_params(key, fmri_dim=512, hidden_dims=(1024, 2048, 1024), image_size=28):
    """Deterministic synthetic params with the same shapes as the PyTorch module."""
    params = {"hidden": []}
    dims = [fmri_dim] + list(hidden_dims)
    for din, dout in zip(dims[:-1], dims[1:]):
        key, kw, kb, kg, kbeta, km, kv = jax.random.split(key, 7)
        lim = 1.0 / jnp.sqrt(din)
        params["hidden"].append({
            "w": jax.random.uniform(kw, (din, dout), jnp.float32, -lim, lim),
            "b": jax.random.uniform(kb, (dout,), jnp.float32, -lim, lim),
            "gamma": 1.0 + 0.1 * jax.random.normal(kg, (dout,), jnp.float32),
            "beta": 0.1 * jax.random.normal(kbeta, (dout,), jnp.float32),
            "mean": 0.05 * jax.random.normal(km, (dout,), jnp.float32),
            "var": 1.0 + 0.1 * jax.random.uniform(kv, (dout,), jnp.float32),
        })
    key, kw, kb = jax.random.split(key, 3)
    din, dout = dims[-1], image_size * image_size
    lim = 1.0 / jnp.sqrt(din)
    params["out_w"] = jax.random.uniform(kw, (din, dout), jnp.float32, -lim, lim)
    params["out_b"] = jax.random.uniform(kb, (dout,), jnp.float32, -lim, lim)
    return params


def _quantize_per_col(w):
    """Symmetric per-output-channel int8 quantization (w ≈ w_q * scale[col])."""
    absmax = jnp.max(jnp.abs(w), axis=0)
    scale = jnp.where(absmax > 0, absmax / 127.0, 1.0)
    w_q = jnp.clip(jnp.round(w / scale), -127, 127).astype(jnp.int8)
    return w_q, scale.reshape(1, -1).astype(jnp.float32)


def prepare_kernel_params(params, image_size=28):
    """Quantize linear weights to int8 (per output channel), keep biases f32,
    precompute eval-mode BatchNorm as a per-channel affine, and pad the output
    layer to a lane-dense (multiple of 128) width."""
    out_dim = image_size * image_size
    n_pad = _round_up(out_dim, 128)

    hidden = []
    for layer in params["hidden"]:
        w_q, qscale = _quantize_per_col(layer["w"])
        inv_std = 1.0 / jnp.sqrt(layer["var"] + _BN_EPS)
        bn_scale = layer["gamma"] * inv_std
        bn_shift = layer["beta"] - layer["mean"] * bn_scale
        hidden.append({
            "w_q": w_q,
            "qscale": qscale,
            "b": layer["b"].reshape(1, -1).astype(jnp.float32),
            "bn_scale": bn_scale.reshape(1, -1).astype(jnp.float32),
            "bn_shift": bn_shift.reshape(1, -1).astype(jnp.float32),
        })

    w_out = jnp.pad(params["out_w"], ((0, 0), (0, n_pad - out_dim)))
    b_out = jnp.pad(params["out_b"], (0, n_pad - out_dim))
    w_q, qscale = _quantize_per_col(w_out)
    out = {
        "w_q": w_q,
        "qscale": qscale,
        "b": b_out.reshape(1, -1).astype(jnp.float32),
    }
    return {"hidden": hidden, "out": out}


# ----------------------------------------------------------------------------
# Pure-JAX references
# ----------------------------------------------------------------------------
def forward_reference_matched(kparams, x, *, image_size):
    """Same quantized/bf16 numerics as the kernel, in plain JAX (tight check)."""
    h = x.astype(jnp.bfloat16)
    for layer in kparams["hidden"]:
        acc = jnp.dot(h, layer["w_q"].astype(jnp.bfloat16),
                      preferred_element_type=jnp.float32)
        y = jnp.maximum(acc * layer["qscale"] + layer["b"], 0.0)
        h = (y * layer["bn_scale"] + layer["bn_shift"]).astype(jnp.bfloat16)
    o = kparams["out"]
    acc = jnp.dot(h, o["w_q"].astype(jnp.bfloat16), preferred_element_type=jnp.float32)
    y = jnp.tanh(acc * o["qscale"] + o["b"])
    out_dim = image_size * image_size
    return y[:, :out_dim].reshape(x.shape[0], 1, image_size, image_size)


def forward_reference_f32(params, x, *, image_size):
    """Full-precision PyTorch eval-mode semantics (loose check vs quantized kernel)."""
    h = x
    for layer in params["hidden"]:
        h = jnp.maximum(h @ layer["w"] + layer["b"], 0.0)
        inv_std = 1.0 / jnp.sqrt(layer["var"] + _BN_EPS)
        h = layer["gamma"] * (h - layer["mean"]) * inv_std + layer["beta"]
    y = jnp.tanh(h @ params["out_w"] + params["out_b"])
    return y.reshape(x.shape[0], 1, image_size, image_size)


# ----------------------------------------------------------------------------
if __name__ == "__main__":
    # Small-but-representative shapes (lane-aligned hidden dims; output 28x28).
    FMRI_DIM = 256
    HIDDEN_DIMS = (256, 512, 256)
    IMAGE_SIZE = 28
    BATCH = 8

    key = jax.random.PRNGKey(0)
    kparams_key, kx = jax.random.split(key)
    raw_params = init_params(kparams_key, FMRI_DIM, HIDDEN_DIMS, IMAGE_SIZE)
    kparams = prepare_kernel_params(raw_params, IMAGE_SIZE)
    fmri = jax.random.normal(kx, (BATCH, FMRI_DIM), jnp.float32)

    out = forward(kparams, fmri, image_size=IMAGE_SIZE)
    out = jax.block_until_ready(out)

    assert out.shape == (BATCH, 1, IMAGE_SIZE, IMAGE_SIZE), out.shape
    assert out.dtype == jnp.float32

    # Tight check: kernel matches identical (int8-dequant, bf16-activation)
    # math written in plain JAX.
    ref_m = forward_reference_matched(kparams, fmri, image_size=IMAGE_SIZE)
    err_m = float(jnp.max(jnp.abs(out - ref_m)))
    assert err_m < 5e-3, err_m

    # Loose check: int8 weight quantization + bf16 activations stay close to
    # the full-f32 PyTorch eval-mode forward.
    ref_f = forward_reference_f32(raw_params, fmri, image_size=IMAGE_SIZE)
    err_f = float(jnp.max(jnp.abs(out - ref_f)))
    assert err_f < 1.5e-1, err_f

    print("KERNEL_OK")
</pallas_src>

<mosaic_0001>
module attributes {stable_mosaic.version = 11 : i64} {
  func.func @kernel(%arg0: i32, %arg1: memref<8x256xbf16, #tpu.memory_space<vmem>>, %arg2: memref<256x256xi8, #tpu.memory_space<vmem>>, %arg3: memref<1x256xf32, #tpu.memory_space<vmem>>, %arg4: memref<1x256xf32, #tpu.memory_space<vmem>>, %arg5: memref<1x256xf32, #tpu.memory_space<vmem>>, %arg6: memref<1x256xf32, #tpu.memory_space<vmem>>, %arg7: memref<256x512xi8, #tpu.memory_space<vmem>>, %arg8: memref<1x512xf32, #tpu.memory_space<vmem>>, %arg9: memref<1x512xf32, #tpu.memory_space<vmem>>, %arg10: memref<1x512xf32, #tpu.memory_space<vmem>>, %arg11: memref<1x512xf32, #tpu.memory_space<vmem>>, %arg12: memref<512x256xi8, #tpu.memory_space<vmem>>, %arg13: memref<1x256xf32, #tpu.memory_space<vmem>>, %arg14: memref<1x256xf32, #tpu.memory_space<vmem>>, %arg15: memref<1x256xf32, #tpu.memory_space<vmem>>, %arg16: memref<1x256xf32, #tpu.memory_space<vmem>>, %arg17: memref<256x896xi8, #tpu.memory_space<vmem>>, %arg18: memref<1x896xf32, #tpu.memory_space<vmem>>, %arg19: memref<1x896xf32, #tpu.memory_space<vmem>>, %arg20: memref<8x896xf32, #tpu.memory_space<vmem>>) attributes {dimension_semantics = [#tpu.dimension_semantics<parallel>], iteration_bounds = array<i64: 1>, scalar_prefetch = 0 : i64, scratch_operands = 0 : i64, tpu.core_type = #tpu.core_type<tc>, window_params = [{transform_indices = @transform_0, window_bounds = array<i64: 8, 256>}, {pipeline_mode = #tpu.pipeline_mode<synchronous>, transform_indices = @transform_1, window_bounds = array<i64: 256, 256>}, {pipeline_mode = #tpu.pipeline_mode<synchronous>, transform_indices = @transform_2, window_bounds = array<i64: 1, 256>}, {pipeline_mode = #tpu.pipeline_mode<synchronous>, transform_indices = @transform_3, window_bounds = array<i64: 1, 256>}, {pipeline_mode = #tpu.pipeline_mode<synchronous>, transform_indices = @transform_4, window_bounds = array<i64: 1, 256>}, {pipeline_mode = #tpu.pipeline_mode<synchronous>, transform_indices = @transform_5, window_bounds = array<i64: 1, 256>}, {pipeline_mode = #tpu.pipeline_mode<synchronous>, transform_indices = @transform_6, window_bounds = array<i64: 256, 512>}, {pipeline_mode = #tpu.pipeline_mode<synchronous>, transform_indices = @transform_7, window_bounds = array<i64: 1, 512>}, {pipeline_mode = #tpu.pipeline_mode<synchronous>, transform_indices = @transform_8, window_bounds = array<i64: 1, 512>}, {pipeline_mode = #tpu.pipeline_mode<synchronous>, transform_indices = @transform_9, window_bounds = array<i64: 1, 512>}, {pipeline_mode = #tpu.pipeline_mode<synchronous>, transform_indices = @transform_10, window_bounds = array<i64: 1, 512>}, {pipeline_mode = #tpu.pipeline_mode<synchronous>, transform_indices = @transform_11, window_bounds = array<i64: 512, 256>}, {pipeline_mode = #tpu.pipeline_mode<synchronous>, transform_indices = @transform_12, window_bounds = array<i64: 1, 256>}, {pipeline_mode = #tpu.pipeline_mode<synchronous>, transform_indices = @transform_13, window_bounds = array<i64: 1, 256>}, {pipeline_mode = #tpu.pipeline_mode<synchronous>, transform_indices = @transform_14, window_bounds = array<i64: 1, 256>}, {pipeline_mode = #tpu.pipeline_mode<synchronous>, transform_indices = @transform_15, window_bounds = array<i64: 1, 256>}, {pipeline_mode = #tpu.pipeline_mode<synchronous>, transform_indices = @transform_16, window_bounds = array<i64: 256, 896>}, {pipeline_mode = #tpu.pipeline_mode<synchronous>, transform_indices = @transform_17, window_bounds = array<i64: 1, 896>}, {pipeline_mode = #tpu.pipeline_mode<synchronous>, transform_indices = @transform_18, window_bounds = array<i64: 1, 896>}, {transform_indices = @transform_19, window_bounds = array<i64: 8, 896>}]} {
    %c0 = arith.constant 0 : index
    %c0_0 = arith.constant 0 : index
    %0 = vector.load %arg1[%c0, %c0_0] : memref<8x256xbf16, #tpu.memory_space<vmem>>, vector<8x256xbf16>
    %c0_1 = arith.constant 0 : index
    %c0_2 = arith.constant 0 : index
    %1 = vector.load %arg2[%c0_1, %c0_2] : memref<256x256xi8, #tpu.memory_space<vmem>>, vector<256x256xi8>
    %2 = arith.sitofp %1 : vector<256x256xi8> to vector<256x256xbf16>
    %cst = arith.constant dense<0.000000e+00> : vector<8x256xf32>
    %3 = tpu.matmul %0, %2, %cst {dimension_numbers = #tpu.dot_dimension_numbers<[1], [0], [0], [1], [0, 0, 1, 1], [], []>} : vector<8x256xbf16>, vector<256x256xbf16>, vector<8x256xf32> -> vector<8x256xf32>
    %c0_3 = arith.constant 0 : index
    %c0_4 = arith.constant 0 : index
    %4 = vector.load %arg3[%c0_3, %c0_4] : memref<1x256xf32, #tpu.memory_space<vmem>>, vector<1x256xf32>
    %5 = vector.broadcast %4 : vector<1x256xf32> to vector<8x256xf32>
    %6 = arith.mulf %3, %5 : vector<8x256xf32>
    %c0_5 = arith.constant 0 : index
    %c0_6 = arith.constant 0 : index
    %7 = vector.load %arg4[%c0_5, %c0_6] : memref<1x256xf32, #tpu.memory_space<vmem>>, vector<1x256xf32>
    %8 = vector.broadcast %7 : vector<1x256xf32> to vector<8x256xf32>
    %9 = arith.addf %6, %8 : vector<8x256xf32>
    %cst_7 = arith.constant 0.000000e+00 : f32
    %10 = vector.broadcast %cst_7 : f32 to vector<8x256xf32>
    %11 = arith.maximumf %9, %10 : vector<8x256xf32>
    %c0_8 = arith.constant 0 : index
    %c0_9 = arith.constant 0 : index
    %12 = vector.load %arg5[%c0_8, %c0_9] : memref<1x256xf32, #tpu.memory_space<vmem>>, vector<1x256xf32>
    %13 = vector.broadcast %12 : vector<1x256xf32> to vector<8x256xf32>
    %14 = arith.mulf %11, %13 : vector<8x256xf32>
    %c0_10 = arith.constant 0 : index
    %c0_11 = arith.constant 0 : index
    %15 = vector.load %arg6[%c0_10, %c0_11] : memref<1x256xf32, #tpu.memory_space<vmem>>, vector<1x256xf32>
    %16 = vector.broadcast %15 : vector<1x256xf32> to vector<8x256xf32>
    %17 = arith.addf %14, %16 : vector<8x256xf32>
    %18 = arith.truncf %17 : vector<8x256xf32> to vector<8x256xbf16>
    %c0_12 = arith.constant 0 : index
    %c0_13 = arith.constant 0 : index
    %19 = vector.load %arg7[%c0_12, %c0_13] : memref<256x512xi8, #tpu.memory_space<vmem>>, vector<256x512xi8>
    %20 = arith.sitofp %19 : vector<256x512xi8> to vector<256x512xbf16>
    %cst_14 = arith.constant dense<0.000000e+00> : vector<8x512xf32>
    %21 = tpu.matmul %18, %20, %cst_14 {dimension_numbers = #tpu.dot_dimension_numbers<[1], [0], [0], [1], [0, 0, 1, 1], [], []>} : vector<8x256xbf16>, vector<256x512xbf16>, vector<8x512xf32> -> vector<8x512xf32>
    %c0_15 = arith.constant 0 : index
    %c0_16 = arith.constant 0 : index
    %22 = vector.load %arg8[%c0_15, %c0_16] : memref<1x512xf32, #tpu.memory_space<vmem>>, vector<1x512xf32>
    %23 = vector.broadcast %22 : vector<1x512xf32> to vector<8x512xf32>
    %24 = arith.mulf %21, %23 : vector<8x512xf32>
    %c0_17 = arith.constant 0 : index
    %c0_18 = arith.constant 0 : index
    %25 = vector.load %arg9[%c0_17, %c0_18] : memref<1x512xf32, #tpu.memory_space<vmem>>, vector<1x512xf32>
    %26 = vector.broadcast %25 : vector<1x512xf32> to vector<8x512xf32>
    %27 = arith.addf %24, %26 : vector<8x512xf32>
    %cst_19 = arith.constant 0.000000e+00 : f32
    %28 = vector.broadcast %cst_19 : f32 to vector<8x512xf32>
    %29 = arith.maximumf %27, %28 : vector<8x512xf32>
    %c0_20 = arith.constant 0 : index
    %c0_21 = arith.constant 0 : index
    %30 = vector.load %arg10[%c0_20, %c0_21] : memref<1x512xf32, #tpu.memory_space<vmem>>, vector<1x512xf32>
    %31 = vector.broadcast %30 : vector<1x512xf32> to vector<8x512xf32>
    %32 = arith.mulf %29, %31 : vector<8x512xf32>
    %c0_22 = arith.constant 0 : index
    %c0_23 = arith.constant 0 : index
    %33 = vector.load %arg11[%c0_22, %c0_23] : memref<1x512xf32, #tpu.memory_space<vmem>>, vector<1x512xf32>
    %34 = vector.broadcast %33 : vector<1x512xf32> to vector<8x512xf32>
    %35 = arith.addf %32, %34 : vector<8x512xf32>
    %36 = arith.truncf %35 : vector<8x512xf32> to vector<8x512xbf16>
    %c0_24 = arith.constant 0 : index
    %c0_25 = arith.constant 0 : index
    %37 = vector.load %arg12[%c0_24, %c0_25] : memref<512x256xi8, #tpu.memory_space<vmem>>, vector<512x256xi8>
    %38 = arith.sitofp %37 : vector<512x256xi8> to vector<512x256xbf16>
    %cst_26 = arith.constant dense<0.000000e+00> : vector<8x256xf32>
    %39 = tpu.matmul %36, %38, %cst_26 {dimension_numbers = #tpu.dot_dimension_numbers<[1], [0], [0], [1], [0, 0, 1, 1], [], []>} : vector<8x512xbf16>, vector<512x256xbf16>, vector<8x256xf32> -> vector<8x256xf32>
    %c0_27 = arith.constant 0 : index
    %c0_28 = arith.constant 0 : index
    %40 = vector.load %arg13[%c0_27, %c0_28] : memref<1x256xf32, #tpu.memory_space<vmem>>, vector<1x256xf32>
    %41 = vector.broadcast %40 : vector<1x256xf32> to vector<8x256xf32>
    %42 = arith.mulf %39, %41 : vector<8x256xf32>
    %c0_29 = arith.constant 0 : index
    %c0_30 = arith.constant 0 : index
    %43 = vector.load %arg14[%c0_29, %c0_30] : memref<1x256xf32, #tpu.memory_space<vmem>>, vector<1x256xf32>
    %44 = vector.broadcast %43 : vector<1x256xf32> to vector<8x256xf32>
    %45 = arith.addf %42, %44 : vector<8x256xf32>
    %cst_31 = arith.constant 0.000000e+00 : f32
    %46 = vector.broadcast %cst_31 : f32 to vector<8x256xf32>
    %47 = arith.maximumf %45, %46 : vector<8x256xf32>
    %c0_32 = arith.constant 0 : index
    %c0_33 = arith.constant 0 : index
    %48 = vector.load %arg15[%c0_32, %c0_33] : memref<1x256xf32, #tpu.memory_space<vmem>>, vector<1x256xf32>
    %49 = vector.broadcast %48 : vector<1x256xf32> to vector<8x256xf32>
    %50 = arith.mulf %47, %49 : vector<8x256xf32>
    %c0_34 = arith.constant 0 : index
    %c0_35 = arith.constant 0 : index
    %51 = vector.load %arg16[%c0_34, %c0_35] : memref<1x256xf32, #tpu.memory_space<vmem>>, vector<1x256xf32>
    %52 = vector.broadcast %51 : vector<1x256xf32> to vector<8x256xf32>
    %53 = arith.addf %50, %52 : vector<8x256xf32>
    %54 = arith.truncf %53 : vector<8x256xf32> to vector<8x256xbf16>
    %c0_36 = arith.constant 0 : index
    %c0_37 = arith.constant 0 : index
    %55 = vector.load %arg17[%c0_36, %c0_37] : memref<256x896xi8, #tpu.memory_space<vmem>>, vector<256x896xi8>
    %56 = arith.sitofp %55 : vector<256x896xi8> to vector<256x896xbf16>
    %cst_38 = arith.constant dense<0.000000e+00> : vector<8x896xf32>
    %57 = tpu.matmul %54, %56, %cst_38 {dimension_numbers = #tpu.dot_dimension_numbers<[1], [0], [0], [1], [0, 0, 1, 1], [], []>} : vector<8x256xbf16>, vector<256x896xbf16>, vector<8x896xf32> -> vector<8x896xf32>
    %c0_39 = arith.constant 0 : index
    %c0_40 = arith.constant 0 : index
    %58 = vector.load %arg18[%c0_39, %c0_40] : memref<1x896xf32, #tpu.memory_space<vmem>>, vector<1x896xf32>
    %59 = vector.broadcast %58 : vector<1x896xf32> to vector<8x896xf32>
    %60 = arith.mulf %57, %59 : vector<8x896xf32>
    %c0_41 = arith.constant 0 : index
    %c0_42 = arith.constant 0 : index
    %61 = vector.load %arg19[%c0_41, %c0_42] : memref<1x896xf32, #tpu.memory_space<vmem>>, vector<1x896xf32>
    %62 = vector.broadcast %61 : vector<1x896xf32> to vector<8x896xf32>
    %63 = arith.addf %60, %62 : vector<8x896xf32>
    %64 = math.tanh %63 : vector<8x896xf32>
    %c0_43 = arith.constant 0 : index
    %c0_44 = arith.constant 0 : index
    %65 = vector.load %arg20[%c0_43, %c0_44] : memref<8x896xf32, #tpu.memory_space<vmem>>, vector<8x896xf32>
    tpu.vector_store %arg20[%c0_43, %c0_44], %64 {strides = array<i32>} : memref<8x896xf32, #tpu.memory_space<vmem>>, vector<8x896xf32>,
    return
  }
  func.func @transform_0(%arg0: i32) -> (i32, i32) {
    %c0_i32 = arith.constant 0 : i32
    %c0_i32_0 = arith.constant 0 : i32
    return %arg0, %c0_i32 : i32, i32
  }
  func.func @transform_1(%arg0: i32) -> (i32, i32) {
    %c0_i32 = arith.constant 0 : i32
    %c0_i32_0 = arith.constant 0 : i32
    %c0_i32_1 = arith.constant 0 : i32
    return %c0_i32, %c0_i32_0 : i32, i32
  }
  func.func @transform_2(%arg0: i32) -> (i32, i32) {
    %c0_i32 = arith.constant 0 : i32
    %c0_i32_0 = arith.constant 0 : i32
    %c0_i32_1 = arith.constant 0 : i32
    return %c0_i32, %c0_i32_0 : i32, i32
  }
  func.func @transform_3(%arg0: i32) -> (i32, i32) {
    %c0_i32 = arith.constant 0 : i32
    %c0_i32_0 = arith.constant 0 : i32
    %c0_i32_1 = arith.constant 0 : i32
    return %c0_i32, %c0_i32_0 : i32, i32
  }
  func.func @transform_4(%arg0: i32) -> (i32, i32) {
    %c0_i32 = arith.constant 0 : i32
    %c0_i32_0 = arith.constant 0 : i32
    %c0_i32_1 = arith.constant 0 : i32
    return %c0_i32, %c0_i32_0 : i32, i32
  }
  func.func @transform_5(%arg0: i32) -> (i32, i32) {
    %c0_i32 = arith.constant 0 : i32
    %c0_i32_0 = arith.constant 0 : i32
    %c0_i32_1 = arith.constant 0 : i32
    return %c0_i32, %c0_i32_0 : i32, i32
  }
  func.func @transform_6(%arg0: i32) -> (i32, i32) {
    %c0_i32 = arith.constant 0 : i32
    %c0_i32_0 = arith.constant 0 : i32
    %c0_i32_1 = arith.constant 0 : i32
    return %c0_i32, %c0_i32_0 : i32, i32
  }
  func.func @transform_7(%arg0: i32) -> (i32, i32) {
    %c0_i32 = arith.constant 0 : i32
    %c0_i32_0 = arith.constant 0 : i32
    %c0_i32_1 = arith.constant 0 : i32
    return %c0_i32, %c0_i32_0 : i32, i32
  }
  func.func @transform_8(%arg0: i32) -> (i32, i32) {
    %c0_i32 = arith.constant 0 : i32
    %c0_i32_0 = arith.constant 0 : i32
    %c0_i32_1 = arith.constant 0 : i32
    return %c0_i32, %c0_i32_0 : i32, i32
  }
  func.func @transform_9(%arg0: i32) -> (i32, i32) {
    %c0_i32 = arith.constant 0 : i32
    %c0_i32_0 = arith.constant 0 : i32
    %c0_i32_1 = arith.constant 0 : i32
    return %c0_i32, %c0_i32_0 : i32, i32
  }
  func.func @transform_10(%arg0: i32) -> (i32, i32) {
    %c0_i32 = arith.constant 0 : i32
    %c0_i32_0 = arith.constant 0 : i32
    %c0_i32_1 = arith.constant 0 : i32
    return %c0_i32, %c0_i32_0 : i32, i32
  }
  func.func @transform_11(%arg0: i32) -> (i32, i32) {
    %c0_i32 = arith.constant 0 : i32
    %c0_i32_0 = arith.constant 0 : i32
    %c0_i32_1 = arith.constant 0 : i32
    return %c0_i32, %c0_i32_0 : i32, i32
  }
  func.func @transform_12(%arg0: i32) -> (i32, i32) {
    %c0_i32 = arith.constant 0 : i32
    %c0_i32_0 = arith.constant 0 : i32
    %c0_i32_1 = arith.constant 0 : i32
    return %c0_i32, %c0_i32_0 : i32, i32
  }
  func.func @transform_13(%arg0: i32) -> (i32, i32) {
    %c0_i32 = arith.constant 0 : i32
    %c0_i32_0 = arith.constant 0 : i32
    %c0_i32_1 = arith.constant 0 : i32
    return %c0_i32, %c0_i32_0 : i32, i32
  }
  func.func @transform_14(%arg0: i32) -> (i32, i32) {
    %c0_i32 = arith.constant 0 : i32
    %c0_i32_0 = arith.constant 0 : i32
    %c0_i32_1 = arith.constant 0 : i32
    return %c0_i32, %c0_i32_0 : i32, i32
  }
  func.func @transform_15(%arg0: i32) -> (i32, i32) {
    %c0_i32 = arith.constant 0 : i32
    %c0_i32_0 = arith.constant 0 : i32
    %c0_i32_1 = arith.constant 0 : i32
    return %c0_i32, %c0_i32_0 : i32, i32
  }
  func.func @transform_16(%arg0: i32) -> (i32, i32) {
    %c0_i32 = arith.constant 0 : i32
    %c0_i32_0 = arith.constant 0 : i32
    %c0_i32_1 = arith.constant 0 : i32
    return %c0_i32, %c0_i32_0 : i32, i32
  }
  func.func @transform_17(%arg0: i32) -> (i32, i32) {
    %c0_i32 = arith.constant 0 : i32
    %c0_i32_0 = arith.constant 0 : i32
    %c0_i32_1 = arith.constant 0 : i32
    return %c0_i32, %c0_i32_0 : i32, i32
  }
  func.func @transform_18(%arg0: i32) -> (i32, i32) {
    %c0_i32 = arith.constant 0 : i32
    %c0_i32_0 = arith.constant 0 : i32
    %c0_i32_1 = arith.constant 0 : i32
    return %c0_i32, %c0_i32_0 : i32, i32
  }
  func.func @transform_19(%arg0: i32) -> (i32, i32) {
    %c0_i32 = arith.constant 0 : i32
    %c0_i32_0 = arith.constant 0 : i32
    return %arg0, %c0_i32 : i32, i32
  }
}

module attributes {stable_mosaic.version = 11 : i64} {
  func.func @kernel(%arg0: i32, %arg1: memref<8x256xbf16, #tpu.memory_space<vmem>>, %arg2: memref<256x256xi8, #tpu.memory_space<vmem>>, %arg3: memref<1x256xf32, #tpu.memory_space<vmem>>, %arg4: memref<1x256xf32, #tpu.memory_space<vmem>>, %arg5: memref<1x256xf32, #tpu.memory_space<vmem>>, %arg6: memref<1x256xf32, #tpu.memory_space<vmem>>, %arg7: memref<256x512xi8, #tpu.memory_space<vmem>>, %arg8: memref<1x512xf32, #tpu.memory_space<vmem>>, %arg9: memref<1x512xf32, #tpu.memory_space<vmem>>, %arg10: memref<1x512xf32, #tpu.memory_space<vmem>>, %arg11: memref<1x512xf32, #tpu.memory_space<vmem>>, %arg12: memref<512x256xi8, #tpu.memory_space<vmem>>, %arg13: memref<1x256xf32, #tpu.memory_space<vmem>>, %arg14: memref<1x256xf32, #tpu.memory_space<vmem>>, %arg15: memref<1x256xf32, #tpu.memory_space<vmem>>, %arg16: memref<1x256xf32, #tpu.memory_space<vmem>>, %arg17: memref<256x896xi8, #tpu.memory_space<vmem>>, %arg18: memref<1x896xf32, #tpu.memory_space<vmem>>, %arg19: memref<1x896xf32, #tpu.memory_space<vmem>>, %arg20: memref<8x896xf32, #tpu.memory_space<vmem>>) attributes {dimension_semantics = [#tpu.dimension_semantics<parallel>], iteration_bounds = array<i64: 1>, scalar_prefetch = 0 : i64, scratch_operands = 0 : i64, tpu.core_type = #tpu.core_type<tc>, window_params = [{transform_indices = @transform_0, window_bounds = array<i64: 8, 256>}, {pipeline_mode = #tpu.pipeline_mode<synchronous>, transform_indices = @transform_1, window_bounds = array<i64: 256, 256>}, {pipeline_mode = #tpu.pipeline_mode<synchronous>, transform_indices = @transform_2, window_bounds = array<i64: 1, 256>}, {pipeline_mode = #tpu.pipeline_mode<synchronous>, transform_indices = @transform_3, window_bounds = array<i64: 1, 256>}, {pipeline_mode = #tpu.pipeline_mode<synchronous>, transform_indices = @transform_4, window_bounds = array<i64: 1, 256>}, {pipeline_mode = #tpu.pipeline_mode<synchronous>, transform_indices = @transform_5, window_bounds = array<i64: 1, 256>}, {pipeline_mode = #tpu.pipeline_mode<synchronous>, transform_indices = @transform_6, window_bounds = array<i64: 256, 512>}, {pipeline_mode = #tpu.pipeline_mode<synchronous>, transform_indices = @transform_7, window_bounds = array<i64: 1, 512>}, {pipeline_mode = #tpu.pipeline_mode<synchronous>, transform_indices = @transform_8, window_bounds = array<i64: 1, 512>}, {pipeline_mode = #tpu.pipeline_mode<synchronous>, transform_indices = @transform_9, window_bounds = array<i64: 1, 512>}, {pipeline_mode = #tpu.pipeline_mode<synchronous>, transform_indices = @transform_10, window_bounds = array<i64: 1, 512>}, {pipeline_mode = #tpu.pipeline_mode<synchronous>, transform_indices = @transform_11, window_bounds = array<i64: 512, 256>}, {pipeline_mode = #tpu.pipeline_mode<synchronous>, transform_indices = @transform_12, window_bounds = array<i64: 1, 256>}, {pipeline_mode = #tpu.pipeline_mode<synchronous>, transform_indices = @transform_13, window_bounds = array<i64: 1, 256>}, {pipeline_mode = #tpu.pipeline_mode<synchronous>, transform_indices = @transform_14, window_bounds = array<i64: 1, 256>}, {pipeline_mode = #tpu.pipeline_mode<synchronous>, transform_indices = @transform_15, window_bounds = array<i64: 1, 256>}, {pipeline_mode = #tpu.pipeline_mode<synchronous>, transform_indices = @transform_16, window_bounds = array<i64: 256, 896>}, {pipeline_mode = #tpu.pipeline_mode<synchronous>, transform_indices = @transform_17, window_bounds = array<i64: 1, 896>}, {pipeline_mode = #tpu.pipeline_mode<synchronous>, transform_indices = @transform_18, window_bounds = array<i64: 1, 896>}, {transform_indices = @transform_19, window_bounds = array<i64: 8, 896>}]} {
    %c0 = arith.constant 0 : index
    %c0_0 = arith.constant 0 : index
    %0 = vector.load %arg1[%c0, %c0_0] : memref<8x256xbf16, #tpu.memory_space<vmem>>, vector<8x256xbf16>
    %c0_1 = arith.constant 0 : index
    %c0_2 = arith.constant 0 : index
    %1 = vector.load %arg2[%c0_1, %c0_2] : memref<256x256xi8, #tpu.memory_space<vmem>>, vector<256x256xi8>
    %2 = arith.sitofp %1 : vector<256x256xi8> to vector<256x256xbf16>
    %cst = arith.constant dense<0.000000e+00> : vector<8x256xf32>
    %3 = tpu.matmul %0, %2, %cst {dimension_numbers = #tpu.dot_dimension_numbers<[1], [0], [0], [1], [0, 0, 1, 1], [], []>} : vector<8x256xbf16>, vector<256x256xbf16>, vector<8x256xf32> -> vector<8x256xf32>
    %c0_3 = arith.constant 0 : index
    %c0_4 = arith.constant 0 : index
    %4 = vector.load %arg3[%c0_3, %c0_4] : memref<1x256xf32, #tpu.memory_space<vmem>>, vector<1x256xf32>
    %5 = vector.broadcast %4 : vector<1x256xf32> to vector<8x256xf32>
    %6 = arith.mulf %3, %5 : vector<8x256xf32>
    %c0_5 = arith.constant 0 : index
    %c0_6 = arith.constant 0 : index
    %7 = vector.load %arg4[%c0_5, %c0_6] : memref<1x256xf32, #tpu.memory_space<vmem>>, vector<1x256xf32>
    %8 = vector.broadcast %7 : vector<1x256xf32> to vector<8x256xf32>
    %9 = arith.addf %6, %8 : vector<8x256xf32>
    %cst_7 = arith.constant 0.000000e+00 : f32
    %10 = vector.broadcast %cst_7 : f32 to vector<8x256xf32>
    %11 = arith.maximumf %9, %10 : vector<8x256xf32>
    %c0_8 = arith.constant 0 : index
    %c0_9 = arith.constant 0 : index
    %12 = vector.load %arg5[%c0_8, %c0_9] : memref<1x256xf32, #tpu.memory_space<vmem>>, vector<1x256xf32>
    %13 = vector.broadcast %12 : vector<1x256xf32> to vector<8x256xf32>
    %14 = arith.mulf %11, %13 : vector<8x256xf32>
    %c0_10 = arith.constant 0 : index
    %c0_11 = arith.constant 0 : index
    %15 = vector.load %arg6[%c0_10, %c0_11] : memref<1x256xf32, #tpu.memory_space<vmem>>, vector<1x256xf32>
    %16 = vector.broadcast %15 : vector<1x256xf32> to vector<8x256xf32>
    %17 = arith.addf %14, %16 : vector<8x256xf32>
    %18 = arith.truncf %17 : vector<8x256xf32> to vector<8x256xbf16>
    %c0_12 = arith.constant 0 : index
    %c0_13 = arith.constant 0 : index
    %19 = vector.load %arg7[%c0_12, %c0_13] : memref<256x512xi8, #tpu.memory_space<vmem>>, vector<256x512xi8>
    %20 = arith.sitofp %19 : vector<256x512xi8> to vector<256x512xbf16>
    %cst_14 = arith.constant dense<0.000000e+00> : vector<8x512xf32>
    %21 = tpu.matmul %18, %20, %cst_14 {dimension_numbers = #tpu.dot_dimension_numbers<[1], [0], [0], [1], [0, 0, 1, 1], [], []>} : vector<8x256xbf16>, vector<256x512xbf16>, vector<8x512xf32> -> vector<8x512xf32>
    %c0_15 = arith.constant 0 : index
    %c0_16 = arith.constant 0 : index
    %22 = vector.load %arg8[%c0_15, %c0_16] : memref<1x512xf32, #tpu.memory_space<vmem>>, vector<1x512xf32>
    %23 = vector.broadcast %22 : vector<1x512xf32> to vector<8x512xf32>
    %24 = arith.mulf %21, %23 : vector<8x512xf32>
    %c0_17 = arith.constant 0 : index
    %c0_18 = arith.constant 0 : index
    %25 = vector.load %arg9[%c0_17, %c0_18] : memref<1x512xf32, #tpu.memory_space<vmem>>, vector<1x512xf32>
    %26 = vector.broadcast %25 : vector<1x512xf32> to vector<8x512xf32>
    %27 = arith.addf %24, %26 : vector<8x512xf32>
    %cst_19 = arith.constant 0.000000e+00 : f32
    %28 = vector.broadcast %cst_19 : f32 to vector<8x512xf32>
    %29 = arith.maximumf %27, %28 : vector<8x512xf32>
    %c0_20 = arith.constant 0 : index
    %c0_21 = arith.constant 0 : index
    %30 = vector.load %arg10[%c0_20, %c0_21] : memref<1x512xf32, #tpu.memory_space<vmem>>, vector<1x512xf32>
    %31 = vector.broadcast %30 : vector<1x512xf32> to vector<8x512xf32>
    %32 = arith.mulf %29, %31 : vector<8x512xf32>
    %c0_22 = arith.constant 0 : index
    %c0_23 = arith.constant 0 : index
    %33 = vector.load %arg11[%c0_22, %c0_23] : memref<1x512xf32, #tpu.memory_space<vmem>>, vector<1x512xf32>
    %34 = vector.broadcast %33 : vector<1x512xf32> to vector<8x512xf32>
    %35 = arith.addf %32, %34 : vector<8x512xf32>
    %36 = arith.truncf %35 : vector<8x512xf32> to vector<8x512xbf16>
    %c0_24 = arith.constant 0 : index
    %c0_25 = arith.constant 0 : index
    %37 = vector.load %arg12[%c0_24, %c0_25] : memref<512x256xi8, #tpu.memory_space<vmem>>, vector<512x256xi8>
    %38 = arith.sitofp %37 : vector<512x256xi8> to vector<512x256xbf16>
    %cst_26 = arith.constant dense<0.000000e+00> : vector<8x256xf32>
    %39 = tpu.matmul %36, %38, %cst_26 {dimension_numbers = #tpu.dot_dimension_numbers<[1], [0], [0], [1], [0, 0, 1, 1], [], []>} : vector<8x512xbf16>, vector<512x256xbf16>, vector<8x256xf32> -> vector<8x256xf32>
    %c0_27 = arith.constant 0 : index
    %c0_28 = arith.constant 0 : index
    %40 = vector.load %arg13[%c0_27, %c0_28] : memref<1x256xf32, #tpu.memory_space<vmem>>, vector<1x256xf32>
    %41 = vector.broadcast %40 : vector<1x256xf32> to vector<8x256xf32>
    %42 = arith.mulf %39, %41 : vector<8x256xf32>
    %c0_29 = arith.constant 0 : index
    %c0_30 = arith.constant 0 : index
    %43 = vector.load %arg14[%c0_29, %c0_30] : memref<1x256xf32, #tpu.memory_space<vmem>>, vector<1x256xf32>
    %44 = vector.broadcast %43 : vector<1x256xf32> to vector<8x256xf32>
    %45 = arith.addf %42, %44 : vector<8x256xf32>
    %cst_31 = arith.constant 0.000000e+00 : f32
    %46 = vector.broadcast %cst_31 : f32 to vector<8x256xf32>
    %47 = arith.maximumf %45, %46 : vector<8x256xf32>
    %c0_32 = arith.constant 0 : index
    %c0_33 = arith.constant 0 : index
    %48 = vector.load %arg15[%c0_32, %c0_33] : memref<1x256xf32, #tpu.memory_space<vmem>>, vector<1x256xf32>
    %49 = vector.broadcast %48 : vector<1x256xf32> to vector<8x256xf32>
    %50 = arith.mulf %47, %49 : vector<8x256xf32>
    %c0_34 = arith.constant 0 : index
    %c0_35 = arith.constant 0 : index
    %51 = vector.load %arg16[%c0_34, %c0_35] : memref<1x256xf32, #tpu.memory_space<vmem>>, vector<1x256xf32>
    %52 = vector.broadcast %51 : vector<1x256xf32> to vector<8x256xf32>
    %53 = arith.addf %50, %52 : vector<8x256xf32>
    %54 = arith.truncf %53 : vector<8x256xf32> to vector<8x256xbf16>
    %c0_36 = arith.constant 0 : index
    %c0_37 = arith.constant 0 : index
    %55 = vector.load %arg17[%c0_36, %c0_37] : memref<256x896xi8, #tpu.memory_space<vmem>>, vector<256x896xi8>
    %56 = arith.sitofp %55 : vector<256x896xi8> to vector<256x896xbf16>
    %cst_38 = arith.constant dense<0.000000e+00> : vector<8x896xf32>
    %57 = tpu.matmul %54, %56, %cst_38 {dimension_numbers = #tpu.dot_dimension_numbers<[1], [0], [0], [1], [0, 0, 1, 1], [], []>} : vector<8x256xbf16>, vector<256x896xbf16>, vector<8x896xf32> -> vector<8x896xf32>
    %c0_39 = arith.constant 0 : index
    %c0_40 = arith.constant 0 : index
    %58 = vector.load %arg18[%c0_39, %c0_40] : memref<1x896xf32, #tpu.memory_space<vmem>>, vector<1x896xf32>
    %59 = vector.broadcast %58 : vector<1x896xf32> to vector<8x896xf32>
    %60 = arith.mulf %57, %59 : vector<8x896xf32>
    %c0_41 = arith.constant 0 : index
    %c0_42 = arith.constant 0 : index
    %61 = vector.load %arg19[%c0_41, %c0_42] : memref<1x896xf32, #tpu.memory_space<vmem>>, vector<1x896xf32>
    %62 = vector.broadcast %61 : vector<1x896xf32> to vector<8x896xf32>
    %63 = arith.addf %60, %62 : vector<8x896xf32>
    %64 = math.tanh %63 : vector<8x896xf32>
    %c0_43 = arith.constant 0 : index
    %c0_44 = arith.constant 0 : index
    %65 = vector.load %arg20[%c0_43, %c0_44] : memref<8x896xf32, #tpu.memory_space<vmem>>, vector<8x896xf32>
    tpu.vector_store %arg20[%c0_43, %c0_44], %64 {strides = array<i32>} : memref<8x896xf32, #tpu.memory_space<vmem>>, vector<8x896xf32>,
    return
  }
  func.func @transform_0(%arg0: i32) -> (i32, i32) {
    %c0_i32 = arith.constant 0 : i32
    %c0_i32_0 = arith.constant 0 : i32
    return %arg0, %c0_i32 : i32, i32
  }
  func.func @transform_1(%arg0: i32) -> (i32, i32) {
    %c0_i32 = arith.constant 0 : i32
    %c0_i32_0 = arith.constant 0 : i32
    %c0_i32_1 = arith.constant 0 : i32
    return %c0_i32, %c0_i32_0 : i32, i32
  }
  func.func @transform_2(%arg0: i32) -> (i32, i32) {
    %c0_i32 = arith.constant 0 : i32
    %c0_i32_0 = arith.constant 0 : i32
    %c0_i32_1 = arith.constant 0 : i32
    return %c0_i32, %c0_i32_0 : i32, i32
  }
  func.func @transform_3(%arg0: i32) -> (i32, i32) {
    %c0_i32 = arith.constant 0 : i32
    %c0_i32_0 = arith.constant 0 : i32
    %c0_i32_1 = arith.constant 0 : i32
    return %c0_i32, %c0_i32_0 : i32, i32
  }
  func.func @transform_4(%arg0: i32) -> (i32, i32) {
    %c0_i32 = arith.constant 0 : i32
    %c0_i32_0 = arith.constant 0 : i32
    %c0_i32_1 = arith.constant 0 : i32
    return %c0_i32, %c0_i32_0 : i32, i32
  }
  func.func @transform_5(%arg0: i32) -> (i32, i32) {
    %c0_i32 = arith.constant 0 : i32
    %c0_i32_0 = arith.constant 0 : i32
    %c0_i32_1 = arith.constant 0 : i32
    return %c0_i32, %c0_i32_0 : i32, i32
  }
  func.func @transform_6(%arg0: i32) -> (i32, i32) {
    %c0_i32 = arith.constant 0 : i32
    %c0_i32_0 = arith.constant 0 : i32
    %c0_i32_1 = arith.constant 0 : i32
    return %c0_i32, %c0_i32_0 : i32, i32
  }
  func.func @transform_7(%arg0: i32) -> (i32, i32) {
    %c0_i32 = arith.constant 0 : i32
    %c0_i32_0 = arith.constant 0 : i32
    %c0_i32_1 = arith.constant 0 : i32
    return %c0_i32, %c0_i32_0 : i32, i32
  }
  func.func @transform_8(%arg0: i32) -> (i32, i32) {
    %c0_i32 = arith.constant 0 : i32
    %c0_i32_0 = arith.constant 0 : i32
    %c0_i32_1 = arith.constant 0 : i32
    return %c0_i32, %c0_i32_0 : i32, i32
  }
  func.func @transform_9(%arg0: i32) -> (i32, i32) {
    %c0_i32 = arith.constant 0 : i32
    %c0_i32_0 = arith.constant 0 : i32
    %c0_i32_1 = arith.constant 0 : i32
    return %c0_i32, %c0_i32_0 : i32, i32
  }
  func.func @transform_10(%arg0: i32) -> (i32, i32) {
    %c0_i32 = arith.constant 0 : i32
    %c0_i32_0 = arith.constant 0 : i32
    %c0_i32_1 = arith.constant 0 : i32
    return %c0_i32, %c0_i32_0 : i32, i32
  }
  func.func @transform_11(%arg0: i32) -> (i32, i32) {
    %c0_i32 = arith.constant 0 : i32
    %c0_i32_0 = arith.constant 0 : i32
    %c0_i32_1 = arith.constant 0 : i32
    return %c0_i32, %c0_i32_0 : i32, i32
  }
  func.func @transform_12(%arg0: i32) -> (i32, i32) {
    %c0_i32 = arith.constant 0 : i32
    %c0_i32_0 = arith.constant 0 : i32
    %c0_i32_1 = arith.constant 0 : i32
    return %c0_i32, %c0_i32_0 : i32, i32
  }
  func.func @transform_13(%arg0: i32) -> (i32, i32) {
    %c0_i32 = arith.constant 0 : i32
    %c0_i32_0 = arith.constant 0 : i32
    %c0_i32_1 = arith.constant 0 : i32
    return %c0_i32, %c0_i32_0 : i32, i32
  }
  func.func @transform_14(%arg0: i32) -> (i32, i32) {
    %c0_i32 = arith.constant 0 : i32
    %c0_i32_0 = arith.constant 0 : i32
    %c0_i32_1 = arith.constant 0 : i32
    return %c0_i32, %c0_i32_0 : i32, i32
  }
  func.func @transform_15(%arg0: i32) -> (i32, i32) {
    %c0_i32 = arith.constant 0 : i32
    %c0_i32_0 = arith.constant 0 : i32
    %c0_i32_1 = arith.constant 0 : i32
    return %c0_i32, %c0_i32_0 : i32, i32
  }
  func.func @transform_16(%arg0: i32) -> (i32, i32) {
    %c0_i32 = arith.constant 0 : i32
    %c0_i32_0 = arith.constant 0 : i32
    %c0_i32_1 = arith.constant 0 : i32
    return %c0_i32, %c0_i32_0 : i32, i32
  }
  func.func @transform_17(%arg0: i32) -> (i32, i32) {
    %c0_i32 = arith.constant 0 : i32
    %c0_i32_0 = arith.constant 0 : i32
    %c0_i32_1 = arith.constant 0 : i32
    return %c0_i32, %c0_i32_0 : i32, i32
  }
  func.func @transform_18(%arg0: i32) -> (i32, i32) {
    %c0_i32 = arith.constant 0 : i32
    %c0_i32_0 = arith.constant 0 : i32
    %c0_i32_1 = arith.constant 0 : i32
    return %c0_i32, %c0_i32_0 : i32, i32
  }
  func.func @transform_19(%arg0: i32) -> (i32, i32) {
    %c0_i32 = arith.constant 0 : i32
    %c0_i32_0 = arith.constant 0 : i32
    return %arg0, %c0_i32 : i32, i32
  }
}

</mosaic_0001>

<llo_original>
// kernel: _forward_impl.1
$region0: #{_forward_impl.1}
  #allocation0 [shape = 'u32[]', space=smem, size = 0x4, offset = 0x4, fixed_abs, tag = 'smem constant byte address 0x4 - core index']
  #allocation1 [shape = 'u32[144,128]{1,0:T(1,128)}', space=vmem, size = 0x12000, scoped, tag = 'internal scratch']
  %s0 = inlined_call_operand.vmem [shape: bf16[8,256], index: 0, kind: input, shape index: {}]
  %s1 = inlined_call_operand.hbm [shape: s8[256,256], index: 1, kind: input, shape index: {}]
  %s2 = inlined_call_operand.hbm [shape: f32[1,256], index: 2, kind: input, shape index: {}]
  %s3 = inlined_call_operand.hbm [shape: f32[1,256], index: 3, kind: input, shape index: {}]
  %s4 = inlined_call_operand.hbm [shape: f32[1,256], index: 4, kind: input, shape index: {}]
  %s5 = inlined_call_operand.hbm [shape: f32[1,256], index: 5, kind: input, shape index: {}]
  %s6 = inlined_call_operand.hbm [shape: s8[256,512], index: 6, kind: input, shape index: {}]
  %s7 = inlined_call_operand.vmem [shape: f32[1,512], index: 7, kind: input, shape index: {}]
  %s8 = inlined_call_operand.vmem [shape: f32[1,512], index: 8, kind: input, shape index: {}]
  %s9 = inlined_call_operand.vmem [shape: f32[1,512], index: 9, kind: input, shape index: {}]
  %s10 = inlined_call_operand.vmem [shape: f32[1,512], index: 10, kind: input, shape index: {}]
  %s11 = inlined_call_operand.hbm [shape: s8[512,256], index: 11, kind: input, shape index: {}]
  %s12 = inlined_call_operand.vmem [shape: f32[1,256], index: 12, kind: input, shape index: {}]
  %s13 = inlined_call_operand.vmem [shape: f32[1,256], index: 13, kind: input, shape index: {}]
  %s14 = inlined_call_operand.vmem [shape: f32[1,256], index: 14, kind: input, shape index: {}]
  %s15 = inlined_call_operand.vmem [shape: f32[1,256], index: 15, kind: input, shape index: {}]
  %s16 = inlined_call_operand.hbm [shape: s8[256,896], index: 16, kind: input, shape index: {}]
  %s17 = inlined_call_operand.vmem [shape: f32[1,896], index: 17, kind: input, shape index: {}]
  %s18 = inlined_call_operand.vmem [shape: f32[1,896], index: 18, kind: input, shape index: {}]
  %s19 = inlined_call_operand.vmem [shape: f32[8,896], index: 19, kind: output, shape index: {}]
  %s20 = sld [smem:[#allocation0]]
  $region118: #{_forward_impl.1} parent=0
    _
  %s22 = ssub.s32 1, %s20
  %s23 = scalar_select 0, %s22, %s20
  $region1: #{_forward_impl.1} parent=0
    #allocation2 [shape = 'u8[65536]{0}', space=vmem, size = 0x10000, scoped, tag = 'input window, operand 1, single buffered']
    #allocation3 [shape = 's32[1]{0}', space=sflag, size = 0x4, scoped, tag = 'scoped memory for _forward_impl.1']
    #allocation4 [shape = 'u8[1024]{0}', space=vmem, size = 0x400, scoped, tag = 'input window, operand 2, single buffered']
    #allocation5 [shape = 's32[1]{0}', space=sflag, size = 0x4, scoped, tag = 'scoped memory for _forward_impl.1']
    #allocation6 [shape = 'u8[1024]{0}', space=vmem, size = 0x400, scoped, tag = 'input window, operand 3, single buffered']
    #allocation7 [shape = 'u8[1024]{0}', space=vmem, size = 0x400, scoped, tag = 'input window, operand 4, single buffered']
    #allocation8 [shape = 's32[1]{0}', space=sflag, size = 0x4, scoped, tag = 'scoped memory for _forward_impl.1']
    #allocation9 [shape = 'u8[1024]{0}', space=vmem, size = 0x400, scoped, tag = 'input window, operand 5, single buffered']
    #allocation10 [shape = 'u8[131072]{0}', space=vmem, size = 0x20000, scoped, tag = 'input window, operand 6, single buffered']
    #allocation11 [shape = 's32[1]{0}', space=sflag, size = 0x4, scoped, tag = 'scoped memory for _forward_impl.1']
    #allocation12 [shape = 'u8[131072]{0}', space=vmem, size = 0x20000, scoped, tag = 'input window, operand 11, single buffered']
    #allocation13 [shape = 'u8[229376]{0}', space=vmem, size = 0x38000, scoped, tag = 'input window, operand 16, single buffered']
    #allocation14 [shape = 's32[1]{0}', space=sflag, size = 0x4, scoped, tag = 'scoped memory for _forward_impl.1']
    %24 = vsyncpa [#allocation3], 0
    %25 = vsyncpa [#allocation5], 0
    %26 = vsyncpa [#allocation8], 0
    %27 = vsyncpa [#allocation11], 0
    %28 = vsyncpa [#allocation14], 0
    // Predicated region
    $region2: #{_forward_impl.1} parent=1 // pred_check
      _
    $region3: #{_forward_impl.1} parent=1 // pred_check_branch
      %30 = sbr.rel (0) target = $region5
    $region4: #{_forward_impl.1} parent=1 // pred_region
      _
    $region5: #{_forward_impl.1} parent=1 // pred_fallthru
      _
    // Predicated region
    $region6: #{_forward_impl.1} parent=1 // pred_check
      _
    $region7: #{_forward_impl.1} parent=1 // pred_check_branch
      %32 = sbr.rel (0) target = $region9
    $region8: #{_forward_impl.1} parent=1 // pred_region
      %s34 = ssub.s32 2048, 2048
      %35 = vsyncadd [#allocation3], %s34
      %s36 = sshll.u32 [#allocation2], 4
      %s37 = int_to_ptr.vmem [resolvable:$true] %s36
      %42 = dma.hbm_to_vmem [thread:$0]  %s1, 2048, %s37, [#allocation3], 256, 256, 16
    $region9: #{_forward_impl.1} parent=1 // pred_fallthru
      _
    // Predicated region
    $region10: #{_forward_impl.1} parent=1 // pred_check
      _
    $region11: #{_forward_impl.1} parent=1 // pred_check_branch
      %44 = sbr.rel (0) target = $region13
    $region12: #{_forward_impl.1} parent=1 // pred_region
      %s46 = ssub.s32 32, 32
      %47 = vsyncadd [#allocation5], %s46
      %s49 = sshll.u32 [#allocation4], 4
      %s50 = int_to_ptr.vmem [resolvable:$true] %s49
      %52 = dma.hbm_to_vmem [thread:$0]  %s2, 32, %s50, [#allocation5]
    $region13: #{_forward_impl.1} parent=1 // pred_fallthru
      _
    // Predicated region
    $region14: #{_forward_impl.1} parent=1 // pred_check
      _
    $region15: #{_forward_impl.1} parent=1 // pred_check_branch
      %54 = sbr.rel (0) target = $region17
    $region16: #{_forward_impl.1} parent=1 // pred_region
      %s56 = ssub.s32 32, 32
      %57 = vsyncadd [#allocation5], %s56
      %s59 = sshll.u32 [#allocation6], 4
      %s60 = int_to_ptr.vmem [resolvable:$true] %s59
      %62 = dma.hbm_to_vmem [thread:$0]  %s3, 32, %s60, [#allocation5]
    $region17: #{_forward_impl.1} parent=1 // pred_fallthru
      _
    // Predicated region
    $region18: #{_forward_impl.1} parent=1 // pred_check
      _
    $region19: #{_forward_impl.1} parent=1 // pred_check_branch
      %64 = sbr.rel (0) target = $region21
    $region20: #{_forward_impl.1} parent=1 // pred_region
      %s66 = ssub.s32 32, 32
      %67 = vsyncadd [#allocation8], %s66
      %s69 = sshll.u32 [#allocation7], 4
      %s70 = int_to_ptr.vmem [resolvable:$true] %s69
      %72 = dma.hbm_to_vmem [thread:$0]  %s4, 32, %s70, [#allocation8]
    $region21: #{_forward_impl.1} parent=1 // pred_fallthru
      _
    // Predicated region
    $region22: #{_forward_impl.1} parent=1 // pred_check
      _
    $region23: #{_forward_impl.1} parent=1 // pred_check_branch
      %74 = sbr.rel (0) target = $region25
    $region24: #{_forward_impl.1} parent=1 // pred_region
      %s76 = ssub.s32 32, 32
      %77 = vsyncadd [#allocation8], %s76
      %s79 = sshll.u32 [#allocation9], 4
      %s80 = int_to_ptr.vmem [resolvable:$true] %s79
      %82 = dma.hbm_to_vmem [thread:$0]  %s5, 32, %s80, [#allocation8]
    $region25: #{_forward_impl.1} parent=1 // pred_fallthru
      _
    // Predicated region
    $region26: #{_forward_impl.1} parent=1 // pred_check
      _
    $region27: #{_forward_impl.1} parent=1 // pred_check_branch
      %84 = sbr.rel (0) target = $region29
    $region28: #{_forward_impl.1} parent=1 // pred_region
      %s86 = ssub.s32 4096, 4096
      %87 = vsyncadd [#allocation11], %s86
      %s88 = sshll.u32 [#allocation10], 4
      %s89 = int_to_ptr.vmem [resolvable:$true] %s88
      %94 = dma.hbm_to_vmem [thread:$0]  %s6, 4096, %s89, [#allocation11], 512, 512, 32
    $region29: #{_forward_impl.1} parent=1 // pred_fallthru
      _
    // Predicated region
    $region30: #{_forward_impl.1} parent=1 // pred_check
      _
    $region31: #{_forward_impl.1} parent=1 // pred_check_branch
      %96 = sbr.rel (0) target = $region33
    $region32: #{_forward_impl.1} parent=1 // pred_region
      _
    $region33: #{_forward_impl.1} parent=1 // pred_fallthru
      _
    // Predicated region
    $region34: #{_forward_impl.1} parent=1 // pred_check
      _
    $region35: #{_forward_impl.1} parent=1 // pred_check_branch
      %98 = sbr.rel (0) target = $region37
    $region36: #{_forward_impl.1} parent=1 // pred_region
      _
    $region37: #{_forward_impl.1} parent=1 // pred_fallthru
      _
    // Predicated region
    $region38: #{_forward_impl.1} parent=1 // pred_check
      _
    $region39: #{_forward_impl.1} parent=1 // pred_check_branch
      %100 = sbr.rel (0) target = $region41
    $region40: #{_forward_impl.1} parent=1 // pred_region
      _
    $region41: #{_forward_impl.1} parent=1 // pred_fallthru
      _
    // Predicated region
    $region42: #{_forward_impl.1} parent=1 // pred_check
      _
    $region43: #{_forward_impl.1} parent=1 // pred_check_branch
      %102 = sbr.rel (0) target = $region45
    $region44: #{_forward_impl.1} parent=1 // pred_region
      _
    $region45: #{_forward_impl.1} parent=1 // pred_fallthru
      _
    // Predicated region
    $region46: #{_forward_impl.1} parent=1 // pred_check
      _
    $region47: #{_forward_impl.1} parent=1 // pred_check_branch
      %104 = sbr.rel (0) target = $region49
    $region48: #{_forward_impl.1} parent=1 // pred_region
      %s106 = ssub.s32 4096, 4096
      %107 = vsyncadd [#allocation11], %s106
      %s108 = sshll.u32 [#allocation12], 4
      %s109 = int_to_ptr.vmem [resolvable:$true] %s108
      %114 = dma.hbm_to_vmem [thread:$0]  %s11, 4096, %s109, [#allocation11], 256, 256, 16
    $region49: #{_forward_impl.1} parent=1 // pred_fallthru
      _
    // Predicated region
    $region50: #{_forward_impl.1} parent=1 // pred_check
      _
    $region51: #{_forward_impl.1} parent=1 // pred_check_branch
      %116 = sbr.rel (0) target = $region53
    $region52: #{_forward_impl.1} parent=1 // pred_region
      _
    $region53: #{_forward_impl.1} parent=1 // pred_fallthru
      _
    // Predicated region
    $region54: #{_forward_impl.1} parent=1 // pred_check
      _
    $region55: #{_forward_impl.1} parent=1 // pred_check_branch
      %118 = sbr.rel (0) target = $region57
    $region56: #{_forward_impl.1} parent=1 // pred_region
      _
    $region57: #{_forward_impl.1} parent=1 // pred_fallthru
      _
    // Predicated region
    $region58: #{_forward_impl.1} parent=1 // pred_check
      _
    $region59: #{_forward_impl.1} parent=1 // pred_check_branch
      %120 = sbr.rel (0) target = $region61
    $region60: #{_forward_impl.1} parent=1 // pred_region
      _
    $region61: #{_forward_impl.1} parent=1 // pred_fallthru
      _
    // Predicated region
    $region62: #{_forward_impl.1} parent=1 // pred_check
      _
    $region63: #{_forward_impl.1} parent=1 // pred_check_branch
      %122 = sbr.rel (0) target = $region65
    $region64: #{_forward_impl.1} parent=1 // pred_region
      _
    $region65: #{_forward_impl.1} parent=1 // pred_fallthru
      _
    // Predicated region
    $region66: #{_forward_impl.1} parent=1 // pred_check
      _
    $region67: #{_forward_impl.1} parent=1 // pred_check_branch
      %124 = sbr.rel (0) target = $region69
    $region68: #{_forward_impl.1} parent=1 // pred_region
      %s126 = ssub.s32 7168, 7168
      %127 = vsyncadd [#allocation14], %s126
      %s128 = sshll.u32 [#allocation13], 4
      %s129 = int_to_ptr.vmem [resolvable:$true] %s128
      %134 = dma.hbm_to_vmem [thread:$0]  %s16, 7168, %s129, [#allocation14], 896, 896, 56
    $region69: #{_forward_impl.1} parent=1 // pred_fallthru
      _
    // Predicated region
    $region70: #{_forward_impl.1} parent=1 // pred_check
      _
    $region71: #{_forward_impl.1} parent=1 // pred_check_branch
      %136 = sbr.rel (0) target = $region73
    $region72: #{_forward_impl.1} parent=1 // pred_region
      _
    $region73: #{_forward_impl.1} parent=1 // pred_fallthru
      _
    // Predicated region
    $region74: #{_forward_impl.1} parent=1 // pred_check
      _
    $region75: #{_forward_impl.1} parent=1 // pred_check_branch
      %138 = sbr.rel (0) target = $region77
    $region76: #{_forward_impl.1} parent=1 // pred_region
      _
    $region77: #{_forward_impl.1} parent=1 // pred_fallthru
      _
    // Predicated region
    $region78: #{_forward_impl.1} parent=1 // pred_check
      _
    $region79: #{_forward_impl.1} parent=1 // pred_check_branch
      %140 = sbr.rel (0) target = $region81
    $region80: #{_forward_impl.1} parent=1 // pred_region
      %141 = dma.done [#allocation3], 2048
    $region81: #{_forward_impl.1} parent=1 // pred_fallthru
      _
    // Predicated region
    $region82: #{_forward_impl.1} parent=1 // pred_check
      _
    $region83: #{_forward_impl.1} parent=1 // pred_check_branch
      %143 = sbr.rel (0) target = $region85
    $region84: #{_forward_impl.1} parent=1 // pred_region
      %144 = dma.done [#allocation5], 32
    $region85: #{_forward_impl.1} parent=1 // pred_fallthru
      _
    // Predicated region
    $region86: #{_forward_impl.1} parent=1 // pred_check
      _
    $region87: #{_forward_impl.1} parent=1 // pred_check_branch
      %146 = sbr.rel (0) target = $region89
    $region88: #{_forward_impl.1} parent=1 // pred_region
      %147 = dma.done [#allocation5], 32
    $region89: #{_forward_impl.1} parent=1 // pred_fallthru
      _
    // Predicated region
    $region90: #{_forward_impl.1} parent=1 // pred_check
      _
    $region91: #{_forward_impl.1} parent=1 // pred_check_branch
      %149 = sbr.rel (0) target = $region93
    $region92: #{_forward_impl.1} parent=1 // pred_region
      %150 = dma.done [#allocation8], 32
    $region93: #{_forward_impl.1} parent=1 // pred_fallthru
      _
    // Predicated region
    $region94: #{_forward_impl.1} parent=1 // pred_check
      _
    $region95: #{_forward_impl.1} parent=1 // pred_check_branch
      %152 = sbr.rel (0) target = $region97
    $region96: #{_forward_impl.1} parent=1 // pred_region
      %153 = dma.done [#allocation8], 32
    $region97: #{_forward_impl.1} parent=1 // pred_fallthru
      _
    // Predicated region
    $region98: #{_forward_impl.1} parent=1 // pred_check
      _
    $region99: #{_forward_impl.1} parent=1 // pred_check_branch
      %155 = sbr.rel (0) target = $region101
    $region100: #{_forward_impl.1} parent=1 // pred_region
      %156 = dma.done [#allocation11], 4096
    $region101: #{_forward_impl.1} parent=1 // pred_fallthru
      _
    // Predicated region
    $region102: #{_forward_impl.1} parent=1 // pred_check
      _
    $region103: #{_forward_impl.1} parent=1 // pred_check_branch
      %158 = sbr.rel (0) target = $region105
    $region104: #{_forward_impl.1} parent=1 // pred_region
      %159 = dma.done [#allocation11], 4096
    $region105: #{_forward_impl.1} parent=1 // pred_fallthru
      _
    // Predicated region
    $region106: #{_forward_impl.1} parent=1 // pred_check
      _
    $region107: #{_forward_impl.1} parent=1 // pred_check_branch
      %161 = sbr.rel (0) target = $region109
    $region108: #{_forward_impl.1} parent=1 // pred_region
      %162 = dma.done [#allocation14], 7168
    $region109: #{_forward_impl.1} parent=1 // pred_fallthru
      _
    %v164 = vld [vmem:[%s0] sm:$0xff]
    %v165 = vld [vmem:[#allocation2] sm:$0xff]
    %v166 = vld [vmem:[#allocation2 + $0x8] sm:$0xff]
    %v167 = vld [vmem:[#allocation2 + $0x10] sm:$0xff]
    %v168 = vld [vmem:[#allocation2 + $0x18] sm:$0xff]
    %v169 = vld [vmem:[#allocation2 + $0x20] sm:$0xff]
    %v170 = vld [vmem:[#allocation2 + $0x28] sm:$0xff]
    %v171 = vld [vmem:[#allocation2 + $0x30] sm:$0xff]
    %v172 = vld [vmem:[#allocation2 + $0x38] sm:$0xff]
    %v173 = vld [vmem:[#allocation2 + $0x40] sm:$0xff]
    %v174 = vld [vmem:[#allocation2 + $0x48] sm:$0xff]
    %v175 = vld [vmem:[#allocation2 + $0x50] sm:$0xff]
    %v176 = vld [vmem:[#allocation2 + $0x58] sm:$0xff]
    %v177 = vld [vmem:[#allocation2 + $0x60] sm:$0xff]
    %v178 = vld [vmem:[#allocation2 + $0x68] sm:$0xff]
    %v179 = vld [vmem:[#allocation2 + $0x70] sm:$0xff]
    %v180 = vld [vmem:[#allocation2 + $0x78] sm:$0xff]
    %v181 = vunpack.c.l.s8.bf16 %v165
    %v182 = vunpack.c.l.s8.bf16 %v166
    %v183 = vunpack.c.h.s8.bf16 %v165
    %v184 = vunpack.c.h.s8.bf16 %v166
    %v185 = vunpack.c.l.s8.bf16 %v167
    %v186 = vunpack.c.l.s8.bf16 %v168
    %v187 = vunpack.c.h.s8.bf16 %v167
    %v188 = vunpack.c.h.s8.bf16 %v168
    %v189 = vunpack.c.l.s8.bf16 %v169
    %v190 = vunpack.c.l.s8.bf16 %v170
    %v191 = vunpack.c.h.s8.bf16 %v169
    %v192 = vunpack.c.h.s8.bf16 %v170
    %v193 = vunpack.c.l.s8.bf16 %v171
    %v194 = vunpack.c.l.s8.bf16 %v172
    %v195 = vunpack.c.h.s8.bf16 %v171
    %v196 = vunpack.c.h.s8.bf16 %v172
    %v197 = vunpack.c.l.s8.bf16 %v173
    %v198 = vunpack.c.l.s8.bf16 %v174
    %v199 = vunpack.c.h.s8.bf16 %v173
    %v200 = vunpack.c.h.s8.bf16 %v174
    %v201 = vunpack.c.l.s8.bf16 %v175
    %v202 = vunpack.c.l.s8.bf16 %v176
    %v203 = vunpack.c.h.s8.bf16 %v175
    %v204 = vunpack.c.h.s8.bf16 %v176
    %v205 = vunpack.c.l.s8.bf16 %v177
    %v206 = vunpack.c.l.s8.bf16 %v178
    %v207 = vunpack.c.h.s8.bf16 %v177
    %v208 = vunpack.c.h.s8.bf16 %v178
    %v209 = vunpack.c.l.s8.bf16 %v179
    %v210 = vunpack.c.l.s8.bf16 %v180
    %v211 = vunpack.c.h.s8.bf16 %v179
    %v212 = vunpack.c.h.s8.bf16 %v180
    %v214 = vunpack.c.l.b16 %v164
    %v215 = vunpack.c.h.b16 %v164
    %v216 = vpack.c.b16 %v214, %v214
    %v217 = vpack.c.b16 %v215, %v215
    %220 = vmatprep.subr.bf16.mxu0 %v196
    %221 = vmatpush1.bf16.msra.mxu0 %v195
    %222 = vmatprep.subr.bf16.mxu0 %v194
    %223 = vmatpush1.bf16.msra.mxu0 %v193
    %224 = vmatprep.subr.bf16.mxu0 %v192
    %225 = vmatpush1.bf16.msra.mxu0 %v191
    %226 = vmatprep.subr.bf16.mxu0 %v190
    %227 = vmatpush1.bf16.msra.mxu0 %v189
    %228 = vmatprep.subr.bf16.mxu0 %v188
    %229 = vmatpush1.bf16.msra.mxu0 %v187
    %230 = vmatprep.subr.bf16.mxu0 %v186
    %231 = vmatpush1.bf16.msra.mxu0 %v185
    %232 = vmatprep.subr.bf16.mxu0 %v184
    %233 = vmatpush1.bf16.msra.mxu0 %v183
    %234 = vmatprep.subr.bf16.mxu0 %v182
    %235 = vmatpush1.bf16.msra.mxu0 %v181
    %236 = vmatprep.subr.bf16.mxu0 %v212
    %237 = vmatpush2.bf16.msra.mxu0 %v211
    %238 = vmatprep.subr.bf16.mxu0 %v210
    %239 = vmatpush2.bf16.msra.mxu0 %v209
    %240 = vmatprep.subr.bf16.mxu0 %v208
    %241 = vmatpush2.bf16.msra.mxu0 %v207
    %242 = vmatprep.subr.bf16.mxu0 %v206
    %243 = vmatpush2.bf16.msra.mxu0 %v205
    %244 = vmatprep.subr.bf16.mxu0 %v204
    %245 = vmatpush2.bf16.msra.mxu0 %v203
    %246 = vmatprep.subr.bf16.mxu0 %v202
    %247 = vmatpush2.bf16.msra.mxu0 %v201
    %248 = vmatprep.subr.bf16.mxu0 %v200
    %249 = vmatpush2.bf16.msra.mxu0 %v199
    %250 = vmatprep.subr.bf16.mxu0 %v198
    %251 = vmatpush2.bf16.msra.mxu0 %v197
    %252 = vmatprep.mubr.bf16.mxu0 %v217
    %253 = vmatmul.mubr.bf16.gmra.mxu0 %v216
    %v254 = vpop.f32.mrf.mxu0
    %v255 = vadd.f32 0.0, %v254
    %v256 = vpop.f32.mrf.mxu0
    %v257 = vadd.f32 0.0, %v256
    %v258 = vpop.f32.mrf.mxu0
    %v259 = vpop.f32.mrf.mxu0
    %260 = vdwg.mxu0
    %v261 = vld [vmem:[#allocation4] sm:$0x3]
    %v263 = vlaneseq
    %v264 = vshrl.u32 %v263, 7
    %v265 = vsub.s32 0, %v264
    %v266 = vrot.slane %v261, %v265
    %v267 = vlaneseq
    %v268 = vshrl.u32 %v267, 7
    %v269 = vsub.s32 1, %v268
    %v270 = vrot.slane %v261, %v269
    %v273 = vmul.f32 %v255, %v266
    %v274 = vmul.f32 %v257, %v270
    %v275 = vld [vmem:[#allocation6] sm:$0x3]
    %v277 = vlaneseq
    %v278 = vshrl.u32 %v277, 7
    %v279 = vsub.s32 0, %v278
    %v280 = vrot.slane %v275, %v279
    %v281 = vlaneseq
    %v282 = vshrl.u32 %v281, 7
    %v283 = vsub.s32 1, %v282
    %v284 = vrot.slane %v275, %v283
    %v287 = vadd.f32 %v273, %v280
    %v288 = vadd.f32 %v274, %v284
    %v289 = vmax.f32 %v287, 0.0
    %v290 = vmax.f32 %v288, 0.0
    %v291 = vld [vmem:[#allocation7] sm:$0x3]
    %v293 = vlaneseq
    %v294 = vshrl.u32 %v293, 7
    %v295 = vsub.s32 0, %v294
    %v296 = vrot.slane %v291, %v295
    %v297 = vlaneseq
    %v298 = vshrl.u32 %v297, 7
    %v299 = vsub.s32 1, %v298
    %v300 = vrot.slane %v291, %v299
    %v303 = vmul.f32 %v289, %v296
    %v304 = vmul.f32 %v290, %v300
    %v305 = vld [vmem:[#allocation9] sm:$0x3]
    %v307 = vlaneseq
    %v308 = vshrl.u32 %v307, 7
    %v309 = vsub.s32 0, %v308
    %v310 = vrot.slane %v305, %v309
    %v311 = vlaneseq
    %v312 = vshrl.u32 %v311, 7
    %v313 = vsub.s32 1, %v312
    %v314 = vrot.slane %v305, %v313
    %v317 = vadd.f32 %v303, %v310
    %v318 = vadd.f32 %v304, %v314
    %v319 = vpack.c.bf16 %v317, %v317
    %v320 = vpack.c.bf16 %v318, %v318
    %v321 = vld [vmem:[#allocation10] sm:$0xff]
    %v322 = vld [vmem:[#allocation10 + $0x8] sm:$0xff]
    %v323 = vld [vmem:[#allocation10 + $0x10] sm:$0xff]
    %v324 = vld [vmem:[#allocation10 + $0x18] sm:$0xff]
    %v325 = vld [vmem:[#allocation10 + $0x20] sm:$0xff]
    %v326 = vld [vmem:[#allocation10 + $0x28] sm:$0xff]
    %v327 = vld [vmem:[#allocation10 + $0x30] sm:$0xff]
    %v328 = vld [vmem:[#allocation10 + $0x38] sm:$0xff]
    %v329 = vld [vmem:[#allocation10 + $0x40] sm:$0xff]
    %v330 = vld [vmem:[#allocation10 + $0x48] sm:$0xff]
    %v331 = vld [vmem:[#allocation10 + $0x50] sm:$0xff]
    %v332 = vld [vmem:[#allocation10 + $0x58] sm:$0xff]
    %v333 = vld [vmem:[#allocation10 + $0x60] sm:$0xff]
    %v334 = vld [vmem:[#allocation10 + $0x68] sm:$0xff]
    %v335 = vld [vmem:[#allocation10 + $0x70] sm:$0xff]
    %v336 = vld [vmem:[#allocation10 + $0x78] sm:$0xff]
    %v337 = vld [vmem:[#allocation10 + $0x80] sm:$0xff]
    %v338 = vld [vmem:[#allocation10 + $0x88] sm:$0xff]
    %v339 = vld [vmem:[#allocation10 + $0x90] sm:$0xff]
    %v340 = vld [vmem:[#allocation10 + $0x98] sm:$0xff]
    %v341 = vld [vmem:[#allocation10 + $0xa0] sm:$0xff]
    %v342 = vld [vmem:[#allocation10 + $0xa8] sm:$0xff]
    %v343 = vld [vmem:[#allocation10 + $0xb0] sm:$0xff]
    %v344 = vld [vmem:[#allocation10 + $0xb8] sm:$0xff]
    %v345 = vld [vmem:[#allocation10 + $0xc0] sm:$0xff]
    %v346 = vld [vmem:[#allocation10 + $0xc8] sm:$0xff]
    %v347 = vld [vmem:[#allocation10 + $0xd0] sm:$0xff]
    %v348 = vld [vmem:[#allocation10 + $0xd8] sm:$0xff]
    %v349 = vld [vmem:[#allocation10 + $0xe0] sm:$0xff]
    %v350 = vld [vmem:[#allocation10 + $0xe8] sm:$0xff]
    %v351 = vld [vmem:[#allocation10 + $0xf0] sm:$0xff]
    %v352 = vld [vmem:[#allocation10 + $0xf8] sm:$0xff]
    %v353 = vunpack.c.l.s8.bf16 %v321
    %v354 = vunpack.c.l.s8.bf16 %v322
    %v355 = vunpack.c.l.s8.bf16 %v323
    %v356 = vunpack.c.l.s8.bf16 %v324
    %v357 = vunpack.c.h.s8.bf16 %v321
    %v358 = vunpack.c.h.s8.bf16 %v322
    %v359 = vunpack.c.h.s8.bf16 %v323
    %v360 = vunpack.c.h.s8.bf16 %v324
    %v361 = vunpack.c.l.s8.bf16 %v325
    %v362 = vunpack.c.l.s8.bf16 %v326
    %v363 = vunpack.c.l.s8.bf16 %v327
    %v364 = vunpack.c.l.s8.bf16 %v328
    %v365 = vunpack.c.h.s8.bf16 %v325
    %v366 = vunpack.c.h.s8.bf16 %v326
    %v367 = vunpack.c.h.s8.bf16 %v327
    %v368 = vunpack.c.h.s8.bf16 %v328
    %v369 = vunpack.c.l.s8.bf16 %v329
    %v370 = vunpack.c.l.s8.bf16 %v330
    %v371 = vunpack.c.l.s8.bf16 %v331
    %v372 = vunpack.c.l.s8.bf16 %v332
    %v373 = vunpack.c.h.s8.bf16 %v329
    %v374 = vunpack.c.h.s8.bf16 %v330
    %v375 = vunpack.c.h.s8.bf16 %v331
    %v376 = vunpack.c.h.s8.bf16 %v332
    %v377 = vunpack.c.l.s8.bf16 %v333
    %v378 = vunpack.c.l.s8.bf16 %v334
    %v379 = vunpack.c.l.s8.bf16 %v335
    %v380 = vunpack.c.l.s8.bf16 %v336
    %v381 = vunpack.c.h.s8.bf16 %v333
    %v382 = vunpack.c.h.s8.bf16 %v334
    %v383 = vunpack.c.h.s8.bf16 %v335
    %v384 = vunpack.c.h.s8.bf16 %v336
    %v385 = vunpack.c.l.s8.bf16 %v337
    %v386 = vunpack.c.l.s8.bf16 %v338
    %v387 = vunpack.c.l.s8.bf16 %v339
    %v388 = vunpack.c.l.s8.bf16 %v340
    %v389 = vunpack.c.h.s8.bf16 %v337
    %v390 = vunpack.c.h.s8.bf16 %v338
    %v391 = vunpack.c.h.s8.bf16 %v339
    %v392 = vunpack.c.h.s8.bf16 %v340
    %v393 = vunpack.c.l.s8.bf16 %v341
    %v394 = vunpack.c.l.s8.bf16 %v342
    %v395 = vunpack.c.l.s8.bf16 %v343
    %v396 = vunpack.c.l.s8.bf16 %v344
    %v397 = vunpack.c.h.s8.bf16 %v341
    %v398 = vunpack.c.h.s8.bf16 %v342
    %v399 = vunpack.c.h.s8.bf16 %v343
    %v400 = vunpack.c.h.s8.bf16 %v344
    %v401 = vunpack.c.l.s8.bf16 %v345
    %v402 = vunpack.c.l.s8.bf16 %v346
    %v403 = vunpack.c.l.s8.bf16 %v347
    %v404 = vunpack.c.l.s8.bf16 %v348
    %v405 = vunpack.c.h.s8.bf16 %v345
    %v406 = vunpack.c.h.s8.bf16 %v346
    %v407 = vunpack.c.h.s8.bf16 %v347
    %v408 = vunpack.c.h.s8.bf16 %v348
    %v409 = vunpack.c.l.s8.bf16 %v349
    %v410 = vunpack.c.l.s8.bf16 %v350
    %v411 = vunpack.c.l.s8.bf16 %v351
    %v412 = vunpack.c.l.s8.bf16 %v352
    %v413 = vunpack.c.h.s8.bf16 %v349
    %v414 = vunpack.c.h.s8.bf16 %v350
    %v415 = vunpack.c.h.s8.bf16 %v351
    %v416 = vunpack.c.h.s8.bf16 %v352
    %417 = vmatprep.subr.bf16.mxu0 %v382
    %418 = vmatpush1.bf16.msra.mxu0 %v381
    %419 = vmatprep.subr.bf16.mxu0 %v378
    %420 = vmatpush1.bf16.msra.mxu0 %v377
    %421 = vmatprep.subr.bf16.mxu0 %v374
    %422 = vmatpush1.bf16.msra.mxu0 %v373
    %423 = vmatprep.subr.bf16.mxu0 %v370
    %424 = vmatpush1.bf16.msra.mxu0 %v369
    %425 = vmatprep.subr.bf16.mxu0 %v366
    %426 = vmatpush1.bf16.msra.mxu0 %v365
    %427 = vmatprep.subr.bf16.mxu0 %v362
    %428 = vmatpush1.bf16.msra.mxu0 %v361
    %429 = vmatprep.subr.bf16.mxu0 %v358
    %430 = vmatpush1.bf16.msra.mxu0 %v357
    %431 = vmatprep.subr.bf16.mxu0 %v354
    %432 = vmatpush1.bf16.msra.mxu0 %v353
    %433 = vmatprep.subr.bf16.mxu0 %v414
    %434 = vmatpush2.bf16.msra.mxu0 %v413
    %435 = vmatprep.subr.bf16.mxu0 %v410
    %436 = vmatpush2.bf16.msra.mxu0 %v409
    %437 = vmatprep.subr.bf16.mxu0 %v406
    %438 = vmatpush2.bf16.msra.mxu0 %v405
    %439 = vmatprep.subr.bf16.mxu0 %v402
    %440 = vmatpush2.bf16.msra.mxu0 %v401
    %441 = vmatprep.subr.bf16.mxu0 %v398
    %442 = vmatpush2.bf16.msra.mxu0 %v397
    %443 = vmatprep.subr.bf16.mxu0 %v394
    %444 = vmatpush2.bf16.msra.mxu0 %v393
    %445 = vmatprep.subr.bf16.mxu0 %v390
    %446 = vmatpush2.bf16.msra.mxu0 %v389
    %447 = vmatprep.subr.bf16.mxu0 %v386
    %448 = vmatpush2.bf16.msra.mxu0 %v385
    %449 = vmatprep.mubr.bf16.mxu0 %v320
    %450 = vmatmul.mubr.bf16.gmra.mxu0 %v319
    %v451 = vpop.f32.mrf.mxu0
    %v452 = vadd.f32 0.0, %v451
    %v453 = vpop.f32.mrf.mxu0
    %v454 = vadd.f32 0.0, %v453
    %v455 = vpop.f32.mrf.mxu0
    %v456 = vpop.f32.mrf.mxu0
    %457 = vdwg.mxu0
    %458 = vmatprep.subr.bf16.mxu0 %v384
    %459 = vmatpush1.bf16.msra.mxu0 %v383
    %460 = vmatprep.subr.bf16.mxu0 %v380
    %461 = vmatpush1.bf16.msra.mxu0 %v379
    %462 = vmatprep.subr.bf16.mxu0 %v376
    %463 = vmatpush1.bf16.msra.mxu0 %v375
    %464 = vmatprep.subr.bf16.mxu0 %v372
    %465 = vmatpush1.bf16.msra.mxu0 %v371
    %466 = vmatprep.subr.bf16.mxu0 %v368
    %467 = vmatpush1.bf16.msra.mxu0 %v367
    %468 = vmatprep.subr.bf16.mxu0 %v364
    %469 = vmatpush1.bf16.msra.mxu0 %v363
    %470 = vmatprep.subr.bf16.mxu0 %v360
    %471 = vmatpush1.bf16.msra.mxu0 %v359
    %472 = vmatprep.subr.bf16.mxu0 %v356
    %473 = vmatpush1.bf16.msra.mxu0 %v355
    %474 = vmatprep.subr.bf16.mxu0 %v416
    %475 = vmatpush2.bf16.msra.mxu0 %v415
    %476 = vmatprep.subr.bf16.mxu0 %v412
    %477 = vmatpush2.bf16.msra.mxu0 %v411
    %478 = vmatprep.subr.bf16.mxu0 %v408
    %479 = vmatpush2.bf16.msra.mxu0 %v407
    %480 = vmatprep.subr.bf16.mxu0 %v404
    %481 = vmatpush2.bf16.msra.mxu0 %v403
    %482 = vmatprep.subr.bf16.mxu0 %v400
    %483 = vmatpush2.bf16.msra.mxu0 %v399
    %484 = vmatprep.subr.bf16.mxu0 %v396
    %485 = vmatpush2.bf16.msra.mxu0 %v395
    %486 = vmatprep.subr.bf16.mxu0 %v392
    %487 = vmatpush2.bf16.msra.mxu0 %v391
    %488 = vmatprep.subr.bf16.mxu0 %v388
    %489 = vmatpush2.bf16.msra.mxu0 %v387
    %490 = vmatprep.mubr.bf16.mxu0 %v320
    %491 = vmatmul.mubr.bf16.gmra.mxu0 %v319
    %v492 = vpop.f32.mrf.mxu0
    %v493 = vadd.f32 0.0, %v492
    %v494 = vpop.f32.mrf.mxu0
    %v495 = vadd.f32 0.0, %v494
    %v496 = vpop.f32.mrf.mxu0
    %v497 = vpop.f32.mrf.mxu0
    %498 = vdwg.mxu0
    %v499 = vld [vmem:[%s7] sm:$0xf]
    %v501 = vlaneseq
    %v502 = vshrl.u32 %v501, 7
    %v503 = vsub.s32 0, %v502
    %v504 = vrot.slane %v499, %v503
    %v505 = vlaneseq
    %v506 = vshrl.u32 %v505, 7
    %v507 = vsub.s32 1, %v506
    %v508 = vrot.slane %v499, %v507
    %v509 = vlaneseq
    %v510 = vshrl.u32 %v509, 7
    %v511 = vsub.s32 2, %v510
    %v512 = vrot.slane %v499, %v511
    %v513 = vlaneseq
    %v514 = vshrl.u32 %v513, 7
    %v515 = vsub.s32 3, %v514
    %v516 = vrot.slane %v499, %v515
    %v521 = vmul.f32 %v452, %v504
    %v522 = vmul.f32 %v454, %v508
    %v523 = vmul.f32 %v493, %v512
    %v524 = vmul.f32 %v495, %v516
    %v525 = vld [vmem:[%s8] sm:$0xf]
    %v527 = vlaneseq
    %v528 = vshrl.u32 %v527, 7
    %v529 = vsub.s32 0, %v528
    %v530 = vrot.slane %v525, %v529
    %v531 = vlaneseq
    %v532 = vshrl.u32 %v531, 7
    %v533 = vsub.s32 1, %v532
    %v534 = vrot.slane %v525, %v533
    %v535 = vlaneseq
    %v536 = vshrl.u32 %v535, 7
    %v537 = vsub.s32 2, %v536
    %v538 = vrot.slane %v525, %v537
    %v539 = vlaneseq
    %v540 = vshrl.u32 %v539, 7
    %v541 = vsub.s32 3, %v540
    %v542 = vrot.slane %v525, %v541
    %v547 = vadd.f32 %v521, %v530
    %v548 = vadd.f32 %v522, %v534
    %v549 = vadd.f32 %v523, %v538
    %v550 = vadd.f32 %v524, %v542
    %v551 = vmax.f32 %v547, 0.0
    %v552 = vmax.f32 %v548, 0.0
    %v553 = vmax.f32 %v549, 0.0
    %v554 = vmax.f32 %v550, 0.0
    %v555 = vld [vmem:[%s9] sm:$0xf]
    %v557 = vlaneseq
    %v558 = vshrl.u32 %v557, 7
    %v559 = vsub.s32 0, %v558
    %v560 = vrot.slane %v555, %v559
    %v561 = vlaneseq
    %v562 = vshrl.u32 %v561, 7
    %v563 = vsub.s32 1, %v562
    %v564 = vrot.slane %v555, %v563
    %v565 = vlaneseq
    %v566 = vshrl.u32 %v565, 7
    %v567 = vsub.s32 2, %v566
    %v568 = vrot.slane %v555, %v567
    %v569 = vlaneseq
    %v570 = vshrl.u32 %v569, 7
    %v571 = vsub.s32 3, %v570
    %v572 = vrot.slane %v555, %v571
    %v577 = vmul.f32 %v551, %v560
    %v578 = vmul.f32 %v552, %v564
    %v579 = vmul.f32 %v553, %v568
    %v580 = vmul.f32 %v554, %v572
    %v581 = vld [vmem:[%s10] sm:$0xf]
    %v583 = vlaneseq
    %v584 = vshrl.u32 %v583, 7
    %v585 = vsub.s32 0, %v584
    %v586 = vrot.slane %v581, %v585
    %v587 = vlaneseq
    %v588 = vshrl.u32 %v587, 7
    %v589 = vsub.s32 1, %v588
    %v590 = vrot.slane %v581, %v589
    %v591 = vlaneseq
    %v592 = vshrl.u32 %v591, 7
    %v593 = vsub.s32 2, %v592
    %v594 = vrot.slane %v581, %v593
    %v595 = vlaneseq
    %v596 = vshrl.u32 %v595, 7
    %v597 = vsub.s32 3, %v596
    %v598 = vrot.slane %v581, %v597
    %v603 = vadd.f32 %v577, %v586
    %v604 = vadd.f32 %v578, %v590
    %v605 = vadd.f32 %v579, %v594
    %v606 = vadd.f32 %v580, %v598
    %v607 = vpack.c.bf16 %v603, %v603
    %v608 = vpack.c.bf16 %v604, %v604
    %v609 = vpack.c.bf16 %v605, %v605
    %v610 = vpack.c.bf16 %v606, %v606
    %v611 = vld [vmem:[#allocation12] sm:$0xff]
    %v612 = vld [vmem:[#allocation12 + $0x8] sm:$0xff]
    %v613 = vld [vmem:[#allocation12 + $0x10] sm:$0xff]
    %v614 = vld [vmem:[#allocation12 + $0x18] sm:$0xff]
    %v615 = vld [vmem:[#allocation12 + $0x20] sm:$0xff]
    %v616 = vld [vmem:[#allocation12 + $0x28] sm:$0xff]
    %v617 = vld [vmem:[#allocation12 + $0x30] sm:$0xff]
    %v618 = vld [vmem:[#allocation12 + $0x38] sm:$0xff]
    %v619 = vld [vmem:[#allocation12 + $0x40] sm:$0xff]
    %v620 = vld [vmem:[#allocation12 + $0x48] sm:$0xff]
    %v621 = vld [vmem:[#allocation12 + $0x50] sm:$0xff]
    %v622 = vld [vmem:[#allocation12 + $0x58] sm:$0xff]
    %v623 = vld [vmem:[#allocation12 + $0x60] sm:$0xff]
    %v624 = vld [vmem:[#allocation12 + $0x68] sm:$0xff]
    %v625 = vld [vmem:[#allocation12 + $0x70] sm:$0xff]
    %v626 = vld [vmem:[#allocation12 + $0x78] sm:$0xff]
    %v627 = vld [vmem:[#allocation12 + $0x80] sm:$0xff]
    %v628 = vld [vmem:[#allocation12 + $0x88] sm:$0xff]
    %v629 = vld [vmem:[#allocation12 + $0x90] sm:$0xff]
    %v630 = vld [vmem:[#allocation12 + $0x98] sm:$0xff]
    %v631 = vld [vmem:[#allocation12 + $0xa0] sm:$0xff]
    %v632 = vld [vmem:[#allocation12 + $0xa8] sm:$0xff]
    %v633 = vld [vmem:[#allocation12 + $0xb0] sm:$0xff]
    %v634 = vld [vmem:[#allocation12 + $0xb8] sm:$0xff]
    %v635 = vld [vmem:[#allocation12 + $0xc0] sm:$0xff]
    %v636 = vld [vmem:[#allocation12 + $0xc8] sm:$0xff]
    %v637 = vld [vmem:[#allocation12 + $0xd0] sm:$0xff]
    %v638 = vld [vmem:[#allocation12 + $0xd8] sm:$0xff]
    %v639 = vld [vmem:[#allocation12 + $0xe0] sm:$0xff]
    %v640 = vld [vmem:[#allocation12 + $0xe8] sm:$0xff]
    %v641 = vld [vmem:[#allocation12 + $0xf0] sm:$0xff]
    %v642 = vld [vmem:[#allocation12 + $0xf8] sm:$0xff]
    %v643 = vunpack.c.l.s8.bf16 %v611
    %v644 = vunpack.c.l.s8.bf16 %v612
    %v645 = vunpack.c.h.s8.bf16 %v611
    %v646 = vunpack.c.h.s8.bf16 %v612
    %v647 = vunpack.c.l.s8.bf16 %v613
    %v648 = vunpack.c.l.s8.bf16 %v614
    %v649 = vunpack.c.h.s8.bf16 %v613
    %v650 = vunpack.c.h.s8.bf16 %v614
    %v651 = vunpack.c.l.s8.bf16 %v615
    %v652 = vunpack.c.l.s8.bf16 %v616
    %v653 = vunpack.c.h.s8.bf16 %v615
    %v654 = vunpack.c.h.s8.bf16 %v616
    %v655 = vunpack.c.l.s8.bf16 %v617
    %v656 = vunpack.c.l.s8.bf16 %v618
    %v657 = vunpack.c.h.s8.bf16 %v617
    %v658 = vunpack.c.h.s8.bf16 %v618
    %v659 = vunpack.c.l.s8.bf16 %v619
    %v660 = vunpack.c.l.s8.bf16 %v620
    %v661 = vunpack.c.h.s8.bf16 %v619
    %v662 = vunpack.c.h.s8.bf16 %v620
    %v663 = vunpack.c.l.s8.bf16 %v621
    %v664 = vunpack.c.l.s8.bf16 %v622
    %v665 = vunpack.c.h.s8.bf16 %v621
    %v666 = vunpack.c.h.s8.bf16 %v622
    %v667 = vunpack.c.l.s8.bf16 %v623
    %v668 = vunpack.c.l.s8.bf16 %v624
    %v669 = vunpack.c.h.s8.bf16 %v623
    %v670 = vunpack.c.h.s8.bf16 %v624
    %v671 = vunpack.c.l.s8.bf16 %v625
    %v672 = vunpack.c.l.s8.bf16 %v626
    %v673 = vunpack.c.h.s8.bf16 %v625
    %v674 = vunpack.c.h.s8.bf16 %v626
    %v675 = vunpack.c.l.s8.bf16 %v627
    %v676 = vunpack.c.l.s8.bf16 %v628
    %v677 = vunpack.c.h.s8.bf16 %v627
    %v678 = vunpack.c.h.s8.bf16 %v628
    %v679 = vunpack.c.l.s8.bf16 %v629
    %v680 = vunpack.c.l.s8.bf16 %v630
    %v681 = vunpack.c.h.s8.bf16 %v629
    %v682 = vunpack.c.h.s8.bf16 %v630
    %v683 = vunpack.c.l.s8.bf16 %v631
    %v684 = vunpack.c.l.s8.bf16 %v632
    %v685 = vunpack.c.h.s8.bf16 %v631
    %v686 = vunpack.c.h.s8.bf16 %v632
    %v687 = vunpack.c.l.s8.bf16 %v633
    %v688 = vunpack.c.l.s8.bf16 %v634
    %v689 = vunpack.c.h.s8.bf16 %v633
    %v690 = vunpack.c.h.s8.bf16 %v634
    %v691 = vunpack.c.l.s8.bf16 %v635
    %v692 = vunpack.c.l.s8.bf16 %v636
    %v693 = vunpack.c.h.s8.bf16 %v635
    %v694 = vunpack.c.h.s8.bf16 %v636
    %v695 = vunpack.c.l.s8.bf16 %v637
    %v696 = vunpack.c.l.s8.bf16 %v638
    %v697 = vunpack.c.h.s8.bf16 %v637
    %v698 = vunpack.c.h.s8.bf16 %v638
    %v699 = vunpack.c.l.s8.bf16 %v639
    %v700 = vunpack.c.l.s8.bf16 %v640
    %v701 = vunpack.c.h.s8.bf16 %v639
    %v702 = vunpack.c.h.s8.bf16 %v640
    %v703 = vunpack.c.l.s8.bf16 %v641
    %v704 = vunpack.c.l.s8.bf16 %v642
    %v705 = vunpack.c.h.s8.bf16 %v641
    %v706 = vunpack.c.h.s8.bf16 %v642
    %707 = vmatprep.subr.bf16.mxu0 %v658
    %708 = vmatpush1.bf16.msra.mxu0 %v657
    %709 = vmatprep.subr.bf16.mxu0 %v656
    %710 = vmatpush1.bf16.msra.mxu0 %v655
    %711 = vmatprep.subr.bf16.mxu0 %v654
    %712 = vmatpush1.bf16.msra.mxu0 %v653
    %713 = vmatprep.subr.bf16.mxu0 %v652
    %714 = vmatpush1.bf16.msra.mxu0 %v651
    %715 = vmatprep.subr.bf16.mxu0 %v650
    %716 = vmatpush1.bf16.msra.mxu0 %v649
    %717 = vmatprep.subr.bf16.mxu0 %v648
    %718 = vmatpush1.bf16.msra.mxu0 %v647
    %719 = vmatprep.subr.bf16.mxu0 %v646
    %720 = vmatpush1.bf16.msra.mxu0 %v645
    %721 = vmatprep.subr.bf16.mxu0 %v644
    %722 = vmatpush1.bf16.msra.mxu0 %v643
    %723 = vmatprep.subr.bf16.mxu0 %v674
    %724 = vmatpush2.bf16.msra.mxu0 %v673
    %725 = vmatprep.subr.bf16.mxu0 %v672
    %726 = vmatpush2.bf16.msra.mxu0 %v671
    %727 = vmatprep.subr.bf16.mxu0 %v670
    %728 = vmatpush2.bf16.msra.mxu0 %v669
    %729 = vmatprep.subr.bf16.mxu0 %v668
    %730 = vmatpush2.bf16.msra.mxu0 %v667
    %731 = vmatprep.subr.bf16.mxu0 %v666
    %732 = vmatpush2.bf16.msra.mxu0 %v665
    %733 = vmatprep.subr.bf16.mxu0 %v664
    %734 = vmatpush2.bf16.msra.mxu0 %v663
    %735 = vmatprep.subr.bf16.mxu0 %v662
    %736 = vmatpush2.bf16.msra.mxu0 %v661
    %737 = vmatprep.subr.bf16.mxu0 %v660
    %738 = vmatpush2.bf16.msra.mxu0 %v659
    %739 = vmatprep.mubr.bf16.mxu0 %v608
    %740 = vmatmul.mubr.bf16.gmra.mxu0 %v607
    %v741 = vpop.f32.mrf.mxu0
    %v742 = vadd.f32 0.0, %v741
    %v743 = vpop.f32.mrf.mxu0
    %v744 = vadd.f32 0.0, %v743
    %v745 = vpop.f32.mrf.mxu0
    %v746 = vpop.f32.mrf.mxu0
    %747 = vdwg.mxu0
    %748 = vmatprep.subr.bf16.mxu0 %v690
    %749 = vmatpush1.bf16.msra.mxu0 %v689
    %750 = vmatprep.subr.bf16.mxu0 %v688
    %751 = vmatpush1.bf16.msra.mxu0 %v687
    %752 = vmatprep.subr.bf16.mxu0 %v686
    %753 = vmatpush1.bf16.msra.mxu0 %v685
    %754 = vmatprep.subr.bf16.mxu0 %v684
    %755 = vmatpush1.bf16.msra.mxu0 %v683
    %756 = vmatprep.subr.bf16.mxu0 %v682
    %757 = vmatpush1.bf16.msra.mxu0 %v681
    %758 = vmatprep.subr.bf16.mxu0 %v680
    %759 = vmatpush1.bf16.msra.mxu0 %v679
    %760 = vmatprep.subr.bf16.mxu0 %v678
    %761 = vmatpush1.bf16.msra.mxu0 %v677
    %762 = vmatprep.subr.bf16.mxu0 %v676
    %763 = vmatpush1.bf16.msra.mxu0 %v675
    %764 = vmatprep.subr.bf16.mxu0 %v706
    %765 = vmatpush2.bf16.msra.mxu0 %v705
    %766 = vmatprep.subr.bf16.mxu0 %v704
    %767 = vmatpush2.bf16.msra.mxu0 %v703
    %768 = vmatprep.subr.bf16.mxu0 %v702
    %769 = vmatpush2.bf16.msra.mxu0 %v701
    %770 = vmatprep.subr.bf16.mxu0 %v700
    %771 = vmatpush2.bf16.msra.mxu0 %v699
    %772 = vmatprep.subr.bf16.mxu0 %v698
    %773 = vmatpush2.bf16.msra.mxu0 %v697
    %774 = vmatprep.subr.bf16.mxu0 %v696
    %775 = vmatpush2.bf16.msra.mxu0 %v695
    %776 = vmatprep.subr.bf16.mxu0 %v694
    %777 = vmatpush2.bf16.msra.mxu0 %v693
    %778 = vmatprep.subr.bf16.mxu0 %v692
    %779 = vmatpush2.bf16.msra.mxu0 %v691
    %780 = vmatprep.mubr.bf16.mxu0 %v610
    %781 = vmatmul.mubr.bf16.gmra.mxu0 %v609
    %v782 = vpop.f32.mrf.mxu0
    %v783 = vadd.f32 %v742, %v782
    %v784 = vpop.f32.mrf.mxu0
    %v785 = vadd.f32 %v744, %v784
    %v786 = vpop.f32.mrf.mxu0
    %v787 = vpop.f32.mrf.mxu0
    %788 = vdwg.mxu0
    %v789 = vld [vmem:[%s12] sm:$0x3]
    %v791 = vlaneseq
    %v792 = vshrl.u32 %v791, 7
    %v793 = vsub.s32 0, %v792
    %v794 = vrot.slane %v789, %v793
    %v795 = vlaneseq
    %v796 = vshrl.u32 %v795, 7
    %v797 = vsub.s32 1, %v796
    %v798 = vrot.slane %v789, %v797
    %v801 = vmul.f32 %v783, %v794
    %v802 = vmul.f32 %v785, %v798
    %v803 = vld [vmem:[%s13] sm:$0x3]
    %v805 = vlaneseq
    %v806 = vshrl.u32 %v805, 7
    %v807 = vsub.s32 0, %v806
    %v808 = vrot.slane %v803, %v807
    %v809 = vlaneseq
    %v810 = vshrl.u32 %v809, 7
    %v811 = vsub.s32 1, %v810
    %v812 = vrot.slane %v803, %v811
    %v815 = vadd.f32 %v801, %v808
    %v816 = vadd.f32 %v802, %v812
    %v817 = vmax.f32 %v815, 0.0
    %v818 = vmax.f32 %v816, 0.0
    %v819 = vld [vmem:[%s14] sm:$0x3]
    %v821 = vlaneseq
    %v822 = vshrl.u32 %v821, 7
    %v823 = vsub.s32 0, %v822
    %v824 = vrot.slane %v819, %v823
    %v825 = vlaneseq
    %v826 = vshrl.u32 %v825, 7
    %v827 = vsub.s32 1, %v826
    %v828 = vrot.slane %v819, %v827
    %v831 = vmul.f32 %v817, %v824
    %v832 = vmul.f32 %v818, %v828
    %v833 = vld [vmem:[%s15] sm:$0x3]
    %v835 = vlaneseq
    %v836 = vshrl.u32 %v835, 7
    %v837 = vsub.s32 0, %v836
    %v838 = vrot.slane %v833, %v837
    %v839 = vlaneseq
    %v840 = vshrl.u32 %v839, 7
    %v841 = vsub.s32 1, %v840
    %v842 = vrot.slane %v833, %v841
    %v845 = vadd.f32 %v831, %v838
    %v846 = vadd.f32 %v832, %v842
    %v847 = vpack.c.bf16 %v845, %v845
    %v848 = vpack.c.bf16 %v846, %v846
    %v849 = vld [vmem:[#allocation13] sm:$0xff]
    %v850 = vld [vmem:[#allocation13 + $0x8] sm:$0xff]
    %v851 = vld [vmem:[#allocation13 + $0x10] sm:$0xff]
    %v852 = vld [vmem:[#allocation13 + $0x18] sm:$0xff]
    %v853 = vld [vmem:[#allocation13 + $0x20] sm:$0xff]
    %v854 = vld [vmem:[#allocation13 + $0x28] sm:$0xff]
    %v855 = vld [vmem:[#allocation13 + $0x30] sm:$0xff]
    %v856 = vld [vmem:[#allocation13 + $0x38] sm:$0xff]
    %v857 = vld [vmem:[#allocation13 + $0x40] sm:$0xff]
    %v858 = vld [vmem:[#allocation13 + $0x48] sm:$0xff]
    %v859 = vld [vmem:[#allocation13 + $0x50] sm:$0xff]
    %v860 = vld [vmem:[#allocation13 + $0x58] sm:$0xff]
    %v861 = vld [vmem:[#allocation13 + $0x60] sm:$0xff]
    %v862 = vld [vmem:[#allocation13 + $0x68] sm:$0xff]
    %v863 = vld [vmem:[#allocation13 + $0x70] sm:$0xff]
    %v864 = vld [vmem:[#allocation13 + $0x78] sm:$0xff]
    %v865 = vld [vmem:[#allocation13 + $0x80] sm:$0xff]
    %v866 = vld [vmem:[#allocation13 + $0x88] sm:$0xff]
    %v867 = vld [vmem:[#allocation13 + $0x90] sm:$0xff]
    %v868 = vld [vmem:[#allocation13 + $0x98] sm:$0xff]
    %v869 = vld [vmem:[#allocation13 + $0xa0] sm:$0xff]
    %v870 = vld [vmem:[#allocation13 + $0xa8] sm:$0xff]
    %v871 = vld [vmem:[#allocation13 + $0xb0] sm:$0xff]
    %v872 = vld [vmem:[#allocation13 + $0xb8] sm:$0xff]
    %v873 = vld [vmem:[#allocation13 + $0xc0] sm:$0xff]
    %v874 = vld [vmem:[#allocation13 + $0xc8] sm:$0xff]
    %v875 = vld [vmem:[#allocation13 + $0xd0] sm:$0xff]
    %v876 = vld [vmem:[#allocation13 + $0xd8] sm:$0xff]
    %v877 = vld [vmem:[#allocation13 + $0xe0] sm:$0xff]
    %v878 = vld [vmem:[#allocation13 + $0xe8] sm:$0xff]
    %v879 = vld [vmem:[#allocation13 + $0xf0] sm:$0xff]
    %v880 = vld [vmem:[#allocation13 + $0xf8] sm:$0xff]
    %v881 = vld [vmem:[#allocation13 + $0x100] sm:$0xff]
    %v882 = vld [vmem:[#allocation13 + $0x108] sm:$0xff]
    %v883 = vld [vmem:[#allocation13 + $0x110] sm:$0xff]
    %v884 = vld [vmem:[#allocation13 + $0x118] sm:$0xff]
    %v885 = vld [vmem:[#allocation13 + $0x120] sm:$0xff]
    %v886 = vld [vmem:[#allocation13 + $0x128] sm:$0xff]
    %v887 = vld [vmem:[#allocation13 + $0x130] sm:$0xff]
    %v888 = vld [vmem:[#allocation13 + $0x138] sm:$0xff]
    %v889 = vld [vmem:[#allocation13 + $0x140] sm:$0xff]
    %v890 = vld [vmem:[#allocation13 + $0x148] sm:$0xff]
    %v891 = vld [vmem:[#allocation13 + $0x150] sm:$0xff]
    %v892 = vld [vmem:[#allocation13 + $0x158] sm:$0xff]
    %v893 = vld [vmem:[#allocation13 + $0x160] sm:$0xff]
    %v894 = vld [vmem:[#allocation13 + $0x168] sm:$0xff]
    %v895 = vld [vmem:[#allocation13 + $0x170] sm:$0xff]
    %v896 = vld [vmem:[#allocation13 + $0x178] sm:$0xff]
    %v897 = vld [vmem:[#allocation13 + $0x180] sm:$0xff]
    %v898 = vld [vmem:[#allocation13 + $0x188] sm:$0xff]
    %v899 = vld [vmem:[#allocation13 + $0x190] sm:$0xff]
    %v900 = vld [vmem:[#allocation13 + $0x198] sm:$0xff]
    %v901 = vld [vmem:[#allocation13 + $0x1a0] sm:$0xff]
    %v902 = vld [vmem:[#allocation13 + $0x1a8] sm:$0xff]
    %v903 = vld [vmem:[#allocation13 + $0x1b0] sm:$0xff]
    %v904 = vld [vmem:[#allocation13 + $0x1b8] sm:$0xff]
    %v905 = vunpack.c.l.s8.bf16 %v849
    %v906 = vunpack.c.l.s8.bf16 %v850
    %v907 = vunpack.c.l.s8.bf16 %v851
    %v908 = vunpack.c.l.s8.bf16 %v852
    %v909 = vunpack.c.l.s8.bf16 %v853
    %v910 = vunpack.c.l.s8.bf16 %v854
    %v911 = vunpack.c.l.s8.bf16 %v855
    %v912 = vunpack.c.h.s8.bf16 %v849
    %v913 = vunpack.c.h.s8.bf16 %v850
    %v914 = vunpack.c.h.s8.bf16 %v851
    %v915 = vunpack.c.h.s8.bf16 %v852
    %v916 = vunpack.c.h.s8.bf16 %v853
    %v917 = vunpack.c.h.s8.bf16 %v854
    %v918 = vunpack.c.h.s8.bf16 %v855
    %v919 = vunpack.c.l.s8.bf16 %v856
    %v920 = vunpack.c.l.s8.bf16 %v857
    %v921 = vunpack.c.l.s8.bf16 %v858
    %v922 = vunpack.c.l.s8.bf16 %v859
    %v923 = vunpack.c.l.s8.bf16 %v860
    %v924 = vunpack.c.l.s8.bf16 %v861
    %v925 = vunpack.c.l.s8.bf16 %v862
    %v926 = vunpack.c.h.s8.bf16 %v856
    %v927 = vunpack.c.h.s8.bf16 %v857
    %v928 = vunpack.c.h.s8.bf16 %v858
    %v929 = vunpack.c.h.s8.bf16 %v859
    %v930 = vunpack.c.h.s8.bf16 %v860
    %v931 = vunpack.c.h.s8.bf16 %v861
    %v932 = vunpack.c.h.s8.bf16 %v862
    %v933 = vunpack.c.l.s8.bf16 %v863
    %v934 = vunpack.c.l.s8.bf16 %v864
    %v935 = vunpack.c.l.s8.bf16 %v865
    %v936 = vunpack.c.l.s8.bf16 %v866
    %v937 = vunpack.c.l.s8.bf16 %v867
    %v938 = vunpack.c.l.s8.bf16 %v868
    %v939 = vunpack.c.l.s8.bf16 %v869
    %v940 = vunpack.c.h.s8.bf16 %v863
    %v941 = vunpack.c.h.s8.bf16 %v864
    %v942 = vunpack.c.h.s8.bf16 %v865
    %v943 = vunpack.c.h.s8.bf16 %v866
    %v944 = vunpack.c.h.s8.bf16 %v867
    %v945 = vunpack.c.h.s8.bf16 %v868
    %v946 = vunpack.c.h.s8.bf16 %v869
    %v947 = vunpack.c.l.s8.bf16 %v870
    %v948 = vunpack.c.l.s8.bf16 %v871
    %v949 = vunpack.c.l.s8.bf16 %v872
    %v950 = vunpack.c.l.s8.bf16 %v873
    %v951 = vunpack.c.l.s8.bf16 %v874
    %v952 = vunpack.c.l.s8.bf16 %v875
    %v953 = vunpack.c.l.s8.bf16 %v876
    %v954 = vunpack.c.h.s8.bf16 %v870
    %v955 = vunpack.c.h.s8.bf16 %v871
    %v956 = vunpack.c.h.s8.bf16 %v872
    %v957 = vunpack.c.h.s8.bf16 %v873
    %v958 = vunpack.c.h.s8.bf16 %v874
    %v959 = vunpack.c.h.s8.bf16 %v875
    %v960 = vunpack.c.h.s8.bf16 %v876
    %v961 = vunpack.c.l.s8.bf16 %v877
    %v962 = vunpack.c.l.s8.bf16 %v878
    %v963 = vunpack.c.l.s8.bf16 %v879
    %v964 = vunpack.c.l.s8.bf16 %v880
    %v965 = vunpack.c.l.s8.bf16 %v881
    %v966 = vunpack.c.l.s8.bf16 %v882
    %v967 = vunpack.c.l.s8.bf16 %v883
    %v968 = vunpack.c.h.s8.bf16 %v877
    %v969 = vunpack.c.h.s8.bf16 %v878
    %v970 = vunpack.c.h.s8.bf16 %v879
    %v971 = vunpack.c.h.s8.bf16 %v880
    %v972 = vunpack.c.h.s8.bf16 %v881
    %v973 = vunpack.c.h.s8.bf16 %v882
    %v974 = vunpack.c.h.s8.bf16 %v883
    %v975 = vunpack.c.l.s8.bf16 %v884
    %v976 = vunpack.c.l.s8.bf16 %v885
    %v977 = vunpack.c.l.s8.bf16 %v886
    %v978 = vunpack.c.l.s8.bf16 %v887
    %v979 = vunpack.c.l.s8.bf16 %v888
    %v980 = vunpack.c.l.s8.bf16 %v889
    %v981 = vunpack.c.l.s8.bf16 %v890
    %v982 = vunpack.c.h.s8.bf16 %v884
    %v983 = vunpack.c.h.s8.bf16 %v885
    %v984 = vunpack.c.h.s8.bf16 %v886
    %v985 = vunpack.c.h.s8.bf16 %v887
    %v986 = vunpack.c.h.s8.bf16 %v888
    %v987 = vunpack.c.h.s8.bf16 %v889
    %v988 = vunpack.c.h.s8.bf16 %v890
    %v989 = vunpack.c.l.s8.bf16 %v891
    %v990 = vunpack.c.l.s8.bf16 %v892
    %v991 = vunpack.c.l.s8.bf16 %v893
    %v992 = vunpack.c.l.s8.bf16 %v894
    %v993 = vunpack.c.l.s8.bf16 %v895
    %v994 = vunpack.c.l.s8.bf16 %v896
    %v995 = vunpack.c.l.s8.bf16 %v897
    %v996 = vunpack.c.h.s8.bf16 %v891
    %v997 = vunpack.c.h.s8.bf16 %v892
    %v998 = vunpack.c.h.s8.bf16 %v893
    %v999 = vunpack.c.h.s8.bf16 %v894
    %v1000 = vunpack.c.h.s8.bf16 %v895
    %v1001 = vunpack.c.h.s8.bf16 %v896
    %v1002 = vunpack.c.h.s8.bf16 %v897
    %v1003 = vunpack.c.l.s8.bf16 %v898
    %v1004 = vunpack.c.l.s8.bf16 %v899
    %v1005 = vunpack.c.l.s8.bf16 %v900
    %v1006 = vunpack.c.l.s8.bf16 %v901
    %v1007 = vunpack.c.l.s8.bf16 %v902
    %v1008 = vunpack.c.l.s8.bf16 %v903
    %v1009 = vunpack.c.l.s8.bf16 %v904
    %v1010 = vunpack.c.h.s8.bf16 %v898
    %v1011 = vunpack.c.h.s8.bf16 %v899
    %v1012 = vunpack.c.h.s8.bf16 %v900
    %v1013 = vunpack.c.h.s8.bf16 %v901
    %v1014 = vunpack.c.h.s8.bf16 %v902
    %v1015 = vunpack.c.h.s8.bf16 %v903
    %v1016 = vunpack.c.h.s8.bf16 %v904
    %1017 = vmatprep.subr.bf16.mxu0 %v955
    %1018 = vmatpush1.bf16.msra.mxu0 %v954
    %1019 = vmatprep.subr.bf16.mxu0 %v948
    %1020 = vmatpush1.bf16.msra.mxu0 %v947
    %1021 = vmatprep.subr.bf16.mxu0 %v941
    %1022 = vmatpush1.bf16.msra.mxu0 %v940
    %1023 = vmatprep.subr.bf16.mxu0 %v934
    %1024 = vmatpush1.bf16.msra.mxu0 %v933
    %1025 = vmatprep.subr.bf16.mxu0 %v927
    %1026 = vmatpush1.bf16.msra.mxu0 %v926
    %1027 = vmatprep.subr.bf16.mxu0 %v920
    %1028 = vmatpush1.bf16.msra.mxu0 %v919
    %1029 = vmatprep.subr.bf16.mxu0 %v913
    %1030 = vmatpush1.bf16.msra.mxu0 %v912
    %1031 = vmatprep.subr.bf16.mxu0 %v906
    %1032 = vmatpush1.bf16.msra.mxu0 %v905
    %1033 = vmatprep.subr.bf16.mxu0 %v1011
    %1034 = vmatpush2.bf16.msra.mxu0 %v1010
    %1035 = vmatprep.subr.bf16.mxu0 %v1004
    %1036 = vmatpush2.bf16.msra.mxu0 %v1003
    %1037 = vmatprep.subr.bf16.mxu0 %v997
    %1038 = vmatpush2.bf16.msra.mxu0 %v996
    %1039 = vmatprep.subr.bf16.mxu0 %v990
    %1040 = vmatpush2.bf16.msra.mxu0 %v989
    %1041 = vmatprep.subr.bf16.mxu0 %v983
    %1042 = vmatpush2.bf16.msra.mxu0 %v982
    %1043 = vmatprep.subr.bf16.mxu0 %v976
    %1044 = vmatpush2.bf16.msra.mxu0 %v975
    %1045 = vmatprep.subr.bf16.mxu0 %v969
    %1046 = vmatpush2.bf16.msra.mxu0 %v968
    %1047 = vmatprep.subr.bf16.mxu0 %v962
    %1048 = vmatpush2.bf16.msra.mxu0 %v961
    %1049 = vmatprep.mubr.bf16.mxu0 %v848
    %1050 = vmatmul.mubr.bf16.gmra.mxu0 %v847
    %v1051 = vpop.f32.mrf.mxu0
    %v1052 = vadd.f32 0.0, %v1051
    %v1053 = vpop.f32.mrf.mxu0
    %v1054 = vadd.f32 0.0, %v1053
    %v1055 = vpop.f32.mrf.mxu0
    %v1056 = vpop.f32.mrf.mxu0
    %1057 = vdwg.mxu0
    %1058 = vmatprep.subr.bf16.mxu0 %v957
    %1059 = vmatpush1.bf16.msra.mxu0 %v956
    %1060 = vmatprep.subr.bf16.mxu0 %v950
    %1061 = vmatpush1.bf16.msra.mxu0 %v949
    %1062 = vmatprep.subr.bf16.mxu0 %v943
    %1063 = vmatpush1.bf16.msra.mxu0 %v942
    %1064 = vmatprep.subr.bf16.mxu0 %v936
    %1065 = vmatpush1.bf16.msra.mxu0 %v935
    %1066 = vmatprep.subr.bf16.mxu0 %v929
    %1067 = vmatpush1.bf16.msra.mxu0 %v928
    %1068 = vmatprep.subr.bf16.mxu0 %v922
    %1069 = vmatpush1.bf16.msra.mxu0 %v921
    %1070 = vmatprep.subr.bf16.mxu0 %v915
    %1071 = vmatpush1.bf16.msra.mxu0 %v914
    %1072 = vmatprep.subr.bf16.mxu0 %v908
    %1073 = vmatpush1.bf16.msra.mxu0 %v907
    %1074 = vmatprep.subr.bf16.mxu0 %v1013
    %1075 = vmatpush2.bf16.msra.mxu0 %v1012
    %1076 = vmatprep.subr.bf16.mxu0 %v1006
    %1077 = vmatpush2.bf16.msra.mxu0 %v1005
    %1078 = vmatprep.subr.bf16.mxu0 %v999
    %1079 = vmatpush2.bf16.msra.mxu0 %v998
    %1080 = vmatprep.subr.bf16.mxu0 %v992
    %1081 = vmatpush2.bf16.msra.mxu0 %v991
    %1082 = vmatprep.subr.bf16.mxu0 %v985
    %1083 = vmatpush2.bf16.msra.mxu0 %v984
    %1084 = vmatprep.subr.bf16.mxu0 %v978
    %1085 = vmatpush2.bf16.msra.mxu0 %v977
    %1086 = vmatprep.subr.bf16.mxu0 %v971
    %1087 = vmatpush2.bf16.msra.mxu0 %v970
    %1088 = vmatprep.subr.bf16.mxu0 %v964
    %1089 = vmatpush2.bf16.msra.mxu0 %v963
    %1090 = vmatprep.mubr.bf16.mxu0 %v848
    %1091 = vmatmul.mubr.bf16.gmra.mxu0 %v847
    %v1092 = vpop.f32.mrf.mxu0
    %v1093 = vadd.f32 0.0, %v1092
    %v1094 = vpop.f32.mrf.mxu0
    %v1095 = vadd.f32 0.0, %v1094
    %v1096 = vpop.f32.mrf.mxu0
    %v1097 = vpop.f32.mrf.mxu0
    %1098 = vdwg.mxu0
    %1099 = vmatprep.subr.bf16.mxu0 %v959
    %1100 = vmatpush1.bf16.msra.mxu0 %v958
    %1101 = vmatprep.subr.bf16.mxu0 %v952
    %1102 = vmatpush1.bf16.msra.mxu0 %v951
    %1103 = vmatprep.subr.bf16.mxu0 %v945
    %1104 = vmatpush1.bf16.msra.mxu0 %v944
    %1105 = vmatprep.subr.bf16.mxu0 %v938
    %1106 = vmatpush1.bf16.msra.mxu0 %v937
    %1107 = vmatprep.subr.bf16.mxu0 %v931
    %1108 = vmatpush1.bf16.msra.mxu0 %v930
    %1109 = vmatprep.subr.bf16.mxu0 %v924
    %1110 = vmatpush1.bf16.msra.mxu0 %v923
    %1111 = vmatprep.subr.bf16.mxu0 %v917
    %1112 = vmatpush1.bf16.msra.mxu0 %v916
    %1113 = vmatprep.subr.bf16.mxu0 %v910
    %1114 = vmatpush1.bf16.msra.mxu0 %v909
    %1115 = vmatprep.subr.bf16.mxu0 %v1015
    %1116 = vmatpush2.bf16.msra.mxu0 %v1014
    %1117 = vmatprep.subr.bf16.mxu0 %v1008
    %1118 = vmatpush2.bf16.msra.mxu0 %v1007
    %1119 = vmatprep.subr.bf16.mxu0 %v1001
    %1120 = vmatpush2.bf16.msra.mxu0 %v1000
    %1121 = vmatprep.subr.bf16.mxu0 %v994
    %1122 = vmatpush2.bf16.msra.mxu0 %v993
    %1123 = vmatprep.subr.bf16.mxu0 %v987
    %1124 = vmatpush2.bf16.msra.mxu0 %v986
    %1125 = vmatprep.subr.bf16.mxu0 %v980
    %1126 = vmatpush2.bf16.msra.mxu0 %v979
    %1127 = vmatprep.subr.bf16.mxu0 %v973
    %1128 = vmatpush2.bf16.msra.mxu0 %v972
    %1129 = vmatprep.subr.bf16.mxu0 %v966
    %1130 = vmatpush2.bf16.msra.mxu0 %v965
    %1131 = vmatprep.mubr.bf16.mxu0 %v848
    %1132 = vmatmul.mubr.bf16.gmra.mxu0 %v847
    %v1133 = vpop.f32.mrf.mxu0
    %v1134 = vadd.f32 0.0, %v1133
    %v1135 = vpop.f32.mrf.mxu0
    %v1136 = vadd.f32 0.0, %v1135
    %v1137 = vpop.f32.mrf.mxu0
    %v1138 = vpop.f32.mrf.mxu0
    %1139 = vdwg.mxu0
    %1140 = vmatprep.subr.bf16.mxu0 0
    %1141 = vmatpush1.bf16.msra.mxu0 %v960
    %1142 = vmatprep.subr.bf16.mxu0 0
    %1143 = vmatpush1.bf16.msra.mxu0 %v953
    %1144 = vmatprep.subr.bf16.mxu0 0
    %1145 = vmatpush1.bf16.msra.mxu0 %v946
    %1146 = vmatprep.subr.bf16.mxu0 0
    %1147 = vmatpush1.bf16.msra.mxu0 %v939
    %1148 = vmatprep.subr.bf16.mxu0 0
    %1149 = vmatpush1.bf16.msra.mxu0 %v932
    %1150 = vmatprep.subr.bf16.mxu0 0
    %1151 = vmatpush1.bf16.msra.mxu0 %v925
    %1152 = vmatprep.subr.bf16.mxu0 0
    %1153 = vmatpush1.bf16.msra.mxu0 %v918
    %1154 = vmatprep.subr.bf16.mxu0 0
    %1155 = vmatpush1.bf16.msra.mxu0 %v911
    %1156 = vmatprep.subr.bf16.mxu0 0
    %1157 = vmatpush2.bf16.msra.mxu0 %v1016
    %1158 = vmatprep.subr.bf16.mxu0 0
    %1159 = vmatpush2.bf16.msra.mxu0 %v1009
    %1160 = vmatprep.subr.bf16.mxu0 0
    %1161 = vmatpush2.bf16.msra.mxu0 %v1002
    %1162 = vmatprep.subr.bf16.mxu0 0
    %1163 = vmatpush2.bf16.msra.mxu0 %v995
    %1164 = vmatprep.subr.bf16.mxu0 0
    %1165 = vmatpush2.bf16.msra.mxu0 %v988
    %1166 = vmatprep.subr.bf16.mxu0 0
    %1167 = vmatpush2.bf16.msra.mxu0 %v981
    %1168 = vmatprep.subr.bf16.mxu0 0
    %1169 = vmatpush2.bf16.msra.mxu0 %v974
    %1170 = vmatprep.subr.bf16.mxu0 0
    %1171 = vmatpush2.bf16.msra.mxu0 %v967
    %1172 = vmatprep.mubr.bf16.mxu0 %v848
    %1173 = vmatmul.mubr.bf16.gmra.mxu0 %v847
    %v1174 = vpop.f32.mrf.mxu0
    %v1175 = vadd.f32 0.0, %v1174
    %v1176 = vpop.f32.mrf.mxu0
    %v1177 = vpop.f32.mrf.mxu0
    %v1178 = vpop.f32.mrf.mxu0
    %1179 = vdwg.mxu0
    %v1180 = vld [vmem:[%s17] sm:$0xff]
    %v1182 = vlaneseq
    %v1183 = vshrl.u32 %v1182, 7
    %v1184 = vsub.s32 0, %v1183
    %v1185 = vrot.slane %v1180, %v1184
    %v1186 = vlaneseq
    %v1187 = vshrl.u32 %v1186, 7
    %v1188 = vsub.s32 1, %v1187
    %v1189 = vrot.slane %v1180, %v1188
    %v1190 = vlaneseq
    %v1191 = vshrl.u32 %v1190, 7
    %v1192 = vsub.s32 2, %v1191
    %v1193 = vrot.slane %v1180, %v1192
    %v1194 = vlaneseq
    %v1195 = vshrl.u32 %v1194, 7
    %v1196 = vsub.s32 3, %v1195
    %v1197 = vrot.slane %v1180, %v1196
    %v1198 = vlaneseq
    %v1199 = vshrl.u32 %v1198, 7
    %v1200 = vsub.s32 4, %v1199
    %v1201 = vrot.slane %v1180, %v1200
    %v1202 = vlaneseq
    %v1203 = vshrl.u32 %v1202, 7
    %v1204 = vsub.s32 5, %v1203
    %v1205 = vrot.slane %v1180, %v1204
    %v1206 = vlaneseq
    %v1207 = vshrl.u32 %v1206, 7
    %v1208 = vsub.s32 6, %v1207
    %v1209 = vrot.slane %v1180, %v1208
    %v1217 = vmul.f32 %v1052, %v1185
    %v1218 = vmul.f32 %v1054, %v1189
    %v1219 = vmul.f32 %v1093, %v1193
    %v1220 = vmul.f32 %v1095, %v1197
    %v1221 = vmul.f32 %v1134, %v1201
    %v1222 = vmul.f32 %v1136, %v1205
    %v1223 = vmul.f32 %v1175, %v1209
    %v1224 = vld [vmem:[%s18] sm:$0xff]
    %v1226 = vlaneseq
    %v1227 = vshrl.u32 %v1226, 7
    %v1228 = vsub.s32 0, %v1227
    %v1229 = vrot.slane %v1224, %v1228
    %v1230 = vlaneseq
    %v1231 = vshrl.u32 %v1230, 7
    %v1232 = vsub.s32 1, %v1231
    %v1233 = vrot.slane %v1224, %v1232
    %v1234 = vlaneseq
    %v1235 = vshrl.u32 %v1234, 7
    %v1236 = vsub.s32 2, %v1235
    %v1237 = vrot.slane %v1224, %v1236
    %v1238 = vlaneseq
    %v1239 = vshrl.u32 %v1238, 7
    %v1240 = vsub.s32 3, %v1239
    %v1241 = vrot.slane %v1224, %v1240
    %v1242 = vlaneseq
    %v1243 = vshrl.u32 %v1242, 7
    %v1244 = vsub.s32 4, %v1243
    %v1245 = vrot.slane %v1224, %v1244
    %v1246 = vlaneseq
    %v1247 = vshrl.u32 %v1246, 7
    %v1248 = vsub.s32 5, %v1247
    %v1249 = vrot.slane %v1224, %v1248
    %v1250 = vlaneseq
    %v1251 = vshrl.u32 %v1250, 7
    %v1252 = vsub.s32 6, %v1251
    %v1253 = vrot.slane %v1224, %v1252
    %v1261 = vadd.f32 %v1217, %v1229
    %v1262 = vadd.f32 %v1218, %v1233
    %v1263 = vadd.f32 %v1219, %v1237
    %v1264 = vadd.f32 %v1220, %v1241
    %v1265 = vadd.f32 %v1221, %v1245
    %v1266 = vadd.f32 %v1222, %v1249
    %v1267 = vadd.f32 %v1223, %v1253
    %v1268 = vtanh.pop %v1261
    %v1269 = vtanh.pop %v1262
    %v1270 = vtanh.pop %v1263
    %v1271 = vtanh.pop %v1264
    %v1272 = vtanh.pop %v1265
    %v1273 = vtanh.pop %v1266
    %v1274 = vtanh.pop %v1267
    %1275 = vst [vmem:[%s19] sm:$0xff] %v1268
    %1276 = vst [vmem:[%s19 + $0x8] sm:$0xff] %v1269
    %1277 = vst [vmem:[%s19 + $0x10] sm:$0xff] %v1270
    %1278 = vst [vmem:[%s19 + $0x18] sm:$0xff] %v1271
    %1279 = vst [vmem:[%s19 + $0x20] sm:$0xff] %v1272
    %1280 = vst [vmem:[%s19 + $0x28] sm:$0xff] %v1273
    %1281 = vst [vmem:[%s19 + $0x30] sm:$0xff] %v1274
    // Predicated region
    $region110: #{_forward_impl.1} parent=1 // pred_check
      _
    $region111: #{_forward_impl.1} parent=1 // pred_check_branch
      %1283 = sbr.rel (0) target = $region113
    $region112: #{_forward_impl.1} parent=1 // pred_region
      _
    $region113: #{_forward_impl.1} parent=1 // pred_fallthru
      _
    // Predicated region
    $region114: #{_forward_impl.1} parent=1 // pred_check
      _
    $region115: #{_forward_impl.1} parent=1 // pred_check_branch
      %1285 = sbr.rel (0) target = $region117
    $region116: #{_forward_impl.1} parent=1 // pred_region
      _
    $region117: #{_forward_impl.1} parent=1 // pred_fallthru
      _
    %1286 = vsyncpa [#allocation3], 1
    %1287 = vsyncpa [#allocation5], 1
    %1288 = vsyncpa [#allocation8], 1
    %1289 = vsyncpa [#allocation11], 1
    %1290 = vsyncpa [#allocation14], 1

// kernel: _forward_impl.1
$region0: #{_forward_impl.1}
  #allocation0 [shape = 'u32[]', space=smem, size = 0x4, offset = 0x4, fixed_abs, tag = 'smem constant byte address 0x4 - core index']
  #allocation1 [shape = 'u32[144,128]{1,0:T(1,128)}', space=vmem, size = 0x12000, scoped, tag = 'internal scratch']
  %s0 = inlined_call_operand.vmem [shape: bf16[8,256], index: 0, kind: input, shape index: {}]
  %s1 = inlined_call_operand.hbm [shape: s8[256,256], index: 1, kind: input, shape index: {}]
  %s2 = inlined_call_operand.hbm [shape: f32[1,256], index: 2, kind: input, shape index: {}]
  %s3 = inlined_call_operand.hbm [shape: f32[1,256], index: 3, kind: input, shape index: {}]
  %s4 = inlined_call_operand.hbm [shape: f32[1,256], index: 4, kind: input, shape index: {}]
  %s5 = inlined_call_operand.hbm [shape: f32[1,256], index: 5, kind: input, shape index: {}]
  %s6 = inlined_call_operand.hbm [shape: s8[256,512], index: 6, kind: input, shape index: {}]
  %s7 = inlined_call_operand.vmem [shape: f32[1,512], index: 7, kind: input, shape index: {}]
  %s8 = inlined_call_operand.vmem [shape: f32[1,512], index: 8, kind: input, shape index: {}]
  %s9 = inlined_call_operand.vmem [shape: f32[1,512], index: 9, kind: input, shape index: {}]
  %s10 = inlined_call_operand.vmem [shape: f32[1,512], index: 10, kind: input, shape index: {}]
  %s11 = inlined_call_operand.hbm [shape: s8[512,256], index: 11, kind: input, shape index: {}]
  %s12 = inlined_call_operand.vmem [shape: f32[1,256], index: 12, kind: input, shape index: {}]
  %s13 = inlined_call_operand.vmem [shape: f32[1,256], index: 13, kind: input, shape index: {}]
  %s14 = inlined_call_operand.vmem [shape: f32[1,256], index: 14, kind: input, shape index: {}]
  %s15 = inlined_call_operand.vmem [shape: f32[1,256], index: 15, kind: input, shape index: {}]
  %s16 = inlined_call_operand.hbm [shape: s8[256,896], index: 16, kind: input, shape index: {}]
  %s17 = inlined_call_operand.vmem [shape: f32[1,896], index: 17, kind: input, shape index: {}]
  %s18 = inlined_call_operand.vmem [shape: f32[1,896], index: 18, kind: input, shape index: {}]
  %s19 = inlined_call_operand.vmem [shape: f32[8,896], index: 19, kind: output, shape index: {}]
  %s20 = sld [smem:[#allocation0]]
  $region118: #{_forward_impl.1} parent=0
    _
  %s22 = ssub.s32 1, %s20
  %s23 = scalar_select 0, %s22, %s20
  $region1: #{_forward_impl.1} parent=0
    #allocation2 [shape = 'u8[65536]{0}', space=vmem, size = 0x10000, scoped, tag = 'input window, operand 1, single buffered']
    #allocation3 [shape = 's32[1]{0}', space=sflag, size = 0x4, scoped, tag = 'scoped memory for _forward_impl.1']
    #allocation4 [shape = 'u8[1024]{0}', space=vmem, size = 0x400, scoped, tag = 'input window, operand 2, single buffered']
    #allocation5 [shape = 's32[1]{0}', space=sflag, size = 0x4, scoped, tag = 'scoped memory for _forward_impl.1']
    #allocation6 [shape = 'u8[1024]{0}', space=vmem, size = 0x400, scoped, tag = 'input window, operand 3, single buffered']
    #allocation7 [shape = 'u8[1024]{0}', space=vmem, size = 0x400, scoped, tag = 'input window, operand 4, single buffered']
    #allocation8 [shape = 's32[1]{0}', space=sflag, size = 0x4, scoped, tag = 'scoped memory for _forward_impl.1']
    #allocation9 [shape = 'u8[1024]{0}', space=vmem, size = 0x400, scoped, tag = 'input window, operand 5, single buffered']
    #allocation10 [shape = 'u8[131072]{0}', space=vmem, size = 0x20000, scoped, tag = 'input window, operand 6, single buffered']
    #allocation11 [shape = 's32[1]{0}', space=sflag, size = 0x4, scoped, tag = 'scoped memory for _forward_impl.1']
    #allocation12 [shape = 'u8[131072]{0}', space=vmem, size = 0x20000, scoped, tag = 'input window, operand 11, single buffered']
    #allocation13 [shape = 'u8[229376]{0}', space=vmem, size = 0x38000, scoped, tag = 'input window, operand 16, single buffered']
    #allocation14 [shape = 's32[1]{0}', space=sflag, size = 0x4, scoped, tag = 'scoped memory for _forward_impl.1']
    %24 = vsyncpa [#allocation3], 0
    %25 = vsyncpa [#allocation5], 0
    %26 = vsyncpa [#allocation8], 0
    %27 = vsyncpa [#allocation11], 0
    %28 = vsyncpa [#allocation14], 0
    // Predicated region
    $region2: #{_forward_impl.1} parent=1 // pred_check
      _
    $region3: #{_forward_impl.1} parent=1 // pred_check_branch
      %30 = sbr.rel (0) target = $region5
    $region4: #{_forward_impl.1} parent=1 // pred_region
      _
    $region5: #{_forward_impl.1} parent=1 // pred_fallthru
      _
    // Predicated region
    $region6: #{_forward_impl.1} parent=1 // pred_check
      _
    $region7: #{_forward_impl.1} parent=1 // pred_check_branch
      %32 = sbr.rel (0) target = $region9
    $region8: #{_forward_impl.1} parent=1 // pred_region
      %s34 = ssub.s32 2048, 2048
      %35 = vsyncadd [#allocation3], %s34
      %s36 = sshll.u32 [#allocation2], 4
      %s37 = int_to_ptr.vmem [resolvable:$true] %s36
      %42 = dma.hbm_to_vmem [thread:$0]  %s1, 2048, %s37, [#allocation3], 256, 256, 16
    $region9: #{_forward_impl.1} parent=1 // pred_fallthru
      _
    // Predicated region
    $region10: #{_forward_impl.1} parent=1 // pred_check
      _
    $region11: #{_forward_impl.1} parent=1 // pred_check_branch
      %44 = sbr.rel (0) target = $region13
    $region12: #{_forward_impl.1} parent=1 // pred_region
      %s46 = ssub.s32 32, 32
      %47 = vsyncadd [#allocation5], %s46
      %s49 = sshll.u32 [#allocation4], 4
      %s50 = int_to_ptr.vmem [resolvable:$true] %s49
      %52 = dma.hbm_to_vmem [thread:$0]  %s2, 32, %s50, [#allocation5]
    $region13: #{_forward_impl.1} parent=1 // pred_fallthru
      _
    // Predicated region
    $region14: #{_forward_impl.1} parent=1 // pred_check
      _
    $region15: #{_forward_impl.1} parent=1 // pred_check_branch
      %54 = sbr.rel (0) target = $region17
    $region16: #{_forward_impl.1} parent=1 // pred_region
      %s56 = ssub.s32 32, 32
      %57 = vsyncadd [#allocation5], %s56
      %s59 = sshll.u32 [#allocation6], 4
      %s60 = int_to_ptr.vmem [resolvable:$true] %s59
      %62 = dma.hbm_to_vmem [thread:$0]  %s3, 32, %s60, [#allocation5]
    $region17: #{_forward_impl.1} parent=1 // pred_fallthru
      _
    // Predicated region
    $region18: #{_forward_impl.1} parent=1 // pred_check
      _
    $region19: #{_forward_impl.1} parent=1 // pred_check_branch
      %64 = sbr.rel (0) target = $region21
    $region20: #{_forward_impl.1} parent=1 // pred_region
      %s66 = ssub.s32 32, 32
      %67 = vsyncadd [#allocation8], %s66
      %s69 = sshll.u32 [#allocation7], 4
      %s70 = int_to_ptr.vmem [resolvable:$true] %s69
      %72 = dma.hbm_to_vmem [thread:$0]  %s4, 32, %s70, [#allocation8]
    $region21: #{_forward_impl.1} parent=1 // pred_fallthru
      _
    // Predicated region
    $region22: #{_forward_impl.1} parent=1 // pred_check
      _
    $region23: #{_forward_impl.1} parent=1 // pred_check_branch
      %74 = sbr.rel (0) target = $region25
    $region24: #{_forward_impl.1} parent=1 // pred_region
      %s76 = ssub.s32 32, 32
      %77 = vsyncadd [#allocation8], %s76
      %s79 = sshll.u32 [#allocation9], 4
      %s80 = int_to_ptr.vmem [resolvable:$true] %s79
      %82 = dma.hbm_to_vmem [thread:$0]  %s5, 32, %s80, [#allocation8]
    $region25: #{_forward_impl.1} parent=1 // pred_fallthru
      _
    // Predicated region
    $region26: #{_forward_impl.1} parent=1 // pred_check
      _
    $region27: #{_forward_impl.1} parent=1 // pred_check_branch
      %84 = sbr.rel (0) target = $region29
    $region28: #{_forward_impl.1} parent=1 // pred_region
      %s86 = ssub.s32 4096, 4096
      %87 = vsyncadd [#allocation11], %s86
      %s88 = sshll.u32 [#allocation10], 4
      %s89 = int_to_ptr.vmem [resolvable:$true] %s88
      %94 = dma.hbm_to_vmem [thread:$0]  %s6, 4096, %s89, [#allocation11], 512, 512, 32
    $region29: #{_forward_impl.1} parent=1 // pred_fallthru
      _
    // Predicated region
    $region30: #{_forward_impl.1} parent=1 // pred_check
      _
    $region31: #{_forward_impl.1} parent=1 // pred_check_branch
      %96 = sbr.rel (0) target = $region33
    $region32: #{_forward_impl.1} parent=1 // pred_region
      _
    $region33: #{_forward_impl.1} parent=1 // pred_fallthru
      _
    // Predicated region
    $region34: #{_forward_impl.1} parent=1 // pred_check
      _
    $region35: #{_forward_impl.1} parent=1 // pred_check_branch
      %98 = sbr.rel (0) target = $region37
    $region36: #{_forward_impl.1} parent=1 // pred_region
      _
    $region37: #{_forward_impl.1} parent=1 // pred_fallthru
      _
    // Predicated region
    $region38: #{_forward_impl.1} parent=1 // pred_check
      _
    $region39: #{_forward_impl.1} parent=1 // pred_check_branch
      %100 = sbr.rel (0) target = $region41
    $region40: #{_forward_impl.1} parent=1 // pred_region
      _
    $region41: #{_forward_impl.1} parent=1 // pred_fallthru
      _
    // Predicated region
    $region42: #{_forward_impl.1} parent=1 // pred_check
      _
    $region43: #{_forward_impl.1} parent=1 // pred_check_branch
      %102 = sbr.rel (0) target = $region45
    $region44: #{_forward_impl.1} parent=1 // pred_region
      _
    $region45: #{_forward_impl.1} parent=1 // pred_fallthru
      _
    // Predicated region
    $region46: #{_forward_impl.1} parent=1 // pred_check
      _
    $region47: #{_forward_impl.1} parent=1 // pred_check_branch
      %104 = sbr.rel (0) target = $region49
    $region48: #{_forward_impl.1} parent=1 // pred_region
      %s106 = ssub.s32 4096, 4096
      %107 = vsyncadd [#allocation11], %s106
      %s108 = sshll.u32 [#allocation12], 4
      %s109 = int_to_ptr.vmem [resolvable:$true] %s108
      %114 = dma.hbm_to_vmem [thread:$0]  %s11, 4096, %s109, [#allocation11], 256, 256, 16
    $region49: #{_forward_impl.1} parent=1 // pred_fallthru
      _
    // Predicated region
    $region50: #{_forward_impl.1} parent=1 // pred_check
      _
    $region51: #{_forward_impl.1} parent=1 // pred_check_branch
      %116 = sbr.rel (0) target = $region53
    $region52: #{_forward_impl.1} parent=1 // pred_region
      _
    $region53: #{_forward_impl.1} parent=1 // pred_fallthru
      _
    // Predicated region
    $region54: #{_forward_impl.1} parent=1 // pred_check
      _
    $region55: #{_forward_impl.1} parent=1 // pred_check_branch
      %118 = sbr.rel (0) target = $region57
    $region56: #{_forward_impl.1} parent=1 // pred_region
      _
    $region57: #{_forward_impl.1} parent=1 // pred_fallthru
      _
    // Predicated region
    $region58: #{_forward_impl.1} parent=1 // pred_check
      _
    $region59: #{_forward_impl.1} parent=1 // pred_check_branch
      %120 = sbr.rel (0) target = $region61
    $region60: #{_forward_impl.1} parent=1 // pred_region
      _
    $region61: #{_forward_impl.1} parent=1 // pred_fallthru
      _
    // Predicated region
    $region62: #{_forward_impl.1} parent=1 // pred_check
      _
    $region63: #{_forward_impl.1} parent=1 // pred_check_branch
      %122 = sbr.rel (0) target = $region65
    $region64: #{_forward_impl.1} parent=1 // pred_region
      _
    $region65: #{_forward_impl.1} parent=1 // pred_fallthru
      _
    // Predicated region
    $region66: #{_forward_impl.1} parent=1 // pred_check
      _
    $region67: #{_forward_impl.1} parent=1 // pred_check_branch
      %124 = sbr.rel (0) target = $region69
    $region68: #{_forward_impl.1} parent=1 // pred_region
      %s126 = ssub.s32 7168, 7168
      %127 = vsyncadd [#allocation14], %s126
      %s128 = sshll.u32 [#allocation13], 4
      %s129 = int_to_ptr.vmem [resolvable:$true] %s128
      %134 = dma.hbm_to_vmem [thread:$0]  %s16, 7168, %s129, [#allocation14], 896, 896, 56
    $region69: #{_forward_impl.1} parent=1 // pred_fallthru
      _
    // Predicated region
    $region70: #{_forward_impl.1} parent=1 // pred_check
      _
    $region71: #{_forward_impl.1} parent=1 // pred_check_branch
      %136 = sbr.rel (0) target = $region73
    $region72: #{_forward_impl.1} parent=1 // pred_region
      _
    $region73: #{_forward_impl.1} parent=1 // pred_fallthru
      _
    // Predicated region
    $region74: #{_forward_impl.1} parent=1 // pred_check
      _
    $region75: #{_forward_impl.1} parent=1 // pred_check_branch
      %138 = sbr.rel (0) target = $region77
    $region76: #{_forward_impl.1} parent=1 // pred_region
      _
    $region77: #{_forward_impl.1} parent=1 // pred_fallthru
      _
    // Predicated region
    $region78: #{_forward_impl.1} parent=1 // pred_check
      _
    $region79: #{_forward_impl.1} parent=1 // pred_check_branch
      %140 = sbr.rel (0) target = $region81
    $region80: #{_forward_impl.1} parent=1 // pred_region
      %141 = dma.done [#allocation3], 2048
    $region81: #{_forward_impl.1} parent=1 // pred_fallthru
      _
    // Predicated region
    $region82: #{_forward_impl.1} parent=1 // pred_check
      _
    $region83: #{_forward_impl.1} parent=1 // pred_check_branch
      %143 = sbr.rel (0) target = $region85
    $region84: #{_forward_impl.1} parent=1 // pred_region
      %144 = dma.done [#allocation5], 32
    $region85: #{_forward_impl.1} parent=1 // pred_fallthru
      _
    // Predicated region
    $region86: #{_forward_impl.1} parent=1 // pred_check
      _
    $region87: #{_forward_impl.1} parent=1 // pred_check_branch
      %146 = sbr.rel (0) target = $region89
    $region88: #{_forward_impl.1} parent=1 // pred_region
      %147 = dma.done [#allocation5], 32
    $region89: #{_forward_impl.1} parent=1 // pred_fallthru
      _
    // Predicated region
    $region90: #{_forward_impl.1} parent=1 // pred_check
      _
    $region91: #{_forward_impl.1} parent=1 // pred_check_branch
      %149 = sbr.rel (0) target = $region93
    $region92: #{_forward_impl.1} parent=1 // pred_region
      %150 = dma.done [#allocation8], 32
    $region93: #{_forward_impl.1} parent=1 // pred_fallthru
      _
    // Predicated region
    $region94: #{_forward_impl.1} parent=1 // pred_check
      _
    $region95: #{_forward_impl.1} parent=1 // pred_check_branch
      %152 = sbr.rel (0) target = $region97
    $region96: #{_forward_impl.1} parent=1 // pred_region
      %153 = dma.done [#allocation8], 32
    $region97: #{_forward_impl.1} parent=1 // pred_fallthru
      _
    // Predicated region
    $region98: #{_forward_impl.1} parent=1 // pred_check
      _
    $region99: #{_forward_impl.1} parent=1 // pred_check_branch
      %155 = sbr.rel (0) target = $region101
    $region100: #{_forward_impl.1} parent=1 // pred_region
      %156 = dma.done [#allocation11], 4096
    $region101: #{_forward_impl.1} parent=1 // pred_fallthru
      _
    // Predicated region
    $region102: #{_forward_impl.1} parent=1 // pred_check
      _
    $region103: #{_forward_impl.1} parent=1 // pred_check_branch
      %158 = sbr.rel (0) target = $region105
    $region104: #{_forward_impl.1} parent=1 // pred_region
      %159 = dma.done [#allocation11], 4096
    $region105: #{_forward_impl.1} parent=1 // pred_fallthru
      _
    // Predicated region
    $region106: #{_forward_impl.1} parent=1 // pred_check
      _
    $region107: #{_forward_impl.1} parent=1 // pred_check_branch
      %161 = sbr.rel (0) target = $region109
    $region108: #{_forward_impl.1} parent=1 // pred_region
      %162 = dma.done [#allocation14], 7168
    $region109: #{_forward_impl.1} parent=1 // pred_fallthru
      _
    %v164 = vld [vmem:[%s0] sm:$0xff]
    %v165 = vld [vmem:[#allocation2] sm:$0xff]
    %v166 = vld [vmem:[#allocation2 + $0x8] sm:$0xff]
    %v167 = vld [vmem:[#allocation2 + $0x10] sm:$0xff]
    %v168 = vld [vmem:[#allocation2 + $0x18] sm:$0xff]
    %v169 = vld [vmem:[#allocation2 + $0x20] sm:$0xff]
    %v170 = vld [vmem:[#allocation2 + $0x28] sm:$0xff]
    %v171 = vld [vmem:[#allocation2 + $0x30] sm:$0xff]
    %v172 = vld [vmem:[#allocation2 + $0x38] sm:$0xff]
    %v173 = vld [vmem:[#allocation2 + $0x40] sm:$0xff]
    %v174 = vld [vmem:[#allocation2 + $0x48] sm:$0xff]
    %v175 = vld [vmem:[#allocation2 + $0x50] sm:$0xff]
    %v176 = vld [vmem:[#allocation2 + $0x58] sm:$0xff]
    %v177 = vld [vmem:[#allocation2 + $0x60] sm:$0xff]
    %v178 = vld [vmem:[#allocation2 + $0x68] sm:$0xff]
    %v179 = vld [vmem:[#allocation2 + $0x70] sm:$0xff]
    %v180 = vld [vmem:[#allocation2 + $0x78] sm:$0xff]
    %v181 = vunpack.c.l.s8.bf16 %v165
    %v182 = vunpack.c.l.s8.bf16 %v166
    %v183 = vunpack.c.h.s8.bf16 %v165
    %v184 = vunpack.c.h.s8.bf16 %v166
    %v185 = vunpack.c.l.s8.bf16 %v167
    %v186 = vunpack.c.l.s8.bf16 %v168
    %v187 = vunpack.c.h.s8.bf16 %v167
    %v188 = vunpack.c.h.s8.bf16 %v168
    %v189 = vunpack.c.l.s8.bf16 %v169
    %v190 = vunpack.c.l.s8.bf16 %v170
    %v191 = vunpack.c.h.s8.bf16 %v169
    %v192 = vunpack.c.h.s8.bf16 %v170
    %v193 = vunpack.c.l.s8.bf16 %v171
    %v194 = vunpack.c.l.s8.bf16 %v172
    %v195 = vunpack.c.h.s8.bf16 %v171
    %v196 = vunpack.c.h.s8.bf16 %v172
    %v197 = vunpack.c.l.s8.bf16 %v173
    %v198 = vunpack.c.l.s8.bf16 %v174
    %v199 = vunpack.c.h.s8.bf16 %v173
    %v200 = vunpack.c.h.s8.bf16 %v174
    %v201 = vunpack.c.l.s8.bf16 %v175
    %v202 = vunpack.c.l.s8.bf16 %v176
    %v203 = vunpack.c.h.s8.bf16 %v175
    %v204 = vunpack.c.h.s8.bf16 %v176
    %v205 = vunpack.c.l.s8.bf16 %v177
    %v206 = vunpack.c.l.s8.bf16 %v178
    %v207 = vunpack.c.h.s8.bf16 %v177
    %v208 = vunpack.c.h.s8.bf16 %v178
    %v209 = vunpack.c.l.s8.bf16 %v179
    %v210 = vunpack.c.l.s8.bf16 %v180
    %v211 = vunpack.c.h.s8.bf16 %v179
    %v212 = vunpack.c.h.s8.bf16 %v180
    %v214 = vunpack.c.l.b16 %v164
    %v215 = vunpack.c.h.b16 %v164
    %v216 = vpack.c.b16 %v214, %v214
    %v217 = vpack.c.b16 %v215, %v215
    %220 = vmatprep.subr.bf16.mxu0 %v196
    %221 = vmatpush1.bf16.msra.mxu0 %v195
    %222 = vmatprep.subr.bf16.mxu0 %v194
    %223 = vmatpush1.bf16.msra.mxu0 %v193
    %224 = vmatprep.subr.bf16.mxu0 %v192
    %225 = vmatpush1.bf16.msra.mxu0 %v191
    %226 = vmatprep.subr.bf16.mxu0 %v190
    %227 = vmatpush1.bf16.msra.mxu0 %v189
    %228 = vmatprep.subr.bf16.mxu0 %v188
    %229 = vmatpush1.bf16.msra.mxu0 %v187
    %230 = vmatprep.subr.bf16.mxu0 %v186
    %231 = vmatpush1.bf16.msra.mxu0 %v185
    %232 = vmatprep.subr.bf16.mxu0 %v184
    %233 = vmatpush1.bf16.msra.mxu0 %v183
    %234 = vmatprep.subr.bf16.mxu0 %v182
    %235 = vmatpush1.bf16.msra.mxu0 %v181
    %236 = vmatprep.subr.bf16.mxu0 %v212
    %237 = vmatpush2.bf16.msra.mxu0 %v211
    %238 = vmatprep.subr.bf16.mxu0 %v210
    %239 = vmatpush2.bf16.msra.mxu0 %v209
    %240 = vmatprep.subr.bf16.mxu0 %v208
    %241 = vmatpush2.bf16.msra.mxu0 %v207
    %242 = vmatprep.subr.bf16.mxu0 %v206
    %243 = vmatpush2.bf16.msra.mxu0 %v205
    %244 = vmatprep.subr.bf16.mxu0 %v204
    %245 = vmatpush2.bf16.msra.mxu0 %v203
    %246 = vmatprep.subr.bf16.mxu0 %v202
    %247 = vmatpush2.bf16.msra.mxu0 %v201
    %248 = vmatprep.subr.bf16.mxu0 %v200
    %249 = vmatpush2.bf16.msra.mxu0 %v199
    %250 = vmatprep.subr.bf16.mxu0 %v198
    %251 = vmatpush2.bf16.msra.mxu0 %v197
    %252 = vmatprep.mubr.bf16.mxu0 %v217
    %253 = vmatmul.mubr.bf16.gmra.mxu0 %v216
    %v254 = vpop.f32.mrf.mxu0
    %v255 = vadd.f32 0.0, %v254
    %v256 = vpop.f32.mrf.mxu0
    %v257 = vadd.f32 0.0, %v256
    %v258 = vpop.f32.mrf.mxu0
    %v259 = vpop.f32.mrf.mxu0
    %260 = vdwg.mxu0
    %v261 = vld [vmem:[#allocation4] sm:$0x3]
    %v263 = vlaneseq
    %v264 = vshrl.u32 %v263, 7
    %v265 = vsub.s32 0, %v264
    %v266 = vrot.slane %v261, %v265
    %v267 = vlaneseq
    %v268 = vshrl.u32 %v267, 7
    %v269 = vsub.s32 1, %v268
    %v270 = vrot.slane %v261, %v269
    %v273 = vmul.f32 %v255, %v266
    %v274 = vmul.f32 %v257, %v270
    %v275 = vld [vmem:[#allocation6] sm:$0x3]
    %v277 = vlaneseq
    %v278 = vshrl.u32 %v277, 7
    %v279 = vsub.s32 0, %v278
    %v280 = vrot.slane %v275, %v279
    %v281 = vlaneseq
    %v282 = vshrl.u32 %v281, 7
    %v283 = vsub.s32 1, %v282
    %v284 = vrot.slane %v275, %v283
    %v287 = vadd.f32 %v273, %v280
    %v288 = vadd.f32 %v274, %v284
    %v289 = vmax.f32 %v287, 0.0
    %v290 = vmax.f32 %v288, 0.0
    %v291 = vld [vmem:[#allocation7] sm:$0x3]
    %v293 = vlaneseq
    %v294 = vshrl.u32 %v293, 7
    %v295 = vsub.s32 0, %v294
    %v296 = vrot.slane %v291, %v295
    %v297 = vlaneseq
    %v298 = vshrl.u32 %v297, 7
    %v299 = vsub.s32 1, %v298
    %v300 = vrot.slane %v291, %v299
    %v303 = vmul.f32 %v289, %v296
    %v304 = vmul.f32 %v290, %v300
    %v305 = vld [vmem:[#allocation9] sm:$0x3]
    %v307 = vlaneseq
    %v308 = vshrl.u32 %v307, 7
    %v309 = vsub.s32 0, %v308
    %v310 = vrot.slane %v305, %v309
    %v311 = vlaneseq
    %v312 = vshrl.u32 %v311, 7
    %v313 = vsub.s32 1, %v312
    %v314 = vrot.slane %v305, %v313
    %v317 = vadd.f32 %v303, %v310
    %v318 = vadd.f32 %v304, %v314
    %v319 = vpack.c.bf16 %v317, %v317
    %v320 = vpack.c.bf16 %v318, %v318
    %v321 = vld [vmem:[#allocation10] sm:$0xff]
    %v322 = vld [vmem:[#allocation10 + $0x8] sm:$0xff]
    %v323 = vld [vmem:[#allocation10 + $0x10] sm:$0xff]
    %v324 = vld [vmem:[#allocation10 + $0x18] sm:$0xff]
    %v325 = vld [vmem:[#allocation10 + $0x20] sm:$0xff]
    %v326 = vld [vmem:[#allocation10 + $0x28] sm:$0xff]
    %v327 = vld [vmem:[#allocation10 + $0x30] sm:$0xff]
    %v328 = vld [vmem:[#allocation10 + $0x38] sm:$0xff]
    %v329 = vld [vmem:[#allocation10 + $0x40] sm:$0xff]
    %v330 = vld [vmem:[#allocation10 + $0x48] sm:$0xff]
    %v331 = vld [vmem:[#allocation10 + $0x50] sm:$0xff]
    %v332 = vld [vmem:[#allocation10 + $0x58] sm:$0xff]
    %v333 = vld [vmem:[#allocation10 + $0x60] sm:$0xff]
    %v334 = vld [vmem:[#allocation10 + $0x68] sm:$0xff]
    %v335 = vld [vmem:[#allocation10 + $0x70] sm:$0xff]
    %v336 = vld [vmem:[#allocation10 + $0x78] sm:$0xff]
    %v337 = vld [vmem:[#allocation10 + $0x80] sm:$0xff]
    %v338 = vld [vmem:[#allocation10 + $0x88] sm:$0xff]
    %v339 = vld [vmem:[#allocation10 + $0x90] sm:$0xff]
    %v340 = vld [vmem:[#allocation10 + $0x98] sm:$0xff]
    %v341 = vld [vmem:[#allocation10 + $0xa0] sm:$0xff]
    %v342 = vld [vmem:[#allocation10 + $0xa8] sm:$0xff]
    %v343 = vld [vmem:[#allocation10 + $0xb0] sm:$0xff]
    %v344 = vld [vmem:[#allocation10 + $0xb8] sm:$0xff]
    %v345 = vld [vmem:[#allocation10 + $0xc0] sm:$0xff]
    %v346 = vld [vmem:[#allocation10 + $0xc8] sm:$0xff]
    %v347 = vld [vmem:[#allocation10 + $0xd0] sm:$0xff]
    %v348 = vld [vmem:[#allocation10 + $0xd8] sm:$0xff]
    %v349 = vld [vmem:[#allocation10 + $0xe0] sm:$0xff]
    %v350 = vld [vmem:[#allocation10 + $0xe8] sm:$0xff]
    %v351 = vld [vmem:[#allocation10 + $0xf0] sm:$0xff]
    %v352 = vld [vmem:[#allocation10 + $0xf8] sm:$0xff]
    %v353 = vunpack.c.l.s8.bf16 %v321
    %v354 = vunpack.c.l.s8.bf16 %v322
    %v355 = vunpack.c.l.s8.bf16 %v323
    %v356 = vunpack.c.l.s8.bf16 %v324
    %v357 = vunpack.c.h.s8.bf16 %v321
    %v358 = vunpack.c.h.s8.bf16 %v322
    %v359 = vunpack.c.h.s8.bf16 %v323
    %v360 = vunpack.c.h.s8.bf16 %v324
    %v361 = vunpack.c.l.s8.bf16 %v325
    %v362 = vunpack.c.l.s8.bf16 %v326
    %v363 = vunpack.c.l.s8.bf16 %v327
    %v364 = vunpack.c.l.s8.bf16 %v328
    %v365 = vunpack.c.h.s8.bf16 %v325
    %v366 = vunpack.c.h.s8.bf16 %v326
    %v367 = vunpack.c.h.s8.bf16 %v327
    %v368 = vunpack.c.h.s8.bf16 %v328
    %v369 = vunpack.c.l.s8.bf16 %v329
    %v370 = vunpack.c.l.s8.bf16 %v330
    %v371 = vunpack.c.l.s8.bf16 %v331
    %v372 = vunpack.c.l.s8.bf16 %v332
    %v373 = vunpack.c.h.s8.bf16 %v329
    %v374 = vunpack.c.h.s8.bf16 %v330
    %v375 = vunpack.c.h.s8.bf16 %v331
    %v376 = vunpack.c.h.s8.bf16 %v332
    %v377 = vunpack.c.l.s8.bf16 %v333
    %v378 = vunpack.c.l.s8.bf16 %v334
    %v379 = vunpack.c.l.s8.bf16 %v335
    %v380 = vunpack.c.l.s8.bf16 %v336
    %v381 = vunpack.c.h.s8.bf16 %v333
    %v382 = vunpack.c.h.s8.bf16 %v334
    %v383 = vunpack.c.h.s8.bf16 %v335
    %v384 = vunpack.c.h.s8.bf16 %v336
    %v385 = vunpack.c.l.s8.bf16 %v337
    %v386 = vunpack.c.l.s8.bf16 %v338
    %v387 = vunpack.c.l.s8.bf16 %v339
    %v388 = vunpack.c.l.s8.bf16 %v340
    %v389 = vunpack.c.h.s8.bf16 %v337
    %v390 = vunpack.c.h.s8.bf16 %v338
    %v391 = vunpack.c.h.s8.bf16 %v339
    %v392 = vunpack.c.h.s8.bf16 %v340
    %v393 = vunpack.c.l.s8.bf16 %v341
    %v394 = vunpack.c.l.s8.bf16 %v342
    %v395 = vunpack.c.l.s8.bf16 %v343
    %v396 = vunpack.c.l.s8.bf16 %v344
    %v397 = vunpack.c.h.s8.bf16 %v341
    %v398 = vunpack.c.h.s8.bf16 %v342
    %v399 = vunpack.c.h.s8.bf16 %v343
    %v400 = vunpack.c.h.s8.bf16 %v344
    %v401 = vunpack.c.l.s8.bf16 %v345
    %v402 = vunpack.c.l.s8.bf16 %v346
    %v403 = vunpack.c.l.s8.bf16 %v347
    %v404 = vunpack.c.l.s8.bf16 %v348
    %v405 = vunpack.c.h.s8.bf16 %v345
    %v406 = vunpack.c.h.s8.bf16 %v346
    %v407 = vunpack.c.h.s8.bf16 %v347
    %v408 = vunpack.c.h.s8.bf16 %v348
    %v409 = vunpack.c.l.s8.bf16 %v349
    %v410 = vunpack.c.l.s8.bf16 %v350
    %v411 = vunpack.c.l.s8.bf16 %v351
    %v412 = vunpack.c.l.s8.bf16 %v352
    %v413 = vunpack.c.h.s8.bf16 %v349
    %v414 = vunpack.c.h.s8.bf16 %v350
    %v415 = vunpack.c.h.s8.bf16 %v351
    %v416 = vunpack.c.h.s8.bf16 %v352
    %417 = vmatprep.subr.bf16.mxu0 %v382
    %418 = vmatpush1.bf16.msra.mxu0 %v381
    %419 = vmatprep.subr.bf16.mxu0 %v378
    %420 = vmatpush1.bf16.msra.mxu0 %v377
    %421 = vmatprep.subr.bf16.mxu0 %v374
    %422 = vmatpush1.bf16.msra.mxu0 %v373
    %423 = vmatprep.subr.bf16.mxu0 %v370
    %424 = vmatpush1.bf16.msra.mxu0 %v369
    %425 = vmatprep.subr.bf16.mxu0 %v366
    %426 = vmatpush1.bf16.msra.mxu0 %v365
    %427 = vmatprep.subr.bf16.mxu0 %v362
    %428 = vmatpush1.bf16.msra.mxu0 %v361
    %429 = vmatprep.subr.bf16.mxu0 %v358
    %430 = vmatpush1.bf16.msra.mxu0 %v357
    %431 = vmatprep.subr.bf16.mxu0 %v354
    %432 = vmatpush1.bf16.msra.mxu0 %v353
    %433 = vmatprep.subr.bf16.mxu0 %v414
    %434 = vmatpush2.bf16.msra.mxu0 %v413
    %435 = vmatprep.subr.bf16.mxu0 %v410
    %436 = vmatpush2.bf16.msra.mxu0 %v409
    %437 = vmatprep.subr.bf16.mxu0 %v406
    %438 = vmatpush2.bf16.msra.mxu0 %v405
    %439 = vmatprep.subr.bf16.mxu0 %v402
    %440 = vmatpush2.bf16.msra.mxu0 %v401
    %441 = vmatprep.subr.bf16.mxu0 %v398
    %442 = vmatpush2.bf16.msra.mxu0 %v397
    %443 = vmatprep.subr.bf16.mxu0 %v394
    %444 = vmatpush2.bf16.msra.mxu0 %v393
    %445 = vmatprep.subr.bf16.mxu0 %v390
    %446 = vmatpush2.bf16.msra.mxu0 %v389
    %447 = vmatprep.subr.bf16.mxu0 %v386
    %448 = vmatpush2.bf16.msra.mxu0 %v385
    %449 = vmatprep.mubr.bf16.mxu0 %v320
    %450 = vmatmul.mubr.bf16.gmra.mxu0 %v319
    %v451 = vpop.f32.mrf.mxu0
    %v452 = vadd.f32 0.0, %v451
    %v453 = vpop.f32.mrf.mxu0
    %v454 = vadd.f32 0.0, %v453
    %v455 = vpop.f32.mrf.mxu0
    %v456 = vpop.f32.mrf.mxu0
    %457 = vdwg.mxu0
    %458 = vmatprep.subr.bf16.mxu0 %v384
    %459 = vmatpush1.bf16.msra.mxu0 %v383
    %460 = vmatprep.subr.bf16.mxu0 %v380
    %461 = vmatpush1.bf16.msra.mxu0 %v379
    %462 = vmatprep.subr.bf16.mxu0 %v376
    %463 = vmatpush1.bf16.msra.mxu0 %v375
    %464 = vmatprep.subr.bf16.mxu0 %v372
    %465 = vmatpush1.bf16.msra.mxu0 %v371
    %466 = vmatprep.subr.bf16.mxu0 %v368
    %467 = vmatpush1.bf16.msra.mxu0 %v367
    %468 = vmatprep.subr.bf16.mxu0 %v364
    %469 = vmatpush1.bf16.msra.mxu0 %v363
    %470 = vmatprep.subr.bf16.mxu0 %v360
    %471 = vmatpush1.bf16.msra.mxu0 %v359
    %472 = vmatprep.subr.bf16.mxu0 %v356
    %473 = vmatpush1.bf16.msra.mxu0 %v355
    %474 = vmatprep.subr.bf16.mxu0 %v416
    %475 = vmatpush2.bf16.msra.mxu0 %v415
    %476 = vmatprep.subr.bf16.mxu0 %v412
    %477 = vmatpush2.bf16.msra.mxu0 %v411
    %478 = vmatprep.subr.bf16.mxu0 %v408
    %479 = vmatpush2.bf16.msra.mxu0 %v407
    %480 = vmatprep.subr.bf16.mxu0 %v404
    %481 = vmatpush2.bf16.msra.mxu0 %v403
    %482 = vmatprep.subr.bf16.mxu0 %v400
    %483 = vmatpush2.bf16.msra.mxu0 %v399
    %484 = vmatprep.subr.bf16.mxu0 %v396
    %485 = vmatpush2.bf16.msra.mxu0 %v395
    %486 = vmatprep.subr.bf16.mxu0 %v392
    %487 = vmatpush2.bf16.msra.mxu0 %v391
    %488 = vmatprep.subr.bf16.mxu0 %v388
    %489 = vmatpush2.bf16.msra.mxu0 %v387
    %490 = vmatprep.mubr.bf16.mxu0 %v320
    %491 = vmatmul.mubr.bf16.gmra.mxu0 %v319
    %v492 = vpop.f32.mrf.mxu0
    %v493 = vadd.f32 0.0, %v492
    %v494 = vpop.f32.mrf.mxu0
    %v495 = vadd.f32 0.0, %v494
    %v496 = vpop.f32.mrf.mxu0
    %v497 = vpop.f32.mrf.mxu0
    %498 = vdwg.mxu0
    %v499 = vld [vmem:[%s7] sm:$0xf]
    %v501 = vlaneseq
    %v502 = vshrl.u32 %v501, 7
    %v503 = vsub.s32 0, %v502
    %v504 = vrot.slane %v499, %v503
    %v505 = vlaneseq
    %v506 = vshrl.u32 %v505, 7
    %v507 = vsub.s32 1, %v506
    %v508 = vrot.slane %v499, %v507
    %v509 = vlaneseq
    %v510 = vshrl.u32 %v509, 7
    %v511 = vsub.s32 2, %v510
    %v512 = vrot.slane %v499, %v511
    %v513 = vlaneseq
    %v514 = vshrl.u32 %v513, 7
    %v515 = vsub.s32 3, %v514
    %v516 = vrot.slane %v499, %v515
    %v521 = vmul.f32 %v452, %v504
    %v522 = vmul.f32 %v454, %v508
    %v523 = vmul.f32 %v493, %v512
    %v524 = vmul.f32 %v495, %v516
    %v525 = vld [vmem:[%s8] sm:$0xf]
    %v527 = vlaneseq
    %v528 = vshrl.u32 %v527, 7
    %v529 = vsub.s32 0, %v528
    %v530 = vrot.slane %v525, %v529
    %v531 = vlaneseq
    %v532 = vshrl.u32 %v531, 7
    %v533 = vsub.s32 1, %v532
    %v534 = vrot.slane %v525, %v533
    %v535 = vlaneseq
    %v536 = vshrl.u32 %v535, 7
    %v537 = vsub.s32 2, %v536
    %v538 = vrot.slane %v525, %v537
    %v539 = vlaneseq
    %v540 = vshrl.u32 %v539, 7
    %v541 = vsub.s32 3, %v540
    %v542 = vrot.slane %v525, %v541
    %v547 = vadd.f32 %v521, %v530
    %v548 = vadd.f32 %v522, %v534
    %v549 = vadd.f32 %v523, %v538
    %v550 = vadd.f32 %v524, %v542
    %v551 = vmax.f32 %v547, 0.0
    %v552 = vmax.f32 %v548, 0.0
    %v553 = vmax.f32 %v549, 0.0
    %v554 = vmax.f32 %v550, 0.0
    %v555 = vld [vmem:[%s9] sm:$0xf]
    %v557 = vlaneseq
    %v558 = vshrl.u32 %v557, 7
    %v559 = vsub.s32 0, %v558
    %v560 = vrot.slane %v555, %v559
    %v561 = vlaneseq
    %v562 = vshrl.u32 %v561, 7
    %v563 = vsub.s32 1, %v562
    %v564 = vrot.slane %v555, %v563
    %v565 = vlaneseq
    %v566 = vshrl.u32 %v565, 7
    %v567 = vsub.s32 2, %v566
    %v568 = vrot.slane %v555, %v567
    %v569 = vlaneseq
    %v570 = vshrl.u32 %v569, 7
    %v571 = vsub.s32 3, %v570
    %v572 = vrot.slane %v555, %v571
    %v577 = vmul.f32 %v551, %v560
    %v578 = vmul.f32 %v552, %v564
    %v579 = vmul.f32 %v553, %v568
    %v580 = vmul.f32 %v554, %v572
    %v581 = vld [vmem:[%s10] sm:$0xf]
    %v583 = vlaneseq
    %v584 = vshrl.u32 %v583, 7
    %v585 = vsub.s32 0, %v584
    %v586 = vrot.slane %v581, %v585
    %v587 = vlaneseq
    %v588 = vshrl.u32 %v587, 7
    %v589 = vsub.s32 1, %v588
    %v590 = vrot.slane %v581, %v589
    %v591 = vlaneseq
    %v592 = vshrl.u32 %v591, 7
    %v593 = vsub.s32 2, %v592
    %v594 = vrot.slane %v581, %v593
    %v595 = vlaneseq
    %v596 = vshrl.u32 %v595, 7
    %v597 = vsub.s32 3, %v596
    %v598 = vrot.slane %v581, %v597
    %v603 = vadd.f32 %v577, %v586
    %v604 = vadd.f32 %v578, %v590
    %v605 = vadd.f32 %v579, %v594
    %v606 = vadd.f32 %v580, %v598
    %v607 = vpack.c.bf16 %v603, %v603
    %v608 = vpack.c.bf16 %v604, %v604
    %v609 = vpack.c.bf16 %v605, %v605
    %v610 = vpack.c.bf16 %v606, %v606
    %v611 = vld [vmem:[#allocation12] sm:$0xff]
    %v612 = vld [vmem:[#allocation12 + $0x8] sm:$0xff]
    %v613 = vld [vmem:[#allocation12 + $0x10] sm:$0xff]
    %v614 = vld [vmem:[#allocation12 + $0x18] sm:$0xff]
    %v615 = vld [vmem:[#allocation12 + $0x20] sm:$0xff]
    %v616 = vld [vmem:[#allocation12 + $0x28] sm:$0xff]
    %v617 = vld [vmem:[#allocation12 + $0x30] sm:$0xff]
    %v618 = vld [vmem:[#allocation12 + $0x38] sm:$0xff]
    %v619 = vld [vmem:[#allocation12 + $0x40] sm:$0xff]
    %v620 = vld [vmem:[#allocation12 + $0x48] sm:$0xff]
    %v621 = vld [vmem:[#allocation12 + $0x50] sm:$0xff]
    %v622 = vld [vmem:[#allocation12 + $0x58] sm:$0xff]
    %v623 = vld [vmem:[#allocation12 + $0x60] sm:$0xff]
    %v624 = vld [vmem:[#allocation12 + $0x68] sm:$0xff]
    %v625 = vld [vmem:[#allocation12 + $0x70] sm:$0xff]
    %v626 = vld [vmem:[#allocation12 + $0x78] sm:$0xff]
    %v627 = vld [vmem:[#allocation12 + $0x80] sm:$0xff]
    %v628 = vld [vmem:[#allocation12 + $0x88] sm:$0xff]
    %v629 = vld [vmem:[#allocation12 + $0x90] sm:$0xff]
    %v630 = vld [vmem:[#allocation12 + $0x98] sm:$0xff]
    %v631 = vld [vmem:[#allocation12 + $0xa0] sm:$0xff]
    %v632 = vld [vmem:[#allocation12 + $0xa8] sm:$0xff]
    %v633 = vld [vmem:[#allocation12 + $0xb0] sm:$0xff]
    %v634 = vld [vmem:[#allocation12 + $0xb8] sm:$0xff]
    %v635 = vld [vmem:[#allocation12 + $0xc0] sm:$0xff]
    %v636 = vld [vmem:[#allocation12 + $0xc8] sm:$0xff]
    %v637 = vld [vmem:[#allocation12 + $0xd0] sm:$0xff]
    %v638 = vld [vmem:[#allocation12 + $0xd8] sm:$0xff]
    %v639 = vld [vmem:[#allocation12 + $0xe0] sm:$0xff]
    %v640 = vld [vmem:[#allocation12 + $0xe8] sm:$0xff]
    %v641 = vld [vmem:[#allocation12 + $0xf0] sm:$0xff]
    %v642 = vld [vmem:[#allocation12 + $0xf8] sm:$0xff]
    %v643 = vunpack.c.l.s8.bf16 %v611
    %v644 = vunpack.c.l.s8.bf16 %v612
    %v645 = vunpack.c.h.s8.bf16 %v611
    %v646 = vunpack.c.h.s8.bf16 %v612
    %v647 = vunpack.c.l.s8.bf16 %v613
    %v648 = vunpack.c.l.s8.bf16 %v614
    %v649 = vunpack.c.h.s8.bf16 %v613
    %v650 = vunpack.c.h.s8.bf16 %v614
    %v651 = vunpack.c.l.s8.bf16 %v615
    %v652 = vunpack.c.l.s8.bf16 %v616
    %v653 = vunpack.c.h.s8.bf16 %v615
    %v654 = vunpack.c.h.s8.bf16 %v616
    %v655 = vunpack.c.l.s8.bf16 %v617
    %v656 = vunpack.c.l.s8.bf16 %v618
    %v657 = vunpack.c.h.s8.bf16 %v617
    %v658 = vunpack.c.h.s8.bf16 %v618
    %v659 = vunpack.c.l.s8.bf16 %v619
    %v660 = vunpack.c.l.s8.bf16 %v620
    %v661 = vunpack.c.h.s8.bf16 %v619
    %v662 = vunpack.c.h.s8.bf16 %v620
    %v663 = vunpack.c.l.s8.bf16 %v621
    %v664 = vunpack.c.l.s8.bf16 %v622
    %v665 = vunpack.c.h.s8.bf16 %v621
    %v666 = vunpack.c.h.s8.bf16 %v622
    %v667 = vunpack.c.l.s8.bf16 %v623
    %v668 = vunpack.c.l.s8.bf16 %v624
    %v669 = vunpack.c.h.s8.bf16 %v623
    %v670 = vunpack.c.h.s8.bf16 %v624
    %v671 = vunpack.c.l.s8.bf16 %v625
    %v672 = vunpack.c.l.s8.bf16 %v626
    %v673 = vunpack.c.h.s8.bf16 %v625
    %v674 = vunpack.c.h.s8.bf16 %v626
    %v675 = vunpack.c.l.s8.bf16 %v627
    %v676 = vunpack.c.l.s8.bf16 %v628
    %v677 = vunpack.c.h.s8.bf16 %v627
    %v678 = vunpack.c.h.s8.bf16 %v628
    %v679 = vunpack.c.l.s8.bf16 %v629
    %v680 = vunpack.c.l.s8.bf16 %v630
    %v681 = vunpack.c.h.s8.bf16 %v629
    %v682 = vunpack.c.h.s8.bf16 %v630
    %v683 = vunpack.c.l.s8.bf16 %v631
    %v684 = vunpack.c.l.s8.bf16 %v632
    %v685 = vunpack.c.h.s8.bf16 %v631
    %v686 = vunpack.c.h.s8.bf16 %v632
    %v687 = vunpack.c.l.s8.bf16 %v633
    %v688 = vunpack.c.l.s8.bf16 %v634
    %v689 = vunpack.c.h.s8.bf16 %v633
    %v690 = vunpack.c.h.s8.bf16 %v634
    %v691 = vunpack.c.l.s8.bf16 %v635
    %v692 = vunpack.c.l.s8.bf16 %v636
    %v693 = vunpack.c.h.s8.bf16 %v635
    %v694 = vunpack.c.h.s8.bf16 %v636
    %v695 = vunpack.c.l.s8.bf16 %v637
    %v696 = vunpack.c.l.s8.bf16 %v638
    %v697 = vunpack.c.h.s8.bf16 %v637
    %v698 = vunpack.c.h.s8.bf16 %v638
    %v699 = vunpack.c.l.s8.bf16 %v639
    %v700 = vunpack.c.l.s8.bf16 %v640
    %v701 = vunpack.c.h.s8.bf16 %v639
    %v702 = vunpack.c.h.s8.bf16 %v640
    %v703 = vunpack.c.l.s8.bf16 %v641
    %v704 = vunpack.c.l.s8.bf16 %v642
    %v705 = vunpack.c.h.s8.bf16 %v641
    %v706 = vunpack.c.h.s8.bf16 %v642
    %707 = vmatprep.subr.bf16.mxu0 %v658
    %708 = vmatpush1.bf16.msra.mxu0 %v657
    %709 = vmatprep.subr.bf16.mxu0 %v656
    %710 = vmatpush1.bf16.msra.mxu0 %v655
    %711 = vmatprep.subr.bf16.mxu0 %v654
    %712 = vmatpush1.bf16.msra.mxu0 %v653
    %713 = vmatprep.subr.bf16.mxu0 %v652
    %714 = vmatpush1.bf16.msra.mxu0 %v651
    %715 = vmatprep.subr.bf16.mxu0 %v650
    %716 = vmatpush1.bf16.msra.mxu0 %v649
    %717 = vmatprep.subr.bf16.mxu0 %v648
    %718 = vmatpush1.bf16.msra.mxu0 %v647
    %719 = vmatprep.subr.bf16.mxu0 %v646
    %720 = vmatpush1.bf16.msra.mxu0 %v645
    %721 = vmatprep.subr.bf16.mxu0 %v644
    %722 = vmatpush1.bf16.msra.mxu0 %v643
    %723 = vmatprep.subr.bf16.mxu0 %v674
    %724 = vmatpush2.bf16.msra.mxu0 %v673
    %725 = vmatprep.subr.bf16.mxu0 %v672
    %726 = vmatpush2.bf16.msra.mxu0 %v671
    %727 = vmatprep.subr.bf16.mxu0 %v670
    %728 = vmatpush2.bf16.msra.mxu0 %v669
    %729 = vmatprep.subr.bf16.mxu0 %v668
    %730 = vmatpush2.bf16.msra.mxu0 %v667
    %731 = vmatprep.subr.bf16.mxu0 %v666
    %732 = vmatpush2.bf16.msra.mxu0 %v665
    %733 = vmatprep.subr.bf16.mxu0 %v664
    %734 = vmatpush2.bf16.msra.mxu0 %v663
    %735 = vmatprep.subr.bf16.mxu0 %v662
    %736 = vmatpush2.bf16.msra.mxu0 %v661
    %737 = vmatprep.subr.bf16.mxu0 %v660
    %738 = vmatpush2.bf16.msra.mxu0 %v659
    %739 = vmatprep.mubr.bf16.mxu0 %v608
    %740 = vmatmul.mubr.bf16.gmra.mxu0 %v607
    %v741 = vpop.f32.mrf.mxu0
    %v742 = vadd.f32 0.0, %v741
    %v743 = vpop.f32.mrf.mxu0
    %v744 = vadd.f32 0.0, %v743
    %v745 = vpop.f32.mrf.mxu0
    %v746 = vpop.f32.mrf.mxu0
    %747 = vdwg.mxu0
    %748 = vmatprep.subr.bf16.mxu0 %v690
    %749 = vmatpush1.bf16.msra.mxu0 %v689
    %750 = vmatprep.subr.bf16.mxu0 %v688
    %751 = vmatpush1.bf16.msra.mxu0 %v687
    %752 = vmatprep.subr.bf16.mxu0 %v686
    %753 = vmatpush1.bf16.msra.mxu0 %v685
    %754 = vmatprep.subr.bf16.mxu0 %v684
    %755 = vmatpush1.bf16.msra.mxu0 %v683
    %756 = vmatprep.subr.bf16.mxu0 %v682
    %757 = vmatpush1.bf16.msra.mxu0 %v681
    %758 = vmatprep.subr.bf16.mxu0 %v680
    %759 = vmatpush1.bf16.msra.mxu0 %v679
    %760 = vmatprep.subr.bf16.mxu0 %v678
    %761 = vmatpush1.bf16.msra.mxu0 %v677
    %762 = vmatprep.subr.bf16.mxu0 %v676
    %763 = vmatpush1.bf16.msra.mxu0 %v675
    %764 = vmatprep.subr.bf16.mxu0 %v706
    %765 = vmatpush2.bf16.msra.mxu0 %v705
    %766 = vmatprep.subr.bf16.mxu0 %v704
    %767 = vmatpush2.bf16.msra.mxu0 %v703
    %768 = vmatprep.subr.bf16.mxu0 %v702
    %769 = vmatpush2.bf16.msra.mxu0 %v701
    %770 = vmatprep.subr.bf16.mxu0 %v700
    %771 = vmatpush2.bf16.msra.mxu0 %v699
    %772 = vmatprep.subr.bf16.mxu0 %v698
    %773 = vmatpush2.bf16.msra.mxu0 %v697
    %774 = vmatprep.subr.bf16.mxu0 %v696
    %775 = vmatpush2.bf16.msra.mxu0 %v695
    %776 = vmatprep.subr.bf16.mxu0 %v694
    %777 = vmatpush2.bf16.msra.mxu0 %v693
    %778 = vmatprep.subr.bf16.mxu0 %v692
    %779 = vmatpush2.bf16.msra.mxu0 %v691
    %780 = vmatprep.mubr.bf16.mxu0 %v610
    %781 = vmatmul.mubr.bf16.gmra.mxu0 %v609
    %v782 = vpop.f32.mrf.mxu0
    %v783 = vadd.f32 %v742, %v782
    %v784 = vpop.f32.mrf.mxu0
    %v785 = vadd.f32 %v744, %v784
    %v786 = vpop.f32.mrf.mxu0
    %v787 = vpop.f32.mrf.mxu0
    %788 = vdwg.mxu0
    %v789 = vld [vmem:[%s12] sm:$0x3]
    %v791 = vlaneseq
    %v792 = vshrl.u32 %v791, 7
    %v793 = vsub.s32 0, %v792
    %v794 = vrot.slane %v789, %v793
    %v795 = vlaneseq
    %v796 = vshrl.u32 %v795, 7
    %v797 = vsub.s32 1, %v796
    %v798 = vrot.slane %v789, %v797
    %v801 = vmul.f32 %v783, %v794
    %v802 = vmul.f32 %v785, %v798
    %v803 = vld [vmem:[%s13] sm:$0x3]
    %v805 = vlaneseq
    %v806 = vshrl.u32 %v805, 7
    %v807 = vsub.s32 0, %v806
    %v808 = vrot.slane %v803, %v807
    %v809 = vlaneseq
    %v810 = vshrl.u32 %v809, 7
    %v811 = vsub.s32 1, %v810
    %v812 = vrot.slane %v803, %v811
    %v815 = vadd.f32 %v801, %v808
    %v816 = vadd.f32 %v802, %v812
    %v817 = vmax.f32 %v815, 0.0
    %v818 = vmax.f32 %v816, 0.0
    %v819 = vld [vmem:[%s14] sm:$0x3]
    %v821 = vlaneseq
    %v822 = vshrl.u32 %v821, 7
    %v823 = vsub.s32 0, %v822
    %v824 = vrot.slane %v819, %v823
    %v825 = vlaneseq
    %v826 = vshrl.u32 %v825, 7
    %v827 = vsub.s32 1, %v826
    %v828 = vrot.slane %v819, %v827
    %v831 = vmul.f32 %v817, %v824
    %v832 = vmul.f32 %v818, %v828
    %v833 = vld [vmem:[%s15] sm:$0x3]
    %v835 = vlaneseq
    %v836 = vshrl.u32 %v835, 7
    %v837 = vsub.s32 0, %v836
    %v838 = vrot.slane %v833, %v837
    %v839 = vlaneseq
    %v840 = vshrl.u32 %v839, 7
    %v841 = vsub.s32 1, %v840
    %v842 = vrot.slane %v833, %v841
    %v845 = vadd.f32 %v831, %v838
    %v846 = vadd.f32 %v832, %v842
    %v847 = vpack.c.bf16 %v845, %v845
    %v848 = vpack.c.bf16 %v846, %v846
    %v849 = vld [vmem:[#allocation13] sm:$0xff]
    %v850 = vld [vmem:[#allocation13 + $0x8] sm:$0xff]
    %v851 = vld [vmem:[#allocation13 + $0x10] sm:$0xff]
    %v852 = vld [vmem:[#allocation13 + $0x18] sm:$0xff]
    %v853 = vld [vmem:[#allocation13 + $0x20] sm:$0xff]
    %v854 = vld [vmem:[#allocation13 + $0x28] sm:$0xff]
    %v855 = vld [vmem:[#allocation13 + $0x30] sm:$0xff]
    %v856 = vld [vmem:[#allocation13 + $0x38] sm:$0xff]
    %v857 = vld [vmem:[#allocation13 + $0x40] sm:$0xff]
    %v858 = vld [vmem:[#allocation13 + $0x48] sm:$0xff]
    %v859 = vld [vmem:[#allocation13 + $0x50] sm:$0xff]
    %v860 = vld [vmem:[#allocation13 + $0x58] sm:$0xff]
    %v861 = vld [vmem:[#allocation13 + $0x60] sm:$0xff]
    %v862 = vld [vmem:[#allocation13 + $0x68] sm:$0xff]
    %v863 = vld [vmem:[#allocation13 + $0x70] sm:$0xff]
    %v864 = vld [vmem:[#allocation13 + $0x78] sm:$0xff]
    %v865 = vld [vmem:[#allocation13 + $0x80] sm:$0xff]
    %v866 = vld [vmem:[#allocation13 + $0x88] sm:$0xff]
    %v867 = vld [vmem:[#allocation13 + $0x90] sm:$0xff]
    %v868 = vld [vmem:[#allocation13 + $0x98] sm:$0xff]
    %v869 = vld [vmem:[#allocation13 + $0xa0] sm:$0xff]
    %v870 = vld [vmem:[#allocation13 + $0xa8] sm:$0xff]
    %v871 = vld [vmem:[#allocation13 + $0xb0] sm:$0xff]
    %v872 = vld [vmem:[#allocation13 + $0xb8] sm:$0xff]
    %v873 = vld [vmem:[#allocation13 + $0xc0] sm:$0xff]
    %v874 = vld [vmem:[#allocation13 + $0xc8] sm:$0xff]
    %v875 = vld [vmem:[#allocation13 + $0xd0] sm:$0xff]
    %v876 = vld [vmem:[#allocation13 + $0xd8] sm:$0xff]
    %v877 = vld [vmem:[#allocation13 + $0xe0] sm:$0xff]
    %v878 = vld [vmem:[#allocation13 + $0xe8] sm:$0xff]
    %v879 = vld [vmem:[#allocation13 + $0xf0] sm:$0xff]
    %v880 = vld [vmem:[#allocation13 + $0xf8] sm:$0xff]
    %v881 = vld [vmem:[#allocation13 + $0x100] sm:$0xff]
    %v882 = vld [vmem:[#allocation13 + $0x108] sm:$0xff]
    %v883 = vld [vmem:[#allocation13 + $0x110] sm:$0xff]
    %v884 = vld [vmem:[#allocation13 + $0x118] sm:$0xff]
    %v885 = vld [vmem:[#allocation13 + $0x120] sm:$0xff]
    %v886 = vld [vmem:[#allocation13 + $0x128] sm:$0xff]
    %v887 = vld [vmem:[#allocation13 + $0x130] sm:$0xff]
    %v888 = vld [vmem:[#allocation13 + $0x138] sm:$0xff]
    %v889 = vld [vmem:[#allocation13 + $0x140] sm:$0xff]
    %v890 = vld [vmem:[#allocation13 + $0x148] sm:$0xff]
    %v891 = vld [vmem:[#allocation13 + $0x150] sm:$0xff]
    %v892 = vld [vmem:[#allocation13 + $0x158] sm:$0xff]
    %v893 = vld [vmem:[#allocation13 + $0x160] sm:$0xff]
    %v894 = vld [vmem:[#allocation13 + $0x168] sm:$0xff]
    %v895 = vld [vmem:[#allocation13 + $0x170] sm:$0xff]
    %v896 = vld [vmem:[#allocation13 + $0x178] sm:$0xff]
    %v897 = vld [vmem:[#allocation13 + $0x180] sm:$0xff]
    %v898 = vld [vmem:[#allocation13 + $0x188] sm:$0xff]
    %v899 = vld [vmem:[#allocation13 + $0x190] sm:$0xff]
    %v900 = vld [vmem:[#allocation13 + $0x198] sm:$0xff]
    %v901 = vld [vmem:[#allocation13 + $0x1a0] sm:$0xff]
    %v902 = vld [vmem:[#allocation13 + $0x1a8] sm:$0xff]
    %v903 = vld [vmem:[#allocation13 + $0x1b0] sm:$0xff]
    %v904 = vld [vmem:[#allocation13 + $0x1b8] sm:$0xff]
    %v905 = vunpack.c.l.s8.bf16 %v849
    %v906 = vunpack.c.l.s8.bf16 %v850
    %v907 = vunpack.c.l.s8.bf16 %v851
    %v908 = vunpack.c.l.s8.bf16 %v852
    %v909 = vunpack.c.l.s8.bf16 %v853
    %v910 = vunpack.c.l.s8.bf16 %v854
    %v911 = vunpack.c.l.s8.bf16 %v855
    %v912 = vunpack.c.h.s8.bf16 %v849
    %v913 = vunpack.c.h.s8.bf16 %v850
    %v914 = vunpack.c.h.s8.bf16 %v851
    %v915 = vunpack.c.h.s8.bf16 %v852
    %v916 = vunpack.c.h.s8.bf16 %v853
    %v917 = vunpack.c.h.s8.bf16 %v854
    %v918 = vunpack.c.h.s8.bf16 %v855
    %v919 = vunpack.c.l.s8.bf16 %v856
    %v920 = vunpack.c.l.s8.bf16 %v857
    %v921 = vunpack.c.l.s8.bf16 %v858
    %v922 = vunpack.c.l.s8.bf16 %v859
    %v923 = vunpack.c.l.s8.bf16 %v860
    %v924 = vunpack.c.l.s8.bf16 %v861
    %v925 = vunpack.c.l.s8.bf16 %v862
    %v926 = vunpack.c.h.s8.bf16 %v856
    %v927 = vunpack.c.h.s8.bf16 %v857
    %v928 = vunpack.c.h.s8.bf16 %v858
    %v929 = vunpack.c.h.s8.bf16 %v859
    %v930 = vunpack.c.h.s8.bf16 %v860
    %v931 = vunpack.c.h.s8.bf16 %v861
    %v932 = vunpack.c.h.s8.bf16 %v862
    %v933 = vunpack.c.l.s8.bf16 %v863
    %v934 = vunpack.c.l.s8.bf16 %v864
    %v935 = vunpack.c.l.s8.bf16 %v865
    %v936 = vunpack.c.l.s8.bf16 %v866
    %v937 = vunpack.c.l.s8.bf16 %v867
    %v938 = vunpack.c.l.s8.bf16 %v868
    %v939 = vunpack.c.l.s8.bf16 %v869
    %v940 = vunpack.c.h.s8.bf16 %v863
    %v941 = vunpack.c.h.s8.bf16 %v864
    %v942 = vunpack.c.h.s8.bf16 %v865
    %v943 = vunpack.c.h.s8.bf16 %v866
    %v944 = vunpack.c.h.s8.bf16 %v867
    %v945 = vunpack.c.h.s8.bf16 %v868
    %v946 = vunpack.c.h.s8.bf16 %v869
    %v947 = vunpack.c.l.s8.bf16 %v870
    %v948 = vunpack.c.l.s8.bf16 %v871
    %v949 = vunpack.c.l.s8.bf16 %v872
    %v950 = vunpack.c.l.s8.bf16 %v873
    %v951 = vunpack.c.l.s8.bf16 %v874
    %v952 = vunpack.c.l.s8.bf16 %v875
    %v953 = vunpack.c.l.s8.bf16 %v876
    %v954 = vunpack.c.h.s8.bf16 %v870
    %v955 = vunpack.c.h.s8.bf16 %v871
    %v956 = vunpack.c.h.s8.bf16 %v872
    %v957 = vunpack.c.h.s8.bf16 %v873
    %v958 = vunpack.c.h.s8.bf16 %v874
    %v959 = vunpack.c.h.s8.bf16 %v875
    %v960 = vunpack.c.h.s8.bf16 %v876
    %v961 = vunpack.c.l.s8.bf16 %v877
    %v962 = vunpack.c.l.s8.bf16 %v878
    %v963 = vunpack.c.l.s8.bf16 %v879
    %v964 = vunpack.c.l.s8.bf16 %v880
    %v965 = vunpack.c.l.s8.bf16 %v881
    %v966 = vunpack.c.l.s8.bf16 %v882
    %v967 = vunpack.c.l.s8.bf16 %v883
    %v968 = vunpack.c.h.s8.bf16 %v877
    %v969 = vunpack.c.h.s8.bf16 %v878
    %v970 = vunpack.c.h.s8.bf16 %v879
    %v971 = vunpack.c.h.s8.bf16 %v880
    %v972 = vunpack.c.h.s8.bf16 %v881
    %v973 = vunpack.c.h.s8.bf16 %v882
    %v974 = vunpack.c.h.s8.bf16 %v883
    %v975 = vunpack.c.l.s8.bf16 %v884
    %v976 = vunpack.c.l.s8.bf16 %v885
    %v977 = vunpack.c.l.s8.bf16 %v886
    %v978 = vunpack.c.l.s8.bf16 %v887
    %v979 = vunpack.c.l.s8.bf16 %v888
    %v980 = vunpack.c.l.s8.bf16 %v889
    %v981 = vunpack.c.l.s8.bf16 %v890
    %v982 = vunpack.c.h.s8.bf16 %v884
    %v983 = vunpack.c.h.s8.bf16 %v885
    %v984 = vunpack.c.h.s8.bf16 %v886
    %v985 = vunpack.c.h.s8.bf16 %v887
    %v986 = vunpack.c.h.s8.bf16 %v888
    %v987 = vunpack.c.h.s8.bf16 %v889
    %v988 = vunpack.c.h.s8.bf16 %v890
    %v989 = vunpack.c.l.s8.bf16 %v891
    %v990 = vunpack.c.l.s8.bf16 %v892
    %v991 = vunpack.c.l.s8.bf16 %v893
    %v992 = vunpack.c.l.s8.bf16 %v894
    %v993 = vunpack.c.l.s8.bf16 %v895
    %v994 = vunpack.c.l.s8.bf16 %v896
    %v995 = vunpack.c.l.s8.bf16 %v897
    %v996 = vunpack.c.h.s8.bf16 %v891
    %v997 = vunpack.c.h.s8.bf16 %v892
    %v998 = vunpack.c.h.s8.bf16 %v893
    %v999 = vunpack.c.h.s8.bf16 %v894
    %v1000 = vunpack.c.h.s8.bf16 %v895
    %v1001 = vunpack.c.h.s8.bf16 %v896
    %v1002 = vunpack.c.h.s8.bf16 %v897
    %v1003 = vunpack.c.l.s8.bf16 %v898
    %v1004 = vunpack.c.l.s8.bf16 %v899
    %v1005 = vunpack.c.l.s8.bf16 %v900
    %v1006 = vunpack.c.l.s8.bf16 %v901
    %v1007 = vunpack.c.l.s8.bf16 %v902
    %v1008 = vunpack.c.l.s8.bf16 %v903
    %v1009 = vunpack.c.l.s8.bf16 %v904
    %v1010 = vunpack.c.h.s8.bf16 %v898
    %v1011 = vunpack.c.h.s8.bf16 %v899
    %v1012 = vunpack.c.h.s8.bf16 %v900
    %v1013 = vunpack.c.h.s8.bf16 %v901
    %v1014 = vunpack.c.h.s8.bf16 %v902
    %v1015 = vunpack.c.h.s8.bf16 %v903
    %v1016 = vunpack.c.h.s8.bf16 %v904
    %1017 = vmatprep.subr.bf16.mxu0 %v955
    %1018 = vmatpush1.bf16.msra.mxu0 %v954
    %1019 = vmatprep.subr.bf16.mxu0 %v948
    %1020 = vmatpush1.bf16.msra.mxu0 %v947
    %1021 = vmatprep.subr.bf16.mxu0 %v941
    %1022 = vmatpush1.bf16.msra.mxu0 %v940
    %1023 = vmatprep.subr.bf16.mxu0 %v934
    %1024 = vmatpush1.bf16.msra.mxu0 %v933
    %1025 = vmatprep.subr.bf16.mxu0 %v927
    %1026 = vmatpush1.bf16.msra.mxu0 %v926
    %1027 = vmatprep.subr.bf16.mxu0 %v920
    %1028 = vmatpush1.bf16.msra.mxu0 %v919
    %1029 = vmatprep.subr.bf16.mxu0 %v913
    %1030 = vmatpush1.bf16.msra.mxu0 %v912
    %1031 = vmatprep.subr.bf16.mxu0 %v906
    %1032 = vmatpush1.bf16.msra.mxu0 %v905
    %1033 = vmatprep.subr.bf16.mxu0 %v1011
    %1034 = vmatpush2.bf16.msra.mxu0 %v1010
    %1035 = vmatprep.subr.bf16.mxu0 %v1004
    %1036 = vmatpush2.bf16.msra.mxu0 %v1003
    %1037 = vmatprep.subr.bf16.mxu0 %v997
    %1038 = vmatpush2.bf16.msra.mxu0 %v996
    %1039 = vmatprep.subr.bf16.mxu0 %v990
    %1040 = vmatpush2.bf16.msra.mxu0 %v989
    %1041 = vmatprep.subr.bf16.mxu0 %v983
    %1042 = vmatpush2.bf16.msra.mxu0 %v982
    %1043 = vmatprep.subr.bf16.mxu0 %v976
    %1044 = vmatpush2.bf16.msra.mxu0 %v975
    %1045 = vmatprep.subr.bf16.mxu0 %v969
    %1046 = vmatpush2.bf16.msra.mxu0 %v968
    %1047 = vmatprep.subr.bf16.mxu0 %v962
    %1048 = vmatpush2.bf16.msra.mxu0 %v961
    %1049 = vmatprep.mubr.bf16.mxu0 %v848
    %1050 = vmatmul.mubr.bf16.gmra.mxu0 %v847
    %v1051 = vpop.f32.mrf.mxu0
    %v1052 = vadd.f32 0.0, %v1051
    %v1053 = vpop.f32.mrf.mxu0
    %v1054 = vadd.f32 0.0, %v1053
    %v1055 = vpop.f32.mrf.mxu0
    %v1056 = vpop.f32.mrf.mxu0
    %1057 = vdwg.mxu0
    %1058 = vmatprep.subr.bf16.mxu0 %v957
    %1059 = vmatpush1.bf16.msra.mxu0 %v956
    %1060 = vmatprep.subr.bf16.mxu0 %v950
    %1061 = vmatpush1.bf16.msra.mxu0 %v949
    %1062 = vmatprep.subr.bf16.mxu0 %v943
    %1063 = vmatpush1.bf16.msra.mxu0 %v942
    %1064 = vmatprep.subr.bf16.mxu0 %v936
    %1065 = vmatpush1.bf16.msra.mxu0 %v935
    %1066 = vmatprep.subr.bf16.mxu0 %v929
    %1067 = vmatpush1.bf16.msra.mxu0 %v928
    %1068 = vmatprep.subr.bf16.mxu0 %v922
    %1069 = vmatpush1.bf16.msra.mxu0 %v921
    %1070 = vmatprep.subr.bf16.mxu0 %v915
    %1071 = vmatpush1.bf16.msra.mxu0 %v914
    %1072 = vmatprep.subr.bf16.mxu0 %v908
    %1073 = vmatpush1.bf16.msra.mxu0 %v907
    %1074 = vmatprep.subr.bf16.mxu0 %v1013
    %1075 = vmatpush2.bf16.msra.mxu0 %v1012
    %1076 = vmatprep.subr.bf16.mxu0 %v1006
    %1077 = vmatpush2.bf16.msra.mxu0 %v1005
    %1078 = vmatprep.subr.bf16.mxu0 %v999
    %1079 = vmatpush2.bf16.msra.mxu0 %v998
    %1080 = vmatprep.subr.bf16.mxu0 %v992
    %1081 = vmatpush2.bf16.msra.mxu0 %v991
    %1082 = vmatprep.subr.bf16.mxu0 %v985
    %1083 = vmatpush2.bf16.msra.mxu0 %v984
    %1084 = vmatprep.subr.bf16.mxu0 %v978
    %1085 = vmatpush2.bf16.msra.mxu0 %v977
    %1086 = vmatprep.subr.bf16.mxu0 %v971
    %1087 = vmatpush2.bf16.msra.mxu0 %v970
    %1088 = vmatprep.subr.bf16.mxu0 %v964
    %1089 = vmatpush2.bf16.msra.mxu0 %v963
    %1090 = vmatprep.mubr.bf16.mxu0 %v848
    %1091 = vmatmul.mubr.bf16.gmra.mxu0 %v847
    %v1092 = vpop.f32.mrf.mxu0
    %v1093 = vadd.f32 0.0, %v1092
    %v1094 = vpop.f32.mrf.mxu0
    %v1095 = vadd.f32 0.0, %v1094
    %v1096 = vpop.f32.mrf.mxu0
    %v1097 = vpop.f32.mrf.mxu0
    %1098 = vdwg.mxu0
    %1099 = vmatprep.subr.bf16.mxu0 %v959
    %1100 = vmatpush1.bf16.msra.mxu0 %v958
    %1101 = vmatprep.subr.bf16.mxu0 %v952
    %1102 = vmatpush1.bf16.msra.mxu0 %v951
    %1103 = vmatprep.subr.bf16.mxu0 %v945
    %1104 = vmatpush1.bf16.msra.mxu0 %v944
    %1105 = vmatprep.subr.bf16.mxu0 %v938
    %1106 = vmatpush1.bf16.msra.mxu0 %v937
    %1107 = vmatprep.subr.bf16.mxu0 %v931
    %1108 = vmatpush1.bf16.msra.mxu0 %v930
    %1109 = vmatprep.subr.bf16.mxu0 %v924
    %1110 = vmatpush1.bf16.msra.mxu0 %v923
    %1111 = vmatprep.subr.bf16.mxu0 %v917
    %1112 = vmatpush1.bf16.msra.mxu0 %v916
    %1113 = vmatprep.subr.bf16.mxu0 %v910
    %1114 = vmatpush1.bf16.msra.mxu0 %v909
    %1115 = vmatprep.subr.bf16.mxu0 %v1015
    %1116 = vmatpush2.bf16.msra.mxu0 %v1014
    %1117 = vmatprep.subr.bf16.mxu0 %v1008
    %1118 = vmatpush2.bf16.msra.mxu0 %v1007
    %1119 = vmatprep.subr.bf16.mxu0 %v1001
    %1120 = vmatpush2.bf16.msra.mxu0 %v1000
    %1121 = vmatprep.subr.bf16.mxu0 %v994
    %1122 = vmatpush2.bf16.msra.mxu0 %v993
    %1123 = vmatprep.subr.bf16.mxu0 %v987
    %1124 = vmatpush2.bf16.msra.mxu0 %v986
    %1125 = vmatprep.subr.bf16.mxu0 %v980
    %1126 = vmatpush2.bf16.msra.mxu0 %v979
    %1127 = vmatprep.subr.bf16.mxu0 %v973
    %1128 = vmatpush2.bf16.msra.mxu0 %v972
    %1129 = vmatprep.subr.bf16.mxu0 %v966
    %1130 = vmatpush2.bf16.msra.mxu0 %v965
    %1131 = vmatprep.mubr.bf16.mxu0 %v848
    %1132 = vmatmul.mubr.bf16.gmra.mxu0 %v847
    %v1133 = vpop.f32.mrf.mxu0
    %v1134 = vadd.f32 0.0, %v1133
    %v1135 = vpop.f32.mrf.mxu0
    %v1136 = vadd.f32 0.0, %v1135
    %v1137 = vpop.f32.mrf.mxu0
    %v1138 = vpop.f32.mrf.mxu0
    %1139 = vdwg.mxu0
    %1140 = vmatprep.subr.bf16.mxu0 0
    %1141 = vmatpush1.bf16.msra.mxu0 %v960
    %1142 = vmatprep.subr.bf16.mxu0 0
    %1143 = vmatpush1.bf16.msra.mxu0 %v953
    %1144 = vmatprep.subr.bf16.mxu0 0
    %1145 = vmatpush1.bf16.msra.mxu0 %v946
    %1146 = vmatprep.subr.bf16.mxu0 0
    %1147 = vmatpush1.bf16.msra.mxu0 %v939
    %1148 = vmatprep.subr.bf16.mxu0 0
    %1149 = vmatpush1.bf16.msra.mxu0 %v932
    %1150 = vmatprep.subr.bf16.mxu0 0
    %1151 = vmatpush1.bf16.msra.mxu0 %v925
    %1152 = vmatprep.subr.bf16.mxu0 0
    %1153 = vmatpush1.bf16.msra.mxu0 %v918
    %1154 = vmatprep.subr.bf16.mxu0 0
    %1155 = vmatpush1.bf16.msra.mxu0 %v911
    %1156 = vmatprep.subr.bf16.mxu0 0
    %1157 = vmatpush2.bf16.msra.mxu0 %v1016
    %1158 = vmatprep.subr.bf16.mxu0 0
    %1159 = vmatpush2.bf16.msra.mxu0 %v1009
    %1160 = vmatprep.subr.bf16.mxu0 0
    %1161 = vmatpush2.bf16.msra.mxu0 %v1002
    %1162 = vmatprep.subr.bf16.mxu0 0
    %1163 = vmatpush2.bf16.msra.mxu0 %v995
    %1164 = vmatprep.subr.bf16.mxu0 0
    %1165 = vmatpush2.bf16.msra.mxu0 %v988
    %1166 = vmatprep.subr.bf16.mxu0 0
    %1167 = vmatpush2.bf16.msra.mxu0 %v981
    %1168 = vmatprep.subr.bf16.mxu0 0
    %1169 = vmatpush2.bf16.msra.mxu0 %v974
    %1170 = vmatprep.subr.bf16.mxu0 0
    %1171 = vmatpush2.bf16.msra.mxu0 %v967
    %1172 = vmatprep.mubr.bf16.mxu0 %v848
    %1173 = vmatmul.mubr.bf16.gmra.mxu0 %v847
    %v1174 = vpop.f32.mrf.mxu0
    %v1175 = vadd.f32 0.0, %v1174
    %v1176 = vpop.f32.mrf.mxu0
    %v1177 = vpop.f32.mrf.mxu0
    %v1178 = vpop.f32.mrf.mxu0
    %1179 = vdwg.mxu0
    %v1180 = vld [vmem:[%s17] sm:$0xff]
    %v1182 = vlaneseq
    %v1183 = vshrl.u32 %v1182, 7
    %v1184 = vsub.s32 0, %v1183
    %v1185 = vrot.slane %v1180, %v1184
    %v1186 = vlaneseq
    %v1187 = vshrl.u32 %v1186, 7
    %v1188 = vsub.s32 1, %v1187
    %v1189 = vrot.slane %v1180, %v1188
    %v1190 = vlaneseq
    %v1191 = vshrl.u32 %v1190, 7
    %v1192 = vsub.s32 2, %v1191
    %v1193 = vrot.slane %v1180, %v1192
    %v1194 = vlaneseq
    %v1195 = vshrl.u32 %v1194, 7
    %v1196 = vsub.s32 3, %v1195
    %v1197 = vrot.slane %v1180, %v1196
    %v1198 = vlaneseq
    %v1199 = vshrl.u32 %v1198, 7
    %v1200 = vsub.s32 4, %v1199
    %v1201 = vrot.slane %v1180, %v1200
    %v1202 = vlaneseq
    %v1203 = vshrl.u32 %v1202, 7
    %v1204 = vsub.s32 5, %v1203
    %v1205 = vrot.slane %v1180, %v1204
    %v1206 = vlaneseq
    %v1207 = vshrl.u32 %v1206, 7
    %v1208 = vsub.s32 6, %v1207
    %v1209 = vrot.slane %v1180, %v1208
    %v1217 = vmul.f32 %v1052, %v1185
    %v1218 = vmul.f32 %v1054, %v1189
    %v1219 = vmul.f32 %v1093, %v1193
    %v1220 = vmul.f32 %v1095, %v1197
    %v1221 = vmul.f32 %v1134, %v1201
    %v1222 = vmul.f32 %v1136, %v1205
    %v1223 = vmul.f32 %v1175, %v1209
    %v1224 = vld [vmem:[%s18] sm:$0xff]
    %v1226 = vlaneseq
    %v1227 = vshrl.u32 %v1226, 7
    %v1228 = vsub.s32 0, %v1227
    %v1229 = vrot.slane %v1224, %v1228
    %v1230 = vlaneseq
    %v1231 = vshrl.u32 %v1230, 7
    %v1232 = vsub.s32 1, %v1231
    %v1233 = vrot.slane %v1224, %v1232
    %v1234 = vlaneseq
    %v1235 = vshrl.u32 %v1234, 7
    %v1236 = vsub.s32 2, %v1235
    %v1237 = vrot.slane %v1224, %v1236
    %v1238 = vlaneseq
    %v1239 = vshrl.u32 %v1238, 7
    %v1240 = vsub.s32 3, %v1239
    %v1241 = vrot.slane %v1224, %v1240
    %v1242 = vlaneseq
    %v1243 = vshrl.u32 %v1242, 7
    %v1244 = vsub.s32 4, %v1243
    %v1245 = vrot.slane %v1224, %v1244
    %v1246 = vlaneseq
    %v1247 = vshrl.u32 %v1246, 7
    %v1248 = vsub.s32 5, %v1247
    %v1249 = vrot.slane %v1224, %v1248
    %v1250 = vlaneseq
    %v1251 = vshrl.u32 %v1250, 7
    %v1252 = vsub.s32 6, %v1251
    %v1253 = vrot.slane %v1224, %v1252
    %v1261 = vadd.f32 %v1217, %v1229
    %v1262 = vadd.f32 %v1218, %v1233
    %v1263 = vadd.f32 %v1219, %v1237
    %v1264 = vadd.f32 %v1220, %v1241
    %v1265 = vadd.f32 %v1221, %v1245
    %v1266 = vadd.f32 %v1222, %v1249
    %v1267 = vadd.f32 %v1223, %v1253
    %v1268 = vtanh.pop %v1261
    %v1269 = vtanh.pop %v1262
    %v1270 = vtanh.pop %v1263
    %v1271 = vtanh.pop %v1264
    %v1272 = vtanh.pop %v1265
    %v1273 = vtanh.pop %v1266
    %v1274 = vtanh.pop %v1267
    %1275 = vst [vmem:[%s19] sm:$0xff] %v1268
    %1276 = vst [vmem:[%s19 + $0x8] sm:$0xff] %v1269
    %1277 = vst [vmem:[%s19 + $0x10] sm:$0xff] %v1270
    %1278 = vst [vmem:[%s19 + $0x18] sm:$0xff] %v1271
    %1279 = vst [vmem:[%s19 + $0x20] sm:$0xff] %v1272
    %1280 = vst [vmem:[%s19 + $0x28] sm:$0xff] %v1273
    %1281 = vst [vmem:[%s19 + $0x30] sm:$0xff] %v1274
    // Predicated region
    $region110: #{_forward_impl.1} parent=1 // pred_check
      _
    $region111: #{_forward_impl.1} parent=1 // pred_check_branch
      %1283 = sbr.rel (0) target = $region113
    $region112: #{_forward_impl.1} parent=1 // pred_region
      _
    $region113: #{_forward_impl.1} parent=1 // pred_fallthru
      _
    // Predicated region
    $region114: #{_forward_impl.1} parent=1 // pred_check
      _
    $region115: #{_forward_impl.1} parent=1 // pred_check_branch
      %1285 = sbr.rel (0) target = $region117
    $region116: #{_forward_impl.1} parent=1 // pred_region
      _
    $region117: #{_forward_impl.1} parent=1 // pred_fallthru
      _
    %1286 = vsyncpa [#allocation3], 1
    %1287 = vsyncpa [#allocation5], 1
    %1288 = vsyncpa [#allocation8], 1
    %1289 = vsyncpa [#allocation11], 1
    %1290 = vsyncpa [#allocation14], 1

</llo_original>
